<compile_context>
chip_gen: v7x
topology: tpu7x:2x2x1
jax: 0.10.0
libtpu: 0.0.40
codegen_flags: <defaults>
</compile_context>

<pallas_src>
import jax
import jax.numpy as jnp
from jax.experimental import pallas as pl
from jax.experimental.pallas import tpu as pltpu


_VMEM = pltpu.MemorySpace.VMEM
_VMEM_LIMIT = 32 * 1024 * 1024  # explicit scoped-VMEM limit, safe on v5e/v6e/v7x


def _round_up(x, m):
    return ((x + m - 1) // m) * m


# ------------------------------- Pallas kernels -------------------------------

def _conv_relu_pool_kernel(p_ref, w_ref, b_ref, o_ref):
    """Fused conv(im2col matmul) + bias + ReLU + 2x2/stride-2 max-pool.

    p_ref: (4, TM, K) bf16 im2col patches, one slice per pooling-window corner.
    w_ref: (K, N) bf16,  b_ref: (1, N) f32,  o_ref: (TM, N) bf16/f32.

    relu(max_corner(p_c @ w) + b) == max_pool(relu(conv + b)) because the bias is
    shared across the window and ReLU is monotone.  Accumulation/epilogue in f32.
    """
    w = w_ref[...]
    s = jnp.dot(p_ref[0], w, preferred_element_type=jnp.float32)
    for c in range(1, 4):
        s = jnp.maximum(s, jnp.dot(p_ref[c], w, preferred_element_type=jnp.float32))
    o_ref[...] = jnp.maximum(s + b_ref[...], 0.0).astype(o_ref.dtype)


# ------------------------------- kernel wrappers -------------------------------

def conv_relu_pool(patches, w, b, *, tile_rows=2048, out_dtype=jnp.bfloat16):
    """patches: (4, M, K) bf16; w: (K, N) bf16; b: (1, N) f32 -> (M, N) out_dtype.

    Gridded over pooled output rows (M); weight/bias stay resident across the grid.
    At large batch the grid has several steps (pipelined, sharded over v7x cores);
    at B=2 it is a single block.
    """
    _, M, K = patches.shape
    N = w.shape[1]
    tile = min(tile_rows, _round_up(M, 16))          # 16: bf16 sublane packing
    Mp = _round_up(M, tile)
    if Mp != M:
        patches = jnp.pad(patches, ((0, 0), (0, Mp - M), (0, 0)))

    cost = pl.CostEstimate(
        flops=2 * 4 * Mp * K * N,
        transcendentals=0,
        bytes_accessed=4 * Mp * K * 2 + K * N * 2 + N * 4
                       + Mp * N * jnp.dtype(out_dtype).itemsize,
    )
    out = pl.pallas_call(
        _conv_relu_pool_kernel,
        out_shape=jax.ShapeDtypeStruct((Mp, N), out_dtype),
        grid=(Mp // tile,),
        in_specs=[pl.BlockSpec((4, tile, K), lambda i: (0, i, 0)),
                  pl.BlockSpec((K, N), lambda i: (0, 0)),
                  pl.BlockSpec((1, N), lambda i: (0, 0))],
        out_specs=pl.BlockSpec((tile, N), lambda i: (i, 0)),
        compiler_params=pltpu.CompilerParams(
            dimension_semantics=("parallel",),
            vmem_limit_bytes=_VMEM_LIMIT),
        cost_estimate=cost,
    )(patches, w, b)
    return out[:M] if Mp != M else out


def conv2_fc_head(patches, batch, w2, b2, wf1, bf1, wf2, bf2, wf3, bf3):
    """Fused conv2+bias+ReLU+pool -> flatten -> fc1+ReLU -> fc2+ReLU -> fc3.

    patches: (4, P*B, K2) bf16 conv2 pooling-corner patches with spatial-major rows
    (row = p*B + b, p = ph2*5 + pw2) so the in-kernel flatten needs only contiguous
    row slices + lane concatenation (no lane-changing reshape).  All weights and every
    intermediate (pooled conv2 activation, flat, h1, h2) stay VMEM-resident.
    """
    n_pos = patches.shape[1] // batch            # 25 spatial positions (5x5)
    n_out = wf3.shape[1]

    def kernel(p_ref, w2_ref, b2_ref, wf1_ref, bf1_ref, wf2_ref, bf2_ref,
               wf3_ref, bf3_ref, o_ref):
        w2v = w2_ref[...]
        s = jnp.dot(p_ref[0], w2v, preferred_element_type=jnp.float32)
        for c in range(1, 4):
            s = jnp.maximum(s, jnp.dot(p_ref[c], w2v, preferred_element_type=jnp.float32))
        y2 = jnp.maximum(s + b2_ref[...], 0.0)               # (P*B, 16) f32, rows (p, b)

        # Flatten to (B, P*16) in fc1's (h, w, c) column order.
        flat = jnp.concatenate(
            [y2[p * batch:(p + 1) * batch, :] for p in range(n_pos)], axis=-1)
        flat = flat.astype(jnp.bfloat16)

        h = jnp.dot(flat, wf1_ref[...], preferred_element_type=jnp.float32) + bf1_ref[...]
        h = jnp.maximum(h, 0.0).astype(jnp.bfloat16)
        h = jnp.dot(h, wf2_ref[...], preferred_element_type=jnp.float32) + bf2_ref[...]
        h = jnp.maximum(h, 0.0).astype(jnp.bfloat16)
        o = jnp.dot(h, wf3_ref[...], preferred_element_type=jnp.float32) + bf3_ref[...]
        o_ref[...] = o.astype(o_ref.dtype)

    return pl.pallas_call(
        kernel,
        out_shape=jax.ShapeDtypeStruct((batch, n_out), jnp.float32),
        in_specs=[pl.BlockSpec(memory_space=_VMEM)] * 9,
        out_specs=pl.BlockSpec(memory_space=_VMEM),
        compiler_params=pltpu.CompilerParams(vmem_limit_bytes=_VMEM_LIMIT),
    )(patches, w2, b2, wf1, bf1, wf2, bf2, wf3, bf3)


# ------------------------------- glue (patch extraction, layout) -------------------------------

def _pool_corner_patches(x, kh, kw, k_pad, *, spatial_major=False):
    """x: (B, H, W, C) bf16 NHWC -> (4, M, k_pad) bf16 pooling-corner im2col patches.

    Corner c = 2*dh+dw covers conv-output position (2*ph+dh, 2*pw+dw) of each 2x2/s2
    pooling window.  Column order = (kh, kw, c); row order = (b, ph, pw), or
    (ph, pw, b) when spatial_major=True (used by the fused conv2+fc kernel).
    Built directly with stride-2 slices per tap — no full-resolution intermediate.
    """
    B, H, W, C = x.shape
    PH, PW = (H - kh + 1) // 2, (W - kw + 1) // 2
    K = kh * kw * C
    # slab[(u, v)][b, ph, pw, c] = x[b, 2*ph + u, 2*pw + v, c]
    slab = {(u, v): x[:, u:u + 2 * PH:2, v:v + 2 * PW:2, :]
            for u in range(kh + 1) for v in range(kw + 1)}
    corners = []
    for dh in (0, 1):
        for dw in (0, 1):
            p = jnp.concatenate(
                [slab[(dh + i, dw + j)] for i in range(kh) for j in range(kw)],
                axis=-1)                                        # (B, PH, PW, K)
            if k_pad > K:
                p = jnp.pad(p, ((0, 0), (0, 0), (0, 0), (0, k_pad - K)))
            if spatial_major:
                p = jnp.transpose(p, (1, 2, 0, 3)).reshape(PH * PW * B, k_pad)
            else:
                p = p.reshape(B * PH * PW, k_pad)
            corners.append(p)
    return jnp.stack(corners, axis=0)                           # (4, M, k_pad)


def prepare_params(params):
    """One-time layout/dtype prep (call once, outside the jitted forward):
      * conv weights (OC,IC,KH,KW) -> (KH*KW*IC, OC), K zero-padded (75->80, 150->160), bf16.
      * fc1 columns permuted from PyTorch's NCHW flatten order (c*25+h*5+w) to the
        channel-last order produced here (h*80+w*16+c), then N padded 120->128.
      * fc2 padded to (128,128), fc3 K padded to 128; fc weights bf16, biases f32 (1,N)
        zero-padded to match (padded lanes stay exactly zero through the ReLUs).
    """
    def conv_w(w, k_pad):
        oc, ic, kh, kw = w.shape
        w = jnp.transpose(w, (2, 3, 1, 0)).reshape(kh * kw * ic, oc)
        return jnp.pad(w, ((0, k_pad - kh * kw * ic), (0, 0))).astype(jnp.bfloat16)

    fc1 = params["fc1_w"].reshape(120, 16, 5, 5)               # (out, c, h, w)
    fc1 = jnp.transpose(fc1, (2, 3, 1, 0)).reshape(400, 120)   # row = h*80 + w*16 + c
    fc1 = jnp.pad(fc1, ((0, 0), (0, 8))).astype(jnp.bfloat16)              # (400, 128)
    fc1_b = jnp.pad(params["fc1_b"], (0, 8)).reshape(1, 128).astype(jnp.float32)

    fc2 = jnp.pad(params["fc2_w"].T, ((0, 8), (0, 44))).astype(jnp.bfloat16)   # (128, 128)
    fc2_b = jnp.pad(params["fc2_b"], (0, 44)).reshape(1, 128).astype(jnp.float32)

    fc3 = jnp.pad(params["fc3_w"].T, ((0, 44), (0, 0))).astype(jnp.bfloat16)   # (128, 10)
    fc3_b = params["fc3_b"].reshape(1, 10).astype(jnp.float32)

    return {
        "conv1_w": conv_w(params["conv1_w"], 80),
        "conv1_b": params["conv1_b"].reshape(1, -1).astype(jnp.float32),
        "conv2_w": conv_w(params["conv2_w"], 160),
        "conv2_b": params["conv2_b"].reshape(1, -1).astype(jnp.float32),
        "fc1_w": fc1, "fc1_b": fc1_b,
        "fc2_w": fc2, "fc2_b": fc2_b,
        "fc3_w": fc3, "fc3_b": fc3_b,
    }


# ------------------------------- LeNet forward -------------------------------

def lenet_forward(x, prep):
    """x: (B, 3, 32, 32) f32 NCHW (PyTorch layout); prep: prepare_params() output."""
    B = x.shape[0]
    x = jnp.transpose(x, (0, 2, 3, 1)).astype(jnp.bfloat16)          # NCHW -> NHWC, once

    # conv1 (3->6, 5x5) + ReLU + 2x2 max-pool : one fused kernel, bf16 pooled output
    p1 = _pool_corner_patches(x, 5, 5, k_pad=80)                     # (4, B*14*14, 80)
    y1 = conv_relu_pool(p1, prep["conv1_w"], prep["conv1_b"])        # (B*196, 6) bf16
    y1 = y1.reshape(B, 14, 14, 6)

    # conv2 (6->16, 5x5) + ReLU + pool + fc1/fc2/fc3 : one fused kernel
    p2 = _pool_corner_patches(y1, 5, 5, k_pad=160, spatial_major=True)   # (4, 25*B, 160)
    return conv2_fc_head(p2, B,
                         prep["conv2_w"], prep["conv2_b"],
                         prep["fc1_w"], prep["fc1_b"],
                         prep["fc2_w"], prep["fc2_b"],
                         prep["fc3_w"], prep["fc3_b"])               # (B, 10) f32


# ------------------------------- reference & params -------------------------------

def lenet_reference(x, params):
    """Pure-XLA f32 reference mirroring the PyTorch forward (for a tolerance check)."""
    def conv(y, w, b):
        y = jax.lax.conv_general_dilated(y, w, (1, 1), "VALID",
                                         dimension_numbers=("NCHW", "OIHW", "NCHW"))
        return jax.nn.relu(y + b[None, :, None, None])

    def pool(y):
        return jax.lax.reduce_window(y, -jnp.inf, jax.lax.max,
                                     (1, 1, 2, 2), (1, 1, 2, 2), "VALID")

    y = pool(conv(x, params["conv1_w"], params["conv1_b"]))
    y = pool(conv(y, params["conv2_w"], params["conv2_b"]))
    flat = y.reshape(y.shape[0], -1)
    h = jax.nn.relu(flat @ params["fc1_w"].T + params["fc1_b"])
    h = jax.nn.relu(h @ params["fc2_w"].T + params["fc2_b"])
    return h @ params["fc3_w"].T + params["fc3_b"]


def init_params(key):
    def uniform(k, shape, fan_in):
        bound = 1.0 / (fan_in ** 0.5)
        return jax.random.uniform(k, shape, jnp.float32, -bound, bound)

    ks = jax.random.split(key, 10)
    return {
        "conv1_w": uniform(ks[0], (6, 3, 5, 5), 3 * 5 * 5),
        "conv1_b": uniform(ks[1], (6,), 3 * 5 * 5),
        "conv2_w": uniform(ks[2], (16, 6, 5, 5), 6 * 5 * 5),
        "conv2_b": uniform(ks[3], (16,), 6 * 5 * 5),
        "fc1_w": uniform(ks[4], (120, 400), 400),
        "fc1_b": uniform(ks[5], (120,), 400),
        "fc2_w": uniform(ks[6], (84, 120), 120),
        "fc2_b": uniform(ks[7], (84,), 120),
        "fc3_w": uniform(ks[8], (10, 84), 84),
        "fc3_b": uniform(ks[9], (10,), 84),
    }


if __name__ == "__main__":
    key = jax.random.PRNGKey(0)
    k_x, k_p = jax.random.split(key)
    # LeNet's fc1 (16*5*5) implies a 32x32 input; batch kept small.
    x = jax.random.normal(k_x, (2, 3, 32, 32), dtype=jnp.float32)
    params = init_params(k_p)
    prep = prepare_params(params)            # one-time layout/dtype prep, outside jit

    out = jax.block_until_ready(jax.jit(lenet_forward)(x, prep))
    assert out.shape == (2, 10) and out.dtype == jnp.float32
    assert bool(jnp.all(jnp.isfinite(out)))

    # bf16-on-MXU path vs f32 reference: expect <~1% relative deviation.
    ref = lenet_reference(x, params)
    err = float(jnp.max(jnp.abs(out - ref)))
    tol = 2e-2 + 2e-2 * float(jnp.max(jnp.abs(ref)))
    assert err < tol, f"max abs err vs f32 reference: {err} (tol {tol})"
    print("KERNEL_OK")
</pallas_src>

<mosaic_0001>
module attributes {stable_mosaic.version = 11 : i64} {
  func.func @_conv_relu_pool_kernel(%arg0: i32, %arg1: memref<4x400x80xbf16, #tpu.memory_space<vmem>>, %arg2: memref<80x6xbf16, #tpu.memory_space<vmem>>, %arg3: memref<1x6xf32, #tpu.memory_space<vmem>>, %arg4: memref<400x6xbf16, #tpu.memory_space<vmem>>) attributes {dimension_semantics = [#tpu.dimension_semantics<parallel>], iteration_bounds = array<i64: 1>, scalar_prefetch = 0 : i64, scratch_operands = 0 : i64, tpu.core_type = #tpu.core_type<tc>, window_params = [{transform_indices = @transform_0, window_bounds = array<i64: 4, 400, 80>}, {pipeline_mode = #tpu.pipeline_mode<synchronous>, transform_indices = @transform_1, window_bounds = array<i64: 80, 6>}, {pipeline_mode = #tpu.pipeline_mode<synchronous>, transform_indices = @transform_2, window_bounds = array<i64: 1, 6>}, {transform_indices = @transform_3, window_bounds = array<i64: 400, 6>}]} {
    %c0 = arith.constant 0 : index
    %c0_0 = arith.constant 0 : index
    %0 = vector.load %arg2[%c0, %c0_0] : memref<80x6xbf16, #tpu.memory_space<vmem>>, vector<80x6xbf16>
    %c0_1 = arith.constant 0 : index
    %c0_2 = arith.constant 0 : index
    %c0_3 = arith.constant 0 : index
    %1 = vector.load %arg1[%c0_1, %c0_2, %c0_3] : memref<4x400x80xbf16, #tpu.memory_space<vmem>>, vector<1x400x80xbf16>
    %2 = vector.shape_cast %1 : vector<1x400x80xbf16> to vector<400x80xbf16>
    %cst = arith.constant dense<0.000000e+00> : vector<400x6xf32>
    %3 = tpu.matmul %2, %0, %cst {dimension_numbers = #tpu.dot_dimension_numbers<[1], [0], [0], [1], [0, 0, 1, 1], [], []>} : vector<400x80xbf16>, vector<80x6xbf16>, vector<400x6xf32> -> vector<400x6xf32>
    %c1 = arith.constant 1 : index
    %c0_4 = arith.constant 0 : index
    %c0_5 = arith.constant 0 : index
    %4 = vector.load %arg1[%c1, %c0_4, %c0_5] : memref<4x400x80xbf16, #tpu.memory_space<vmem>>, vector<1x400x80xbf16>
    %5 = vector.shape_cast %4 : vector<1x400x80xbf16> to vector<400x80xbf16>
    %cst_6 = arith.constant dense<0.000000e+00> : vector<400x6xf32>
    %6 = tpu.matmul %5, %0, %cst_6 {dimension_numbers = #tpu.dot_dimension_numbers<[1], [0], [0], [1], [0, 0, 1, 1], [], []>} : vector<400x80xbf16>, vector<80x6xbf16>, vector<400x6xf32> -> vector<400x6xf32>
    %7 = arith.maximumf %3, %6 : vector<400x6xf32>
    %c2 = arith.constant 2 : index
    %c0_7 = arith.constant 0 : index
    %c0_8 = arith.constant 0 : index
    %8 = vector.load %arg1[%c2, %c0_7, %c0_8] : memref<4x400x80xbf16, #tpu.memory_space<vmem>>, vector<1x400x80xbf16>
    %9 = vector.shape_cast %8 : vector<1x400x80xbf16> to vector<400x80xbf16>
    %cst_9 = arith.constant dense<0.000000e+00> : vector<400x6xf32>
    %10 = tpu.matmul %9, %0, %cst_9 {dimension_numbers = #tpu.dot_dimension_numbers<[1], [0], [0], [1], [0, 0, 1, 1], [], []>} : vector<400x80xbf16>, vector<80x6xbf16>, vector<400x6xf32> -> vector<400x6xf32>
    %11 = arith.maximumf %7, %10 : vector<400x6xf32>
    %c3 = arith.constant 3 : index
    %c0_10 = arith.constant 0 : index
    %c0_11 = arith.constant 0 : index
    %12 = vector.load %arg1[%c3, %c0_10, %c0_11] : memref<4x400x80xbf16, #tpu.memory_space<vmem>>, vector<1x400x80xbf16>
    %13 = vector.shape_cast %12 : vector<1x400x80xbf16> to vector<400x80xbf16>
    %cst_12 = arith.constant dense<0.000000e+00> : vector<400x6xf32>
    %14 = tpu.matmul %13, %0, %cst_12 {dimension_numbers = #tpu.dot_dimension_numbers<[1], [0], [0], [1], [0, 0, 1, 1], [], []>} : vector<400x80xbf16>, vector<80x6xbf16>, vector<400x6xf32> -> vector<400x6xf32>
    %15 = arith.maximumf %11, %14 : vector<400x6xf32>
    %c0_13 = arith.constant 0 : index
    %c0_14 = arith.constant 0 : index
    %16 = vector.load %arg3[%c0_13, %c0_14] : memref<1x6xf32, #tpu.memory_space<vmem>>, vector<1x6xf32>
    %17 = vector.broadcast %16 : vector<1x6xf32> to vector<400x6xf32>
    %18 = arith.addf %15, %17 : vector<400x6xf32>
    %cst_15 = arith.constant 0.000000e+00 : f32
    %19 = vector.broadcast %cst_15 : f32 to vector<400x6xf32>
    %20 = arith.maximumf %18, %19 : vector<400x6xf32>
    %21 = arith.truncf %20 : vector<400x6xf32> to vector<400x6xbf16>
    %c0_16 = arith.constant 0 : index
    %c0_17 = arith.constant 0 : index
    %22 = vector.load %arg4[%c0_16, %c0_17] : memref<400x6xbf16, #tpu.memory_space<vmem>>, vector<400x6xbf16>
    tpu.vector_store %arg4[%c0_16, %c0_17], %21 {strides = array<i32>} : memref<400x6xbf16, #tpu.memory_space<vmem>>, vector<400x6xbf16>,
    return
  }
  func.func @transform_0(%arg0: i32) -> (i32, i32, i32) {
    %c0_i32 = arith.constant 0 : i32
    %c0_i32_0 = arith.constant 0 : i32
    %c0_i32_1 = arith.constant 0 : i32
    return %c0_i32, %arg0, %c0_i32_0 : i32, i32, i32
  }
  func.func @transform_1(%arg0: i32) -> (i32, i32) {
    %c0_i32 = arith.constant 0 : i32
    %c0_i32_0 = arith.constant 0 : i32
    %c0_i32_1 = arith.constant 0 : i32
    return %c0_i32, %c0_i32_0 : i32, i32
  }
  func.func @transform_2(%arg0: i32) -> (i32, i32) {
    %c0_i32 = arith.constant 0 : i32
    %c0_i32_0 = arith.constant 0 : i32
    %c0_i32_1 = arith.constant 0 : i32
    return %c0_i32, %c0_i32_0 : i32, i32
  }
  func.func @transform_3(%arg0: i32) -> (i32, i32) {
    %c0_i32 = arith.constant 0 : i32
    %c0_i32_0 = arith.constant 0 : i32
    return %arg0, %c0_i32 : i32, i32
  }
}

module attributes {stable_mosaic.version = 11 : i64} {
  func.func @kernel(%arg0: memref<4x50x160xbf16, #tpu.memory_space<vmem>>, %arg1: memref<160x16xbf16, #tpu.memory_space<vmem>>, %arg2: memref<1x16xf32, #tpu.memory_space<vmem>>, %arg3: memref<400x128xbf16, #tpu.memory_space<vmem>>, %arg4: memref<1x128xf32, #tpu.memory_space<vmem>>, %arg5: memref<128x128xbf16, #tpu.memory_space<vmem>>, %arg6: memref<1x128xf32, #tpu.memory_space<vmem>>, %arg7: memref<128x10xbf16, #tpu.memory_space<vmem>>, %arg8: memref<1x10xf32, #tpu.memory_space<vmem>>, %arg9: memref<2x10xf32, #tpu.memory_space<vmem>>) attributes {dimension_semantics = [], scalar_prefetch = 0 : i64, scratch_operands = 0 : i64, tpu.core_type = #tpu.core_type<tc>} {
    %c0 = arith.constant 0 : index
    %c0_0 = arith.constant 0 : index
    %0 = vector.load %arg1[%c0, %c0_0] : memref<160x16xbf16, #tpu.memory_space<vmem>>, vector<160x16xbf16>
    %c0_1 = arith.constant 0 : index
    %c0_2 = arith.constant 0 : index
    %c0_3 = arith.constant 0 : index
    %1 = vector.load %arg0[%c0_1, %c0_2, %c0_3] : memref<4x50x160xbf16, #tpu.memory_space<vmem>>, vector<1x50x160xbf16>
    %2 = vector.shape_cast %1 : vector<1x50x160xbf16> to vector<50x160xbf16>
    %cst = arith.constant dense<0.000000e+00> : vector<50x16xf32>
    %3 = tpu.matmul %2, %0, %cst {dimension_numbers = #tpu.dot_dimension_numbers<[1], [0], [0], [1], [0, 0, 1, 1], [], []>} : vector<50x160xbf16>, vector<160x16xbf16>, vector<50x16xf32> -> vector<50x16xf32>
    %c1 = arith.constant 1 : index
    %c0_4 = arith.constant 0 : index
    %c0_5 = arith.constant 0 : index
    %4 = vector.load %arg0[%c1, %c0_4, %c0_5] : memref<4x50x160xbf16, #tpu.memory_space<vmem>>, vector<1x50x160xbf16>
    %5 = vector.shape_cast %4 : vector<1x50x160xbf16> to vector<50x160xbf16>
    %cst_6 = arith.constant dense<0.000000e+00> : vector<50x16xf32>
    %6 = tpu.matmul %5, %0, %cst_6 {dimension_numbers = #tpu.dot_dimension_numbers<[1], [0], [0], [1], [0, 0, 1, 1], [], []>} : vector<50x160xbf16>, vector<160x16xbf16>, vector<50x16xf32> -> vector<50x16xf32>
    %7 = arith.maximumf %3, %6 : vector<50x16xf32>
    %c2 = arith.constant 2 : index
    %c0_7 = arith.constant 0 : index
    %c0_8 = arith.constant 0 : index
    %8 = vector.load %arg0[%c2, %c0_7, %c0_8] : memref<4x50x160xbf16, #tpu.memory_space<vmem>>, vector<1x50x160xbf16>
    %9 = vector.shape_cast %8 : vector<1x50x160xbf16> to vector<50x160xbf16>
    %cst_9 = arith.constant dense<0.000000e+00> : vector<50x16xf32>
    %10 = tpu.matmul %9, %0, %cst_9 {dimension_numbers = #tpu.dot_dimension_numbers<[1], [0], [0], [1], [0, 0, 1, 1], [], []>} : vector<50x160xbf16>, vector<160x16xbf16>, vector<50x16xf32> -> vector<50x16xf32>
    %11 = arith.maximumf %7, %10 : vector<50x16xf32>
    %c3 = arith.constant 3 : index
    %c0_10 = arith.constant 0 : index
    %c0_11 = arith.constant 0 : index
    %12 = vector.load %arg0[%c3, %c0_10, %c0_11] : memref<4x50x160xbf16, #tpu.memory_space<vmem>>, vector<1x50x160xbf16>
    %13 = vector.shape_cast %12 : vector<1x50x160xbf16> to vector<50x160xbf16>
    %cst_12 = arith.constant dense<0.000000e+00> : vector<50x16xf32>
    %14 = tpu.matmul %13, %0, %cst_12 {dimension_numbers = #tpu.dot_dimension_numbers<[1], [0], [0], [1], [0, 0, 1, 1], [], []>} : vector<50x160xbf16>, vector<160x16xbf16>, vector<50x16xf32> -> vector<50x16xf32>
    %15 = arith.maximumf %11, %14 : vector<50x16xf32>
    %c0_13 = arith.constant 0 : index
    %c0_14 = arith.constant 0 : index
    %16 = vector.load %arg2[%c0_13, %c0_14] : memref<1x16xf32, #tpu.memory_space<vmem>>, vector<1x16xf32>
    %17 = vector.broadcast %16 : vector<1x16xf32> to vector<50x16xf32>
    %18 = arith.addf %15, %17 : vector<50x16xf32>
    %cst_15 = arith.constant 0.000000e+00 : f32
    %19 = vector.broadcast %cst_15 : f32 to vector<50x16xf32>
    %20 = arith.maximumf %18, %19 : vector<50x16xf32>
    %21 = vector.extract_strided_slice %20 {offsets = [0, 0], sizes = [2, 16], strides = [1, 1]} : vector<50x16xf32> to vector<2x16xf32>
    %22 = vector.extract_strided_slice %20 {offsets = [2, 0], sizes = [2, 16], strides = [1, 1]} : vector<50x16xf32> to vector<2x16xf32>
    %23 = vector.extract_strided_slice %20 {offsets = [4, 0], sizes = [2, 16], strides = [1, 1]} : vector<50x16xf32> to vector<2x16xf32>
    %24 = vector.extract_strided_slice %20 {offsets = [6, 0], sizes = [2, 16], strides = [1, 1]} : vector<50x16xf32> to vector<2x16xf32>
    %25 = vector.extract_strided_slice %20 {offsets = [8, 0], sizes = [2, 16], strides = [1, 1]} : vector<50x16xf32> to vector<2x16xf32>
    %26 = vector.extract_strided_slice %20 {offsets = [10, 0], sizes = [2, 16], strides = [1, 1]} : vector<50x16xf32> to vector<2x16xf32>
    %27 = vector.extract_strided_slice %20 {offsets = [12, 0], sizes = [2, 16], strides = [1, 1]} : vector<50x16xf32> to vector<2x16xf32>
    %28 = vector.extract_strided_slice %20 {offsets = [14, 0], sizes = [2, 16], strides = [1, 1]} : vector<50x16xf32> to vector<2x16xf32>
    %29 = vector.extract_strided_slice %20 {offsets = [16, 0], sizes = [2, 16], strides = [1, 1]} : vector<50x16xf32> to vector<2x16xf32>
    %30 = vector.extract_strided_slice %20 {offsets = [18, 0], sizes = [2, 16], strides = [1, 1]} : vector<50x16xf32> to vector<2x16xf32>
    %31 = vector.extract_strided_slice %20 {offsets = [20, 0], sizes = [2, 16], strides = [1, 1]} : vector<50x16xf32> to vector<2x16xf32>
    %32 = vector.extract_strided_slice %20 {offsets = [22, 0], sizes = [2, 16], strides = [1, 1]} : vector<50x16xf32> to vector<2x16xf32>
    %33 = vector.extract_strided_slice %20 {offsets = [24, 0], sizes = [2, 16], strides = [1, 1]} : vector<50x16xf32> to vector<2x16xf32>
    %34 = vector.extract_strided_slice %20 {offsets = [26, 0], sizes = [2, 16], strides = [1, 1]} : vector<50x16xf32> to vector<2x16xf32>
    %35 = vector.extract_strided_slice %20 {offsets = [28, 0], sizes = [2, 16], strides = [1, 1]} : vector<50x16xf32> to vector<2x16xf32>
    %36 = vector.extract_strided_slice %20 {offsets = [30, 0], sizes = [2, 16], strides = [1, 1]} : vector<50x16xf32> to vector<2x16xf32>
    %37 = vector.extract_strided_slice %20 {offsets = [32, 0], sizes = [2, 16], strides = [1, 1]} : vector<50x16xf32> to vector<2x16xf32>
    %38 = vector.extract_strided_slice %20 {offsets = [34, 0], sizes = [2, 16], strides = [1, 1]} : vector<50x16xf32> to vector<2x16xf32>
    %39 = vector.extract_strided_slice %20 {offsets = [36, 0], sizes = [2, 16], strides = [1, 1]} : vector<50x16xf32> to vector<2x16xf32>
    %40 = vector.extract_strided_slice %20 {offsets = [38, 0], sizes = [2, 16], strides = [1, 1]} : vector<50x16xf32> to vector<2x16xf32>
    %41 = vector.extract_strided_slice %20 {offsets = [40, 0], sizes = [2, 16], strides = [1, 1]} : vector<50x16xf32> to vector<2x16xf32>
    %42 = vector.extract_strided_slice %20 {offsets = [42, 0], sizes = [2, 16], strides = [1, 1]} : vector<50x16xf32> to vector<2x16xf32>
    %43 = vector.extract_strided_slice %20 {offsets = [44, 0], sizes = [2, 16], strides = [1, 1]} : vector<50x16xf32> to vector<2x16xf32>
    %44 = vector.extract_strided_slice %20 {offsets = [46, 0], sizes = [2, 16], strides = [1, 1]} : vector<50x16xf32> to vector<2x16xf32>
    %45 = vector.extract_strided_slice %20 {offsets = [48, 0], sizes = [2, 16], strides = [1, 1]} : vector<50x16xf32> to vector<2x16xf32>
    %46 = tpu.concatenate %21, %22, %23, %24, %25, %26, %27, %28, %29, %30, %31, %32, %33, %34, %35, %36 in 1 : vector<2x16xf32>, vector<2x16xf32>, vector<2x16xf32>, vector<2x16xf32>, vector<2x16xf32>, vector<2x16xf32>, vector<2x16xf32>, vector<2x16xf32>, vector<2x16xf32>, vector<2x16xf32>, vector<2x16xf32>, vector<2x16xf32>, vector<2x16xf32>, vector<2x16xf32>, vector<2x16xf32>, vector<2x16xf32> -> vector<2x256xf32>
    %47 = tpu.concatenate %37, %38, %39, %40, %41, %42, %43, %44, %45 in 1 : vector<2x16xf32>, vector<2x16xf32>, vector<2x16xf32>, vector<2x16xf32>, vector<2x16xf32>, vector<2x16xf32>, vector<2x16xf32>, vector<2x16xf32>, vector<2x16xf32> -> vector<2x144xf32>
    %48 = tpu.concatenate %46, %47 in 1 : vector<2x256xf32>, vector<2x144xf32> -> vector<2x400xf32>
    %49 = arith.truncf %48 : vector<2x400xf32> to vector<2x400xbf16>
    %c0_16 = arith.constant 0 : index
    %c0_17 = arith.constant 0 : index
    %50 = vector.load %arg3[%c0_16, %c0_17] : memref<400x128xbf16, #tpu.memory_space<vmem>>, vector<400x128xbf16>
    %cst_18 = arith.constant dense<0.000000e+00> : vector<2x128xf32>
    %51 = tpu.matmul %49, %50, %cst_18 {dimension_numbers = #tpu.dot_dimension_numbers<[1], [0], [0], [1], [0, 0, 1, 1], [], []>} : vector<2x400xbf16>, vector<400x128xbf16>, vector<2x128xf32> -> vector<2x128xf32>
    %c0_19 = arith.constant 0 : index
    %c0_20 = arith.constant 0 : index
    %52 = vector.load %arg4[%c0_19, %c0_20] : memref<1x128xf32, #tpu.memory_space<vmem>>, vector<1x128xf32>
    %53 = vector.broadcast %52 : vector<1x128xf32> to vector<2x128xf32>
    %54 = arith.addf %51, %53 : vector<2x128xf32>
    %cst_21 = arith.constant 0.000000e+00 : f32
    %55 = vector.broadcast %cst_21 : f32 to vector<2x128xf32>
    %56 = arith.maximumf %54, %55 : vector<2x128xf32>
    %57 = arith.truncf %56 : vector<2x128xf32> to vector<2x128xbf16>
    %c0_22 = arith.constant 0 : index
    %c0_23 = arith.constant 0 : index
    %58 = vector.load %arg5[%c0_22, %c0_23] : memref<128x128xbf16, #tpu.memory_space<vmem>>, vector<128x128xbf16>
    %cst_24 = arith.constant dense<0.000000e+00> : vector<2x128xf32>
    %59 = tpu.matmul %57, %58, %cst_24 {dimension_numbers = #tpu.dot_dimension_numbers<[1], [0], [0], [1], [0, 0, 1, 1], [], []>} : vector<2x128xbf16>, vector<128x128xbf16>, vector<2x128xf32> -> vector<2x128xf32>
    %c0_25 = arith.constant 0 : index
    %c0_26 = arith.constant 0 : index
    %60 = vector.load %arg6[%c0_25, %c0_26] : memref<1x128xf32, #tpu.memory_space<vmem>>, vector<1x128xf32>
    %61 = vector.broadcast %60 : vector<1x128xf32> to vector<2x128xf32>
    %62 = arith.addf %59, %61 : vector<2x128xf32>
    %cst_27 = arith.constant 0.000000e+00 : f32
    %63 = vector.broadcast %cst_27 : f32 to vector<2x128xf32>
    %64 = arith.maximumf %62, %63 : vector<2x128xf32>
    %65 = arith.truncf %64 : vector<2x128xf32> to vector<2x128xbf16>
    %c0_28 = arith.constant 0 : index
    %c0_29 = arith.constant 0 : index
    %66 = vector.load %arg7[%c0_28, %c0_29] : memref<128x10xbf16, #tpu.memory_space<vmem>>, vector<128x10xbf16>
    %cst_30 = arith.constant dense<0.000000e+00> : vector<2x10xf32>
    %67 = tpu.matmul %65, %66, %cst_30 {dimension_numbers = #tpu.dot_dimension_numbers<[1], [0], [0], [1], [0, 0, 1, 1], [], []>} : vector<2x128xbf16>, vector<128x10xbf16>, vector<2x10xf32> -> vector<2x10xf32>
    %c0_31 = arith.constant 0 : index
    %c0_32 = arith.constant 0 : index
    %68 = vector.load %arg8[%c0_31, %c0_32] : memref<1x10xf32, #tpu.memory_space<vmem>>, vector<1x10xf32>
    %69 = vector.broadcast %68 : vector<1x10xf32> to vector<2x10xf32>
    %70 = arith.addf %67, %69 : vector<2x10xf32>
    %c0_33 = arith.constant 0 : index
    %c0_34 = arith.constant 0 : index
    %71 = vector.load %arg9[%c0_33, %c0_34] : memref<2x10xf32, #tpu.memory_space<vmem>>, vector<2x10xf32>
    tpu.vector_store %arg9[%c0_33, %c0_34], %70 {strides = array<i32>} : memref<2x10xf32, #tpu.memory_space<vmem>>, vector<2x10xf32>,
    return
  }
}

</mosaic_0001>

<llo_original>
// kernel: lenet_forward.2
$region0: #{lenet_forward.2}
  #allocation0 [shape = 'u32[]', space=smem, size = 0x4, offset = 0x4, fixed_abs, tag = 'smem constant byte address 0x4 - core index']
  #allocation1 [shape = 'u32[144,128]{1,0:T(1,128)}', space=vmem, size = 0x12000, scoped, tag = 'internal scratch']
  %s0 = inlined_call_operand.vmem [shape: bf16[4,400,80], index: 0, kind: input, shape index: {}]
  %s1 = inlined_call_operand.vmem [shape: bf16[80,6], index: 1, kind: input, shape index: {}]
  %s2 = inlined_call_operand.vmem [shape: f32[1,6], index: 2, kind: input, shape index: {}]
  %s3 = inlined_call_operand.vmem [shape: bf16[400,6], index: 3, kind: output, shape index: {}]
  %s4 = sld [smem:[#allocation0]]
  $region22: #{lenet_forward.2} parent=0
    _
  %s6 = ssub.s32 1, %s4
  %s7 = scalar_select 0, %s6, %s4
  // Predicated region
  $region2: #{lenet_forward.2} parent=0 // pred_check
    _
  $region3: #{lenet_forward.2} parent=0 // pred_check_branch
    %9 = sbr.rel (0) target = $region5
  $region4: #{lenet_forward.2} parent=0 // pred_region
    _
  $region5: #{lenet_forward.2} parent=0 // pred_fallthru
    _
  // Predicated region
  $region6: #{lenet_forward.2} parent=0 // pred_check
    _
  $region7: #{lenet_forward.2} parent=0 // pred_check_branch
    %11 = sbr.rel (0) target = $region9
  $region8: #{lenet_forward.2} parent=0 // pred_region
    _
  $region9: #{lenet_forward.2} parent=0 // pred_fallthru
    _
  // Predicated region
  $region10: #{lenet_forward.2} parent=0 // pred_check
    _
  $region11: #{lenet_forward.2} parent=0 // pred_check_branch
    %13 = sbr.rel (0) target = $region13
  $region12: #{lenet_forward.2} parent=0 // pred_region
    _
  $region13: #{lenet_forward.2} parent=0 // pred_fallthru
    _
  %v15 = vld [vmem:[%s1] sm:$0xf]
  %v16 = vld [vmem:[%s1 + $0x4] sm:$0xf]
  %v17 = vld [vmem:[%s1 + $0x8] sm:$0xf]
  %v18 = vld [vmem:[%s1 + $0xc] sm:$0xf]
  %v19 = vld [vmem:[%s1 + $0x10] sm:$0xf]
  %v20 = vld [vmem:[%s1 + $0x14] sm:$0xf]
  %v21 = vld [vmem:[%s1 + $0x18] sm:$0xf]
  %v22 = vld [vmem:[%s1 + $0x1c] sm:$0xf]
  %v23 = vld [vmem:[%s1 + $0x20] sm:$0xf]
  %v24 = vld [vmem:[%s1 + $0x24] sm:$0xf]
  %v25 = vld [vmem:[%s0] sm:$0xf]
  %v26 = vld [vmem:[%s0 + $0x4] sm:$0xf]
  %v27 = vld [vmem:[%s0 + $0x8] sm:$0xf]
  %v28 = vld [vmem:[%s0 + $0xc] sm:$0xf]
  %v29 = vld [vmem:[%s0 + $0x10] sm:$0xf]
  %v30 = vld [vmem:[%s0 + $0x14] sm:$0xf]
  %v31 = vld [vmem:[%s0 + $0x18] sm:$0xf]
  %v32 = vld [vmem:[%s0 + $0x1c] sm:$0xf]
  %v33 = vld [vmem:[%s0 + $0x20] sm:$0xf]
  %v34 = vld [vmem:[%s0 + $0x24] sm:$0xf]
  %v35 = vld [vmem:[%s0 + $0x28] sm:$0xf]
  %v36 = vld [vmem:[%s0 + $0x2c] sm:$0xf]
  %v37 = vld [vmem:[%s0 + $0x30] sm:$0xf]
  %v38 = vld [vmem:[%s0 + $0x34] sm:$0xf]
  %v39 = vld [vmem:[%s0 + $0x38] sm:$0xf]
  %v40 = vld [vmem:[%s0 + $0x3c] sm:$0xf]
  %v41 = vld [vmem:[%s0 + $0x40] sm:$0xf]
  %v42 = vld [vmem:[%s0 + $0x44] sm:$0xf]
  %v43 = vld [vmem:[%s0 + $0x48] sm:$0xf]
  %v44 = vld [vmem:[%s0 + $0x4c] sm:$0xf]
  %v45 = vld [vmem:[%s0 + $0x50] sm:$0xf]
  %v46 = vld [vmem:[%s0 + $0x54] sm:$0xf]
  %v47 = vld [vmem:[%s0 + $0x58] sm:$0xf]
  %v48 = vld [vmem:[%s0 + $0x5c] sm:$0xf]
  %v49 = vld [vmem:[%s0 + $0x60] sm:$0xf]
  %v50 = vld [vmem:[%s0 + $0x64] sm:$0xf]
  %v51 = vld [vmem:[%s0 + $0x68] sm:$0xf]
  %v52 = vld [vmem:[%s0 + $0x6c] sm:$0xf]
  %v53 = vld [vmem:[%s0 + $0x70] sm:$0xf]
  %v54 = vld [vmem:[%s0 + $0x74] sm:$0xf]
  %v55 = vld [vmem:[%s0 + $0x78] sm:$0xf]
  %v56 = vld [vmem:[%s0 + $0x7c] sm:$0xf]
  %v57 = vld [vmem:[%s0 + $0x80] sm:$0xf]
  %v58 = vld [vmem:[%s0 + $0x84] sm:$0xf]
  %v59 = vld [vmem:[%s0 + $0x88] sm:$0xf]
  %v60 = vld [vmem:[%s0 + $0x8c] sm:$0xf]
  %v61 = vld [vmem:[%s0 + $0x90] sm:$0xf]
  %v62 = vld [vmem:[%s0 + $0x94] sm:$0xf]
  %v63 = vld [vmem:[%s0 + $0x98] sm:$0xf]
  %v64 = vld [vmem:[%s0 + $0x9c] sm:$0xf]
  %v65 = vld [vmem:[%s0 + $0xa0] sm:$0xf]
  %v66 = vld [vmem:[%s0 + $0xa4] sm:$0xf]
  %v67 = vld [vmem:[%s0 + $0xa8] sm:$0xf]
  %v68 = vld [vmem:[%s0 + $0xac] sm:$0xf]
  %v69 = vld [vmem:[%s0 + $0xb0] sm:$0xf]
  %v70 = vld [vmem:[%s0 + $0xb4] sm:$0xf]
  %v71 = vld [vmem:[%s0 + $0xb8] sm:$0xf]
  %v72 = vld [vmem:[%s0 + $0xbc] sm:$0xf]
  %v73 = vld [vmem:[%s0 + $0xc0] sm:$0xf]
  %v74 = vld [vmem:[%s0 + $0xc4] sm:$0xf]
  %v125 = vunpack.c.l.b16 %v25
  %v126 = vunpack.c.l.b16 %v26
  %v127 = vunpack.c.l.b16 %v27
  %v128 = vunpack.c.l.b16 %v28
  %v129 = vunpack.c.l.b16 %v29
  %v130 = vunpack.c.l.b16 %v30
  %v131 = vunpack.c.l.b16 %v31
  %v132 = vunpack.c.l.b16 %v32
  %v133 = vunpack.c.l.b16 %v33
  %v134 = vunpack.c.l.b16 %v34
  %v135 = vunpack.c.l.b16 %v35
  %v136 = vunpack.c.l.b16 %v36
  %v137 = vunpack.c.l.b16 %v37
  %v138 = vunpack.c.l.b16 %v38
  %v139 = vunpack.c.l.b16 %v39
  %v140 = vunpack.c.l.b16 %v40
  %v141 = vunpack.c.l.b16 %v41
  %v142 = vunpack.c.l.b16 %v42
  %v143 = vunpack.c.l.b16 %v43
  %v144 = vunpack.c.l.b16 %v44
  %v145 = vunpack.c.l.b16 %v45
  %v146 = vunpack.c.l.b16 %v46
  %v147 = vunpack.c.l.b16 %v47
  %v148 = vunpack.c.l.b16 %v48
  %v149 = vunpack.c.l.b16 %v49
  %v150 = vunpack.c.l.b16 %v50
  %v151 = vunpack.c.l.b16 %v51
  %v152 = vunpack.c.l.b16 %v52
  %v153 = vunpack.c.l.b16 %v53
  %v154 = vunpack.c.l.b16 %v54
  %v155 = vunpack.c.l.b16 %v55
  %v156 = vunpack.c.l.b16 %v56
  %v157 = vunpack.c.l.b16 %v57
  %v158 = vunpack.c.l.b16 %v58
  %v159 = vunpack.c.l.b16 %v59
  %v160 = vunpack.c.l.b16 %v60
  %v161 = vunpack.c.l.b16 %v61
  %v162 = vunpack.c.l.b16 %v62
  %v163 = vunpack.c.l.b16 %v63
  %v164 = vunpack.c.l.b16 %v64
  %v165 = vunpack.c.l.b16 %v65
  %v166 = vunpack.c.l.b16 %v66
  %v167 = vunpack.c.l.b16 %v67
  %v168 = vunpack.c.l.b16 %v68
  %v169 = vunpack.c.l.b16 %v69
  %v170 = vunpack.c.l.b16 %v70
  %v171 = vunpack.c.l.b16 %v71
  %v172 = vunpack.c.l.b16 %v72
  %v173 = vunpack.c.l.b16 %v73
  %v174 = vunpack.c.l.b16 %v74
  %v175 = vpack.c.b16 %v126, %v125
  %v176 = vpack.c.b16 %v128, %v127
  %v177 = vpack.c.b16 %v130, %v129
  %v178 = vpack.c.b16 %v132, %v131
  %v179 = vpack.c.b16 %v134, %v133
  %v180 = vpack.c.b16 %v136, %v135
  %v181 = vpack.c.b16 %v138, %v137
  %v182 = vpack.c.b16 %v140, %v139
  %v183 = vpack.c.b16 %v142, %v141
  %v184 = vpack.c.b16 %v144, %v143
  %v185 = vpack.c.b16 %v146, %v145
  %v186 = vpack.c.b16 %v148, %v147
  %v187 = vpack.c.b16 %v150, %v149
  %v188 = vpack.c.b16 %v152, %v151
  %v189 = vpack.c.b16 %v154, %v153
  %v190 = vpack.c.b16 %v156, %v155
  %v191 = vpack.c.b16 %v158, %v157
  %v192 = vpack.c.b16 %v160, %v159
  %v193 = vpack.c.b16 %v162, %v161
  %v194 = vpack.c.b16 %v164, %v163
  %v195 = vpack.c.b16 %v166, %v165
  %v196 = vpack.c.b16 %v168, %v167
  %v197 = vpack.c.b16 %v170, %v169
  %v198 = vpack.c.b16 %v172, %v171
  %v199 = vpack.c.b16 %v174, %v173
  %v210 = vunpack.c.l.b16 %v15
  %v211 = vunpack.c.l.b16 %v16
  %v212 = vunpack.c.l.b16 %v17
  %v213 = vunpack.c.l.b16 %v18
  %v214 = vunpack.c.l.b16 %v19
  %v215 = vunpack.c.l.b16 %v20
  %v216 = vunpack.c.l.b16 %v21
  %v217 = vunpack.c.l.b16 %v22
  %v218 = vunpack.c.l.b16 %v23
  %v219 = vunpack.c.l.b16 %v24
  %v220 = vpack.c.b16 %v211, %v210
  %v221 = vpack.c.b16 %v213, %v212
  %v222 = vpack.c.b16 %v215, %v214
  %v223 = vpack.c.b16 %v217, %v216
  %v224 = vpack.c.b16 %v219, %v218
  %vm230 = vcmask 654336
  %v232 = vsel %vm230, %v175, 0
  %v235 = vsel %vm230, %v176, 0
  %v238 = vsel %vm230, %v177, 0
  %v241 = vsel %vm230, %v178, 0
  %v244 = vsel %vm230, %v179, 0
  %v247 = vsel %vm230, %v180, 0
  %v250 = vsel %vm230, %v181, 0
  %v253 = vsel %vm230, %v182, 0
  %v256 = vsel %vm230, %v183, 0
  %v259 = vsel %vm230, %v184, 0
  %v262 = vsel %vm230, %v185, 0
  %v265 = vsel %vm230, %v186, 0
  %v268 = vsel %vm230, %v187, 0
  %v271 = vsel %vm230, %v188, 0
  %v274 = vsel %vm230, %v189, 0
  %v277 = vsel %vm230, %v190, 0
  %v280 = vsel %vm230, %v191, 0
  %v283 = vsel %vm230, %v192, 0
  %v286 = vsel %vm230, %v193, 0
  %v289 = vsel %vm230, %v194, 0
  %v292 = vsel %vm230, %v195, 0
  %v295 = vsel %vm230, %v196, 0
  %v298 = vsel %vm230, %v197, 0
  %v301 = vsel %vm230, %v198, 0
  %v304 = vsel %vm230, %v199, 0
  %306 = vmatprep.subr.bf16.mxu0 0
  %307 = vmatpush1.bf16.msra.mxu0 %v220
  %308 = vmatprep.subr.bf16.mxu0 0
  %309 = vmatpush1.bf16.msra.mxu0 %v221
  %310 = vmatprep.subr.bf16.mxu0 0
  %311 = vmatpush1.bf16.msra.mxu0 %v222
  %312 = vmatprep.subr.bf16.mxu0 0
  %313 = vmatpush1.bf16.msra.mxu0 %v223
  %314 = vmatprep.subr.bf16.mxu0 0
  %315 = vmatpush1.bf16.msra.mxu0 %v224
  %316 = vmatprep.subr.bf16.mxu0 0
  %317 = vmatpush1.bf16.msra.mxu0 0
  %318 = vmatprep.subr.bf16.mxu0 0
  %319 = vmatpush1.bf16.msra.mxu0 0
  %320 = vmatprep.subr.bf16.mxu0 0
  %321 = vmatpush1.bf16.msra.mxu0 0
  %322 = vmatprep.subr.bf16.mxu0 0
  %323 = vmatpush1.bf16.msra.mxu0 0
  %324 = vmatprep.subr.bf16.mxu0 0
  %325 = vmatpush1.bf16.msra.mxu0 0
  %326 = vmatprep.subr.bf16.mxu0 0
  %327 = vmatpush1.bf16.msra.mxu0 0
  %328 = vmatprep.subr.bf16.mxu0 0
  %329 = vmatpush1.bf16.msra.mxu0 0
  %330 = vmatprep.subr.bf16.mxu0 0
  %331 = vmatpush1.bf16.msra.mxu0 0
  %332 = vmatprep.subr.bf16.mxu0 0
  %333 = vmatpush1.bf16.msra.mxu0 0
  %334 = vmatprep.subr.bf16.mxu0 0
  %335 = vmatpush1.bf16.msra.mxu0 0
  %336 = vmatprep.subr.bf16.mxu0 0
  %337 = vmatpush1.bf16.msra.mxu0 0
  %338 = vmatprep.mubr.bf16.mxu0 0
  %339 = vmatmul.mubr.bf16.gmra.mrb[0].mxu0 %v232
  %v340 = vpop.f32.mrb[0].mxu0
  %v341 = vadd.f32 0.0, %v340
  %v342 = vpop.f32.mrb[0].mxu0
  %v343 = vpop.f32.mrb[0].mxu0
  %v344 = vadd.f32 0.0, %v343
  %v345 = vpop.f32.mrb[0].mxu0
  %346 = vmatprep.mubr.bf16.mxu0 0
  %347 = vmatmul.mubr.bf16.gmra.mrb[0].mxu0 %v235
  %v348 = vpop.f32.mrb[0].mxu0
  %v349 = vadd.f32 0.0, %v348
  %v350 = vpop.f32.mrb[0].mxu0
  %v351 = vpop.f32.mrb[0].mxu0
  %v352 = vadd.f32 0.0, %v351
  %v353 = vpop.f32.mrb[0].mxu0
  %354 = vmatprep.mubr.bf16.mxu0 0
  %355 = vmatmul.mubr.bf16.gmra.mrb[0].mxu0 %v238
  %v356 = vpop.f32.mrb[0].mxu0
  %v357 = vadd.f32 0.0, %v356
  %v358 = vpop.f32.mrb[0].mxu0
  %v359 = vpop.f32.mrb[0].mxu0
  %v360 = vadd.f32 0.0, %v359
  %v361 = vpop.f32.mrb[0].mxu0
  %362 = vmatprep.mubr.bf16.mxu0 0
  %363 = vmatmul.mubr.bf16.gmra.mrb[0].mxu0 %v241
  %v364 = vpop.f32.mrb[0].mxu0
  %v365 = vadd.f32 0.0, %v364
  %v366 = vpop.f32.mrb[0].mxu0
  %v367 = vpop.f32.mrb[0].mxu0
  %v368 = vadd.f32 0.0, %v367
  %v369 = vpop.f32.mrb[0].mxu0
  %370 = vmatprep.mubr.bf16.mxu0 0
  %371 = vmatmul.mubr.bf16.gmra.mrb[0].mxu0 %v244
  %v372 = vpop.f32.mrb[0].mxu0
  %v373 = vadd.f32 0.0, %v372
  %v374 = vpop.f32.mrb[0].mxu0
  %v375 = vpop.f32.mrb[0].mxu0
  %v376 = vadd.f32 0.0, %v375
  %v377 = vpop.f32.mrb[0].mxu0
  %378 = vmatprep.mubr.bf16.mxu0 0
  %379 = vmatmul.mubr.bf16.gmra.mrb[0].mxu0 %v247
  %v380 = vpop.f32.mrb[0].mxu0
  %v381 = vadd.f32 0.0, %v380
  %v382 = vpop.f32.mrb[0].mxu0
  %v383 = vpop.f32.mrb[0].mxu0
  %v384 = vadd.f32 0.0, %v383
  %v385 = vpop.f32.mrb[0].mxu0
  %386 = vmatprep.mubr.bf16.mxu0 0
  %387 = vmatmul.mubr.bf16.gmra.mrb[0].mxu0 %v250
  %v388 = vpop.f32.mrb[0].mxu0
  %v389 = vadd.f32 0.0, %v388
  %v390 = vpop.f32.mrb[0].mxu0
  %v391 = vpop.f32.mrb[0].mxu0
  %v392 = vadd.f32 0.0, %v391
  %v393 = vpop.f32.mrb[0].mxu0
  %394 = vmatprep.mubr.bf16.mxu0 0
  %395 = vmatmul.mubr.bf16.gmra.mrb[0].mxu0 %v253
  %v396 = vpop.f32.mrb[0].mxu0
  %v397 = vadd.f32 0.0, %v396
  %v398 = vpop.f32.mrb[0].mxu0
  %v399 = vpop.f32.mrb[0].mxu0
  %v400 = vadd.f32 0.0, %v399
  %v401 = vpop.f32.mrb[0].mxu0
  %402 = vmatprep.mubr.bf16.mxu0 0
  %403 = vmatmul.mubr.bf16.gmra.mrb[0].mxu0 %v256
  %v404 = vpop.f32.mrb[0].mxu0
  %v405 = vadd.f32 0.0, %v404
  %v406 = vpop.f32.mrb[0].mxu0
  %v407 = vpop.f32.mrb[0].mxu0
  %v408 = vadd.f32 0.0, %v407
  %v409 = vpop.f32.mrb[0].mxu0
  %410 = vmatprep.mubr.bf16.mxu0 0
  %411 = vmatmul.mubr.bf16.gmra.mrb[0].mxu0 %v259
  %v412 = vpop.f32.mrb[0].mxu0
  %v413 = vadd.f32 0.0, %v412
  %v414 = vpop.f32.mrb[0].mxu0
  %v415 = vpop.f32.mrb[0].mxu0
  %v416 = vadd.f32 0.0, %v415
  %v417 = vpop.f32.mrb[0].mxu0
  %418 = vmatprep.mubr.bf16.mxu0 0
  %419 = vmatmul.mubr.bf16.gmra.mrb[0].mxu0 %v262
  %v420 = vpop.f32.mrb[0].mxu0
  %v421 = vadd.f32 0.0, %v420
  %v422 = vpop.f32.mrb[0].mxu0
  %v423 = vpop.f32.mrb[0].mxu0
  %v424 = vadd.f32 0.0, %v423
  %v425 = vpop.f32.mrb[0].mxu0
  %426 = vmatprep.mubr.bf16.mxu0 0
  %427 = vmatmul.mubr.bf16.gmra.mrb[0].mxu0 %v265
  %v428 = vpop.f32.mrb[0].mxu0
  %v429 = vadd.f32 0.0, %v428
  %v430 = vpop.f32.mrb[0].mxu0
  %v431 = vpop.f32.mrb[0].mxu0
  %v432 = vadd.f32 0.0, %v431
  %v433 = vpop.f32.mrb[0].mxu0
  %434 = vmatprep.mubr.bf16.mxu0 0
  %435 = vmatmul.mubr.bf16.gmra.mrb[0].mxu0 %v268
  %v436 = vpop.f32.mrb[0].mxu0
  %v437 = vadd.f32 0.0, %v436
  %v438 = vpop.f32.mrb[0].mxu0
  %v439 = vpop.f32.mrb[0].mxu0
  %v440 = vadd.f32 0.0, %v439
  %v441 = vpop.f32.mrb[0].mxu0
  %442 = vmatprep.mubr.bf16.mxu0 0
  %443 = vmatmul.mubr.bf16.gmra.mrb[0].mxu0 %v271
  %v444 = vpop.f32.mrb[0].mxu0
  %v445 = vadd.f32 0.0, %v444
  %v446 = vpop.f32.mrb[0].mxu0
  %v447 = vpop.f32.mrb[0].mxu0
  %v448 = vadd.f32 0.0, %v447
  %v449 = vpop.f32.mrb[0].mxu0
  %450 = vmatprep.mubr.bf16.mxu0 0
  %451 = vmatmul.mubr.bf16.gmra.mrb[0].mxu0 %v274
  %v452 = vpop.f32.mrb[0].mxu0
  %v453 = vadd.f32 0.0, %v452
  %v454 = vpop.f32.mrb[0].mxu0
  %v455 = vpop.f32.mrb[0].mxu0
  %v456 = vadd.f32 0.0, %v455
  %v457 = vpop.f32.mrb[0].mxu0
  %458 = vmatprep.mubr.bf16.mxu0 0
  %459 = vmatmul.mubr.bf16.gmra.mrb[0].mxu0 %v277
  %v460 = vpop.f32.mrb[0].mxu0
  %v461 = vadd.f32 0.0, %v460
  %v462 = vpop.f32.mrb[0].mxu0
  %v463 = vpop.f32.mrb[0].mxu0
  %v464 = vadd.f32 0.0, %v463
  %v465 = vpop.f32.mrb[0].mxu0
  %466 = vmatprep.mubr.bf16.mxu0 0
  %467 = vmatmul.mubr.bf16.gmra.mrb[0].mxu0 %v280
  %v468 = vpop.f32.mrb[0].mxu0
  %v469 = vadd.f32 0.0, %v468
  %v470 = vpop.f32.mrb[0].mxu0
  %v471 = vpop.f32.mrb[0].mxu0
  %v472 = vadd.f32 0.0, %v471
  %v473 = vpop.f32.mrb[0].mxu0
  %474 = vmatprep.mubr.bf16.mxu0 0
  %475 = vmatmul.mubr.bf16.gmra.mrb[0].mxu0 %v283
  %v476 = vpop.f32.mrb[0].mxu0
  %v477 = vadd.f32 0.0, %v476
  %v478 = vpop.f32.mrb[0].mxu0
  %v479 = vpop.f32.mrb[0].mxu0
  %v480 = vadd.f32 0.0, %v479
  %v481 = vpop.f32.mrb[0].mxu0
  %482 = vmatprep.mubr.bf16.mxu0 0
  %483 = vmatmul.mubr.bf16.gmra.mrb[0].mxu0 %v286
  %v484 = vpop.f32.mrb[0].mxu0
  %v485 = vadd.f32 0.0, %v484
  %v486 = vpop.f32.mrb[0].mxu0
  %v487 = vpop.f32.mrb[0].mxu0
  %v488 = vadd.f32 0.0, %v487
  %v489 = vpop.f32.mrb[0].mxu0
  %490 = vmatprep.mubr.bf16.mxu0 0
  %491 = vmatmul.mubr.bf16.gmra.mrb[0].mxu0 %v289
  %v492 = vpop.f32.mrb[0].mxu0
  %v493 = vadd.f32 0.0, %v492
  %v494 = vpop.f32.mrb[0].mxu0
  %v495 = vpop.f32.mrb[0].mxu0
  %v496 = vadd.f32 0.0, %v495
  %v497 = vpop.f32.mrb[0].mxu0
  %498 = vmatprep.mubr.bf16.mxu0 0
  %499 = vmatmul.mubr.bf16.gmra.mrb[0].mxu0 %v292
  %v500 = vpop.f32.mrb[0].mxu0
  %v501 = vadd.f32 0.0, %v500
  %v502 = vpop.f32.mrb[0].mxu0
  %v503 = vpop.f32.mrb[0].mxu0
  %v504 = vadd.f32 0.0, %v503
  %v505 = vpop.f32.mrb[0].mxu0
  %506 = vmatprep.mubr.bf16.mxu0 0
  %507 = vmatmul.mubr.bf16.gmra.mrb[0].mxu0 %v295
  %v508 = vpop.f32.mrb[0].mxu0
  %v509 = vadd.f32 0.0, %v508
  %v510 = vpop.f32.mrb[0].mxu0
  %v511 = vpop.f32.mrb[0].mxu0
  %v512 = vadd.f32 0.0, %v511
  %v513 = vpop.f32.mrb[0].mxu0
  %514 = vmatprep.mubr.bf16.mxu0 0
  %515 = vmatmul.mubr.bf16.gmra.mrb[0].mxu0 %v298
  %v516 = vpop.f32.mrb[0].mxu0
  %v517 = vadd.f32 0.0, %v516
  %v518 = vpop.f32.mrb[0].mxu0
  %v519 = vpop.f32.mrb[0].mxu0
  %v520 = vadd.f32 0.0, %v519
  %v521 = vpop.f32.mrb[0].mxu0
  %522 = vmatprep.mubr.bf16.mxu0 0
  %523 = vmatmul.mubr.bf16.gmra.mrb[0].mxu0 %v301
  %v524 = vpop.f32.mrb[0].mxu0
  %v525 = vadd.f32 0.0, %v524
  %v526 = vpop.f32.mrb[0].mxu0
  %v527 = vpop.f32.mrb[0].mxu0
  %v528 = vadd.f32 0.0, %v527
  %v529 = vpop.f32.mrb[0].mxu0
  %530 = vmatprep.mubr.bf16.mxu0 0
  %531 = vmatmul.mubr.bf16.gmra.mrb[0].mxu0 %v304
  %v532 = vpop.f32.mrb[0].mxu0
  %v533 = vadd.f32 0.0, %v532
  %v534 = vpop.f32.mrb[0].mxu0
  %v535 = vpop.f32.mrb[0].mxu0
  %v536 = vadd.f32 0.0, %v535
  %v537 = vpop.f32.mrb[0].mxu0
  %538 = vdwg.mxu0
  %s539 = scalar_lea.vmem %s0, 200
  %v540 = vld [vmem:[%s539] sm:$0xf]
  %v541 = vld [vmem:[%s539 + $0x4] sm:$0xf]
  %v542 = vld [vmem:[%s539 + $0x8] sm:$0xf]
  %v543 = vld [vmem:[%s539 + $0xc] sm:$0xf]
  %v544 = vld [vmem:[%s539 + $0x10] sm:$0xf]
  %v545 = vld [vmem:[%s539 + $0x14] sm:$0xf]
  %v546 = vld [vmem:[%s539 + $0x18] sm:$0xf]
  %v547 = vld [vmem:[%s539 + $0x1c] sm:$0xf]
  %v548 = vld [vmem:[%s539 + $0x20] sm:$0xf]
  %v549 = vld [vmem:[%s539 + $0x24] sm:$0xf]
  %v550 = vld [vmem:[%s539 + $0x28] sm:$0xf]
  %v551 = vld [vmem:[%s539 + $0x2c] sm:$0xf]
  %v552 = vld [vmem:[%s539 + $0x30] sm:$0xf]
  %v553 = vld [vmem:[%s539 + $0x34] sm:$0xf]
  %v554 = vld [vmem:[%s539 + $0x38] sm:$0xf]
  %v555 = vld [vmem:[%s539 + $0x3c] sm:$0xf]
  %v556 = vld [vmem:[%s539 + $0x40] sm:$0xf]
  %v557 = vld [vmem:[%s539 + $0x44] sm:$0xf]
  %v558 = vld [vmem:[%s539 + $0x48] sm:$0xf]
  %v559 = vld [vmem:[%s539 + $0x4c] sm:$0xf]
  %v560 = vld [vmem:[%s539 + $0x50] sm:$0xf]
  %v561 = vld [vmem:[%s539 + $0x54] sm:$0xf]
  %v562 = vld [vmem:[%s539 + $0x58] sm:$0xf]
  %v563 = vld [vmem:[%s539 + $0x5c] sm:$0xf]
  %v564 = vld [vmem:[%s539 + $0x60] sm:$0xf]
  %v565 = vld [vmem:[%s539 + $0x64] sm:$0xf]
  %v566 = vld [vmem:[%s539 + $0x68] sm:$0xf]
  %v567 = vld [vmem:[%s539 + $0x6c] sm:$0xf]
  %v568 = vld [vmem:[%s539 + $0x70] sm:$0xf]
  %v569 = vld [vmem:[%s539 + $0x74] sm:$0xf]
  %v570 = vld [vmem:[%s539 + $0x78] sm:$0xf]
  %v571 = vld [vmem:[%s539 + $0x7c] sm:$0xf]
  %v572 = vld [vmem:[%s539 + $0x80] sm:$0xf]
  %v573 = vld [vmem:[%s539 + $0x84] sm:$0xf]
  %v574 = vld [vmem:[%s539 + $0x88] sm:$0xf]
  %v575 = vld [vmem:[%s539 + $0x8c] sm:$0xf]
  %v576 = vld [vmem:[%s539 + $0x90] sm:$0xf]
  %v577 = vld [vmem:[%s539 + $0x94] sm:$0xf]
  %v578 = vld [vmem:[%s539 + $0x98] sm:$0xf]
  %v579 = vld [vmem:[%s539 + $0x9c] sm:$0xf]
  %v580 = vld [vmem:[%s539 + $0xa0] sm:$0xf]
  %v581 = vld [vmem:[%s539 + $0xa4] sm:$0xf]
  %v582 = vld [vmem:[%s539 + $0xa8] sm:$0xf]
  %v583 = vld [vmem:[%s539 + $0xac] sm:$0xf]
  %v584 = vld [vmem:[%s539 + $0xb0] sm:$0xf]
  %v585 = vld [vmem:[%s539 + $0xb4] sm:$0xf]
  %v586 = vld [vmem:[%s539 + $0xb8] sm:$0xf]
  %v587 = vld [vmem:[%s539 + $0xbc] sm:$0xf]
  %v588 = vld [vmem:[%s539 + $0xc0] sm:$0xf]
  %v589 = vld [vmem:[%s539 + $0xc4] sm:$0xf]
  %v640 = vunpack.c.l.b16 %v540
  %v641 = vunpack.c.l.b16 %v541
  %v642 = vunpack.c.l.b16 %v542
  %v643 = vunpack.c.l.b16 %v543
  %v644 = vunpack.c.l.b16 %v544
  %v645 = vunpack.c.l.b16 %v545
  %v646 = vunpack.c.l.b16 %v546
  %v647 = vunpack.c.l.b16 %v547
  %v648 = vunpack.c.l.b16 %v548
  %v649 = vunpack.c.l.b16 %v549
  %v650 = vunpack.c.l.b16 %v550
  %v651 = vunpack.c.l.b16 %v551
  %v652 = vunpack.c.l.b16 %v552
  %v653 = vunpack.c.l.b16 %v553
  %v654 = vunpack.c.l.b16 %v554
  %v655 = vunpack.c.l.b16 %v555
  %v656 = vunpack.c.l.b16 %v556
  %v657 = vunpack.c.l.b16 %v557
  %v658 = vunpack.c.l.b16 %v558
  %v659 = vunpack.c.l.b16 %v559
  %v660 = vunpack.c.l.b16 %v560
  %v661 = vunpack.c.l.b16 %v561
  %v662 = vunpack.c.l.b16 %v562
  %v663 = vunpack.c.l.b16 %v563
  %v664 = vunpack.c.l.b16 %v564
  %v665 = vunpack.c.l.b16 %v565
  %v666 = vunpack.c.l.b16 %v566
  %v667 = vunpack.c.l.b16 %v567
  %v668 = vunpack.c.l.b16 %v568
  %v669 = vunpack.c.l.b16 %v569
  %v670 = vunpack.c.l.b16 %v570
  %v671 = vunpack.c.l.b16 %v571
  %v672 = vunpack.c.l.b16 %v572
  %v673 = vunpack.c.l.b16 %v573
  %v674 = vunpack.c.l.b16 %v574
  %v675 = vunpack.c.l.b16 %v575
  %v676 = vunpack.c.l.b16 %v576
  %v677 = vunpack.c.l.b16 %v577
  %v678 = vunpack.c.l.b16 %v578
  %v679 = vunpack.c.l.b16 %v579
  %v680 = vunpack.c.l.b16 %v580
  %v681 = vunpack.c.l.b16 %v581
  %v682 = vunpack.c.l.b16 %v582
  %v683 = vunpack.c.l.b16 %v583
  %v684 = vunpack.c.l.b16 %v584
  %v685 = vunpack.c.l.b16 %v585
  %v686 = vunpack.c.l.b16 %v586
  %v687 = vunpack.c.l.b16 %v587
  %v688 = vunpack.c.l.b16 %v588
  %v689 = vunpack.c.l.b16 %v589
  %v690 = vpack.c.b16 %v641, %v640
  %v691 = vpack.c.b16 %v643, %v642
  %v692 = vpack.c.b16 %v645, %v644
  %v693 = vpack.c.b16 %v647, %v646
  %v694 = vpack.c.b16 %v649, %v648
  %v695 = vpack.c.b16 %v651, %v650
  %v696 = vpack.c.b16 %v653, %v652
  %v697 = vpack.c.b16 %v655, %v654
  %v698 = vpack.c.b16 %v657, %v656
  %v699 = vpack.c.b16 %v659, %v658
  %v700 = vpack.c.b16 %v661, %v660
  %v701 = vpack.c.b16 %v663, %v662
  %v702 = vpack.c.b16 %v665, %v664
  %v703 = vpack.c.b16 %v667, %v666
  %v704 = vpack.c.b16 %v669, %v668
  %v705 = vpack.c.b16 %v671, %v670
  %v706 = vpack.c.b16 %v673, %v672
  %v707 = vpack.c.b16 %v675, %v674
  %v708 = vpack.c.b16 %v677, %v676
  %v709 = vpack.c.b16 %v679, %v678
  %v710 = vpack.c.b16 %v681, %v680
  %v711 = vpack.c.b16 %v683, %v682
  %v712 = vpack.c.b16 %v685, %v684
  %v713 = vpack.c.b16 %v687, %v686
  %v714 = vpack.c.b16 %v689, %v688
  %v716 = vsel %vm230, %v690, 0
  %v719 = vsel %vm230, %v691, 0
  %v722 = vsel %vm230, %v692, 0
  %v725 = vsel %vm230, %v693, 0
  %v728 = vsel %vm230, %v694, 0
  %v731 = vsel %vm230, %v695, 0
  %v734 = vsel %vm230, %v696, 0
  %v737 = vsel %vm230, %v697, 0
  %v740 = vsel %vm230, %v698, 0
  %v743 = vsel %vm230, %v699, 0
  %v746 = vsel %vm230, %v700, 0
  %v749 = vsel %vm230, %v701, 0
  %v752 = vsel %vm230, %v702, 0
  %v755 = vsel %vm230, %v703, 0
  %v758 = vsel %vm230, %v704, 0
  %v761 = vsel %vm230, %v705, 0
  %v764 = vsel %vm230, %v706, 0
  %v767 = vsel %vm230, %v707, 0
  %v770 = vsel %vm230, %v708, 0
  %v773 = vsel %vm230, %v709, 0
  %v776 = vsel %vm230, %v710, 0
  %v779 = vsel %vm230, %v711, 0
  %v782 = vsel %vm230, %v712, 0
  %v785 = vsel %vm230, %v713, 0
  %v788 = vsel %vm230, %v714, 0
  %790 = vmatprep.subr.bf16.mxu0 0
  %791 = vmatpush1.bf16.msra.mxu0 %v220
  %792 = vmatprep.subr.bf16.mxu0 0
  %793 = vmatpush1.bf16.msra.mxu0 %v221
  %794 = vmatprep.subr.bf16.mxu0 0
  %795 = vmatpush1.bf16.msra.mxu0 %v222
  %796 = vmatprep.subr.bf16.mxu0 0
  %797 = vmatpush1.bf16.msra.mxu0 %v223
  %798 = vmatprep.subr.bf16.mxu0 0
  %799 = vmatpush1.bf16.msra.mxu0 %v224
  %800 = vmatprep.subr.bf16.mxu0 0
  %801 = vmatpush1.bf16.msra.mxu0 0
  %802 = vmatprep.subr.bf16.mxu0 0
  %803 = vmatpush1.bf16.msra.mxu0 0
  %804 = vmatprep.subr.bf16.mxu0 0
  %805 = vmatpush1.bf16.msra.mxu0 0
  %806 = vmatprep.subr.bf16.mxu0 0
  %807 = vmatpush1.bf16.msra.mxu0 0
  %808 = vmatprep.subr.bf16.mxu0 0
  %809 = vmatpush1.bf16.msra.mxu0 0
  %810 = vmatprep.subr.bf16.mxu0 0
  %811 = vmatpush1.bf16.msra.mxu0 0
  %812 = vmatprep.subr.bf16.mxu0 0
  %813 = vmatpush1.bf16.msra.mxu0 0
  %814 = vmatprep.subr.bf16.mxu0 0
  %815 = vmatpush1.bf16.msra.mxu0 0
  %816 = vmatprep.subr.bf16.mxu0 0
  %817 = vmatpush1.bf16.msra.mxu0 0
  %818 = vmatprep.subr.bf16.mxu0 0
  %819 = vmatpush1.bf16.msra.mxu0 0
  %820 = vmatprep.subr.bf16.mxu0 0
  %821 = vmatpush1.bf16.msra.mxu0 0
  %822 = vmatprep.mubr.bf16.mxu0 0
  %823 = vmatmul.mubr.bf16.gmra.mrb[0].mxu0 %v716
  %v824 = vpop.f32.mrb[0].mxu0
  %v825 = vadd.f32 0.0, %v824
  %v826 = vpop.f32.mrb[0].mxu0
  %v827 = vpop.f32.mrb[0].mxu0
  %v828 = vadd.f32 0.0, %v827
  %v829 = vpop.f32.mrb[0].mxu0
  %830 = vmatprep.mubr.bf16.mxu0 0
  %831 = vmatmul.mubr.bf16.gmra.mrb[0].mxu0 %v719
  %v832 = vpop.f32.mrb[0].mxu0
  %v833 = vadd.f32 0.0, %v832
  %v834 = vpop.f32.mrb[0].mxu0
  %v835 = vpop.f32.mrb[0].mxu0
  %v836 = vadd.f32 0.0, %v835
  %v837 = vpop.f32.mrb[0].mxu0
  %838 = vmatprep.mubr.bf16.mxu0 0
  %839 = vmatmul.mubr.bf16.gmra.mrb[0].mxu0 %v722
  %v840 = vpop.f32.mrb[0].mxu0
  %v841 = vadd.f32 0.0, %v840
  %v842 = vpop.f32.mrb[0].mxu0
  %v843 = vpop.f32.mrb[0].mxu0
  %v844 = vadd.f32 0.0, %v843
  %v845 = vpop.f32.mrb[0].mxu0
  %846 = vmatprep.mubr.bf16.mxu0 0
  %847 = vmatmul.mubr.bf16.gmra.mrb[0].mxu0 %v725
  %v848 = vpop.f32.mrb[0].mxu0
  %v849 = vadd.f32 0.0, %v848
  %v850 = vpop.f32.mrb[0].mxu0
  %v851 = vpop.f32.mrb[0].mxu0
  %v852 = vadd.f32 0.0, %v851
  %v853 = vpop.f32.mrb[0].mxu0
  %854 = vmatprep.mubr.bf16.mxu0 0
  %855 = vmatmul.mubr.bf16.gmra.mrb[0].mxu0 %v728
  %v856 = vpop.f32.mrb[0].mxu0
  %v857 = vadd.f32 0.0, %v856
  %v858 = vpop.f32.mrb[0].mxu0
  %v859 = vpop.f32.mrb[0].mxu0
  %v860 = vadd.f32 0.0, %v859
  %v861 = vpop.f32.mrb[0].mxu0
  %862 = vmatprep.mubr.bf16.mxu0 0
  %863 = vmatmul.mubr.bf16.gmra.mrb[0].mxu0 %v731
  %v864 = vpop.f32.mrb[0].mxu0
  %v865 = vadd.f32 0.0, %v864
  %v866 = vpop.f32.mrb[0].mxu0
  %v867 = vpop.f32.mrb[0].mxu0
  %v868 = vadd.f32 0.0, %v867
  %v869 = vpop.f32.mrb[0].mxu0
  %870 = vmatprep.mubr.bf16.mxu0 0
  %871 = vmatmul.mubr.bf16.gmra.mrb[0].mxu0 %v734
  %v872 = vpop.f32.mrb[0].mxu0
  %v873 = vadd.f32 0.0, %v872
  %v874 = vpop.f32.mrb[0].mxu0
  %v875 = vpop.f32.mrb[0].mxu0
  %v876 = vadd.f32 0.0, %v875
  %v877 = vpop.f32.mrb[0].mxu0
  %878 = vmatprep.mubr.bf16.mxu0 0
  %879 = vmatmul.mubr.bf16.gmra.mrb[0].mxu0 %v737
  %v880 = vpop.f32.mrb[0].mxu0
  %v881 = vadd.f32 0.0, %v880
  %v882 = vpop.f32.mrb[0].mxu0
  %v883 = vpop.f32.mrb[0].mxu0
  %v884 = vadd.f32 0.0, %v883
  %v885 = vpop.f32.mrb[0].mxu0
  %886 = vmatprep.mubr.bf16.mxu0 0
  %887 = vmatmul.mubr.bf16.gmra.mrb[0].mxu0 %v740
  %v888 = vpop.f32.mrb[0].mxu0
  %v889 = vadd.f32 0.0, %v888
  %v890 = vpop.f32.mrb[0].mxu0
  %v891 = vpop.f32.mrb[0].mxu0
  %v892 = vadd.f32 0.0, %v891
  %v893 = vpop.f32.mrb[0].mxu0
  %894 = vmatprep.mubr.bf16.mxu0 0
  %895 = vmatmul.mubr.bf16.gmra.mrb[0].mxu0 %v743
  %v896 = vpop.f32.mrb[0].mxu0
  %v897 = vadd.f32 0.0, %v896
  %v898 = vpop.f32.mrb[0].mxu0
  %v899 = vpop.f32.mrb[0].mxu0
  %v900 = vadd.f32 0.0, %v899
  %v901 = vpop.f32.mrb[0].mxu0
  %902 = vmatprep.mubr.bf16.mxu0 0
  %903 = vmatmul.mubr.bf16.gmra.mrb[0].mxu0 %v746
  %v904 = vpop.f32.mrb[0].mxu0
  %v905 = vadd.f32 0.0, %v904
  %v906 = vpop.f32.mrb[0].mxu0
  %v907 = vpop.f32.mrb[0].mxu0
  %v908 = vadd.f32 0.0, %v907
  %v909 = vpop.f32.mrb[0].mxu0
  %910 = vmatprep.mubr.bf16.mxu0 0
  %911 = vmatmul.mubr.bf16.gmra.mrb[0].mxu0 %v749
  %v912 = vpop.f32.mrb[0].mxu0
  %v913 = vadd.f32 0.0, %v912
  %v914 = vpop.f32.mrb[0].mxu0
  %v915 = vpop.f32.mrb[0].mxu0
  %v916 = vadd.f32 0.0, %v915
  %v917 = vpop.f32.mrb[0].mxu0
  %918 = vmatprep.mubr.bf16.mxu0 0
  %919 = vmatmul.mubr.bf16.gmra.mrb[0].mxu0 %v752
  %v920 = vpop.f32.mrb[0].mxu0
  %v921 = vadd.f32 0.0, %v920
  %v922 = vpop.f32.mrb[0].mxu0
  %v923 = vpop.f32.mrb[0].mxu0
  %v924 = vadd.f32 0.0, %v923
  %v925 = vpop.f32.mrb[0].mxu0
  %926 = vmatprep.mubr.bf16.mxu0 0
  %927 = vmatmul.mubr.bf16.gmra.mrb[0].mxu0 %v755
  %v928 = vpop.f32.mrb[0].mxu0
  %v929 = vadd.f32 0.0, %v928
  %v930 = vpop.f32.mrb[0].mxu0
  %v931 = vpop.f32.mrb[0].mxu0
  %v932 = vadd.f32 0.0, %v931
  %v933 = vpop.f32.mrb[0].mxu0
  %934 = vmatprep.mubr.bf16.mxu0 0
  %935 = vmatmul.mubr.bf16.gmra.mrb[0].mxu0 %v758
  %v936 = vpop.f32.mrb[0].mxu0
  %v937 = vadd.f32 0.0, %v936
  %v938 = vpop.f32.mrb[0].mxu0
  %v939 = vpop.f32.mrb[0].mxu0
  %v940 = vadd.f32 0.0, %v939
  %v941 = vpop.f32.mrb[0].mxu0
  %942 = vmatprep.mubr.bf16.mxu0 0
  %943 = vmatmul.mubr.bf16.gmra.mrb[0].mxu0 %v761
  %v944 = vpop.f32.mrb[0].mxu0
  %v945 = vadd.f32 0.0, %v944
  %v946 = vpop.f32.mrb[0].mxu0
  %v947 = vpop.f32.mrb[0].mxu0
  %v948 = vadd.f32 0.0, %v947
  %v949 = vpop.f32.mrb[0].mxu0
  %950 = vmatprep.mubr.bf16.mxu0 0
  %951 = vmatmul.mubr.bf16.gmra.mrb[0].mxu0 %v764
  %v952 = vpop.f32.mrb[0].mxu0
  %v953 = vadd.f32 0.0, %v952
  %v954 = vpop.f32.mrb[0].mxu0
  %v955 = vpop.f32.mrb[0].mxu0
  %v956 = vadd.f32 0.0, %v955
  %v957 = vpop.f32.mrb[0].mxu0
  %958 = vmatprep.mubr.bf16.mxu0 0
  %959 = vmatmul.mubr.bf16.gmra.mrb[0].mxu0 %v767
  %v960 = vpop.f32.mrb[0].mxu0
  %v961 = vadd.f32 0.0, %v960
  %v962 = vpop.f32.mrb[0].mxu0
  %v963 = vpop.f32.mrb[0].mxu0
  %v964 = vadd.f32 0.0, %v963
  %v965 = vpop.f32.mrb[0].mxu0
  %966 = vmatprep.mubr.bf16.mxu0 0
  %967 = vmatmul.mubr.bf16.gmra.mrb[0].mxu0 %v770
  %v968 = vpop.f32.mrb[0].mxu0
  %v969 = vadd.f32 0.0, %v968
  %v970 = vpop.f32.mrb[0].mxu0
  %v971 = vpop.f32.mrb[0].mxu0
  %v972 = vadd.f32 0.0, %v971
  %v973 = vpop.f32.mrb[0].mxu0
  %974 = vmatprep.mubr.bf16.mxu0 0
  %975 = vmatmul.mubr.bf16.gmra.mrb[0].mxu0 %v773
  %v976 = vpop.f32.mrb[0].mxu0
  %v977 = vadd.f32 0.0, %v976
  %v978 = vpop.f32.mrb[0].mxu0
  %v979 = vpop.f32.mrb[0].mxu0
  %v980 = vadd.f32 0.0, %v979
  %v981 = vpop.f32.mrb[0].mxu0
  %982 = vmatprep.mubr.bf16.mxu0 0
  %983 = vmatmul.mubr.bf16.gmra.mrb[0].mxu0 %v776
  %v984 = vpop.f32.mrb[0].mxu0
  %v985 = vadd.f32 0.0, %v984
  %v986 = vpop.f32.mrb[0].mxu0
  %v987 = vpop.f32.mrb[0].mxu0
  %v988 = vadd.f32 0.0, %v987
  %v989 = vpop.f32.mrb[0].mxu0
  %990 = vmatprep.mubr.bf16.mxu0 0
  %991 = vmatmul.mubr.bf16.gmra.mrb[0].mxu0 %v779
  %v992 = vpop.f32.mrb[0].mxu0
  %v993 = vadd.f32 0.0, %v992
  %v994 = vpop.f32.mrb[0].mxu0
  %v995 = vpop.f32.mrb[0].mxu0
  %v996 = vadd.f32 0.0, %v995
  %v997 = vpop.f32.mrb[0].mxu0
  %998 = vmatprep.mubr.bf16.mxu0 0
  %999 = vmatmul.mubr.bf16.gmra.mrb[0].mxu0 %v782
  %v1000 = vpop.f32.mrb[0].mxu0
  %v1001 = vadd.f32 0.0, %v1000
  %v1002 = vpop.f32.mrb[0].mxu0
  %v1003 = vpop.f32.mrb[0].mxu0
  %v1004 = vadd.f32 0.0, %v1003
  %v1005 = vpop.f32.mrb[0].mxu0
  %1006 = vmatprep.mubr.bf16.mxu0 0
  %1007 = vmatmul.mubr.bf16.gmra.mrb[0].mxu0 %v785
  %v1008 = vpop.f32.mrb[0].mxu0
  %v1009 = vadd.f32 0.0, %v1008
  %v1010 = vpop.f32.mrb[0].mxu0
  %v1011 = vpop.f32.mrb[0].mxu0
  %v1012 = vadd.f32 0.0, %v1011
  %v1013 = vpop.f32.mrb[0].mxu0
  %1014 = vmatprep.mubr.bf16.mxu0 0
  %1015 = vmatmul.mubr.bf16.gmra.mrb[0].mxu0 %v788
  %v1016 = vpop.f32.mrb[0].mxu0
  %v1017 = vadd.f32 0.0, %v1016
  %v1018 = vpop.f32.mrb[0].mxu0
  %v1019 = vpop.f32.mrb[0].mxu0
  %v1020 = vadd.f32 0.0, %v1019
  %v1021 = vpop.f32.mrb[0].mxu0
  %1022 = vdwg.mxu0
  %v1023 = vmax.f32 %v341, %v825
  %v1024 = vmax.f32 %v344, %v828
  %v1025 = vmax.f32 %v349, %v833
  %v1026 = vmax.f32 %v352, %v836
  %v1027 = vmax.f32 %v357, %v841
  %v1028 = vmax.f32 %v360, %v844
  %v1029 = vmax.f32 %v365, %v849
  %v1030 = vmax.f32 %v368, %v852
  %v1031 = vmax.f32 %v373, %v857
  %v1032 = vmax.f32 %v376, %v860
  %v1033 = vmax.f32 %v381, %v865
  %v1034 = vmax.f32 %v384, %v868
  %v1035 = vmax.f32 %v389, %v873
  %v1036 = vmax.f32 %v392, %v876
  %v1037 = vmax.f32 %v397, %v881
  %v1038 = vmax.f32 %v400, %v884
  %v1039 = vmax.f32 %v405, %v889
  %v1040 = vmax.f32 %v408, %v892
  %v1041 = vmax.f32 %v413, %v897
  %v1042 = vmax.f32 %v416, %v900
  %v1043 = vmax.f32 %v421, %v905
  %v1044 = vmax.f32 %v424, %v908
  %v1045 = vmax.f32 %v429, %v913
  %v1046 = vmax.f32 %v432, %v916
  %v1047 = vmax.f32 %v437, %v921
  %v1048 = vmax.f32 %v440, %v924
  %v1049 = vmax.f32 %v445, %v929
  %v1050 = vmax.f32 %v448, %v932
  %v1051 = vmax.f32 %v453, %v937
  %v1052 = vmax.f32 %v456, %v940
  %v1053 = vmax.f32 %v461, %v945
  %v1054 = vmax.f32 %v464, %v948
  %v1055 = vmax.f32 %v469, %v953
  %v1056 = vmax.f32 %v472, %v956
  %v1057 = vmax.f32 %v477, %v961
  %v1058 = vmax.f32 %v480, %v964
  %v1059 = vmax.f32 %v485, %v969
  %v1060 = vmax.f32 %v488, %v972
  %v1061 = vmax.f32 %v493, %v977
  %v1062 = vmax.f32 %v496, %v980
  %v1063 = vmax.f32 %v501, %v985
  %v1064 = vmax.f32 %v504, %v988
  %v1065 = vmax.f32 %v509, %v993
  %v1066 = vmax.f32 %v512, %v996
  %v1067 = vmax.f32 %v517, %v1001
  %v1068 = vmax.f32 %v520, %v1004
  %v1069 = vmax.f32 %v525, %v1009
  %v1070 = vmax.f32 %v528, %v1012
  %v1071 = vmax.f32 %v533, %v1017
  %v1072 = vmax.f32 %v536, %v1020
  %s1073 = scalar_lea.vmem %s0, 400
  %v1074 = vld [vmem:[%s1073] sm:$0xf]
  %v1075 = vld [vmem:[%s1073 + $0x4] sm:$0xf]
  %v1076 = vld [vmem:[%s1073 + $0x8] sm:$0xf]
  %v1077 = vld [vmem:[%s1073 + $0xc] sm:$0xf]
  %v1078 = vld [vmem:[%s1073 + $0x10] sm:$0xf]
  %v1079 = vld [vmem:[%s1073 + $0x14] sm:$0xf]
  %v1080 = vld [vmem:[%s1073 + $0x18] sm:$0xf]
  %v1081 = vld [vmem:[%s1073 + $0x1c] sm:$0xf]
  %v1082 = vld [vmem:[%s1073 + $0x20] sm:$0xf]
  %v1083 = vld [vmem:[%s1073 + $0x24] sm:$0xf]
  %v1084 = vld [vmem:[%s1073 + $0x28] sm:$0xf]
  %v1085 = vld [vmem:[%s1073 + $0x2c] sm:$0xf]
  %v1086 = vld [vmem:[%s1073 + $0x30] sm:$0xf]
  %v1087 = vld [vmem:[%s1073 + $0x34] sm:$0xf]
  %v1088 = vld [vmem:[%s1073 + $0x38] sm:$0xf]
  %v1089 = vld [vmem:[%s1073 + $0x3c] sm:$0xf]
  %v1090 = vld [vmem:[%s1073 + $0x40] sm:$0xf]
  %v1091 = vld [vmem:[%s1073 + $0x44] sm:$0xf]
  %v1092 = vld [vmem:[%s1073 + $0x48] sm:$0xf]
  %v1093 = vld [vmem:[%s1073 + $0x4c] sm:$0xf]
  %v1094 = vld [vmem:[%s1073 + $0x50] sm:$0xf]
  %v1095 = vld [vmem:[%s1073 + $0x54] sm:$0xf]
  %v1096 = vld [vmem:[%s1073 + $0x58] sm:$0xf]
  %v1097 = vld [vmem:[%s1073 + $0x5c] sm:$0xf]
  %v1098 = vld [vmem:[%s1073 + $0x60] sm:$0xf]
  %v1099 = vld [vmem:[%s1073 + $0x64] sm:$0xf]
  %v1100 = vld [vmem:[%s1073 + $0x68] sm:$0xf]
  %v1101 = vld [vmem:[%s1073 + $0x6c] sm:$0xf]
  %v1102 = vld [vmem:[%s1073 + $0x70] sm:$0xf]
  %v1103 = vld [vmem:[%s1073 + $0x74] sm:$0xf]
  %v1104 = vld [vmem:[%s1073 + $0x78] sm:$0xf]
  %v1105 = vld [vmem:[%s1073 + $0x7c] sm:$0xf]
  %v1106 = vld [vmem:[%s1073 + $0x80] sm:$0xf]
  %v1107 = vld [vmem:[%s1073 + $0x84] sm:$0xf]
  %v1108 = vld [vmem:[%s1073 + $0x88] sm:$0xf]
  %v1109 = vld [vmem:[%s1073 + $0x8c] sm:$0xf]
  %v1110 = vld [vmem:[%s1073 + $0x90] sm:$0xf]
  %v1111 = vld [vmem:[%s1073 + $0x94] sm:$0xf]
  %v1112 = vld [vmem:[%s1073 + $0x98] sm:$0xf]
  %v1113 = vld [vmem:[%s1073 + $0x9c] sm:$0xf]
  %v1114 = vld [vmem:[%s1073 + $0xa0] sm:$0xf]
  %v1115 = vld [vmem:[%s1073 + $0xa4] sm:$0xf]
  %v1116 = vld [vmem:[%s1073 + $0xa8] sm:$0xf]
  %v1117 = vld [vmem:[%s1073 + $0xac] sm:$0xf]
  %v1118 = vld [vmem:[%s1073 + $0xb0] sm:$0xf]
  %v1119 = vld [vmem:[%s1073 + $0xb4] sm:$0xf]
  %v1120 = vld [vmem:[%s1073 + $0xb8] sm:$0xf]
  %v1121 = vld [vmem:[%s1073 + $0xbc] sm:$0xf]
  %v1122 = vld [vmem:[%s1073 + $0xc0] sm:$0xf]
  %v1123 = vld [vmem:[%s1073 + $0xc4] sm:$0xf]
  %v1174 = vunpack.c.l.b16 %v1074
  %v1175 = vunpack.c.l.b16 %v1075
  %v1176 = vunpack.c.l.b16 %v1076
  %v1177 = vunpack.c.l.b16 %v1077
  %v1178 = vunpack.c.l.b16 %v1078
  %v1179 = vunpack.c.l.b16 %v1079
  %v1180 = vunpack.c.l.b16 %v1080
  %v1181 = vunpack.c.l.b16 %v1081
  %v1182 = vunpack.c.l.b16 %v1082
  %v1183 = vunpack.c.l.b16 %v1083
  %v1184 = vunpack.c.l.b16 %v1084
  %v1185 = vunpack.c.l.b16 %v1085
  %v1186 = vunpack.c.l.b16 %v1086
  %v1187 = vunpack.c.l.b16 %v1087
  %v1188 = vunpack.c.l.b16 %v1088
  %v1189 = vunpack.c.l.b16 %v1089
  %v1190 = vunpack.c.l.b16 %v1090
  %v1191 = vunpack.c.l.b16 %v1091
  %v1192 = vunpack.c.l.b16 %v1092
  %v1193 = vunpack.c.l.b16 %v1093
  %v1194 = vunpack.c.l.b16 %v1094
  %v1195 = vunpack.c.l.b16 %v1095
  %v1196 = vunpack.c.l.b16 %v1096
  %v1197 = vunpack.c.l.b16 %v1097
  %v1198 = vunpack.c.l.b16 %v1098
  %v1199 = vunpack.c.l.b16 %v1099
  %v1200 = vunpack.c.l.b16 %v1100
  %v1201 = vunpack.c.l.b16 %v1101
  %v1202 = vunpack.c.l.b16 %v1102
  %v1203 = vunpack.c.l.b16 %v1103
  %v1204 = vunpack.c.l.b16 %v1104
  %v1205 = vunpack.c.l.b16 %v1105
  %v1206 = vunpack.c.l.b16 %v1106
  %v1207 = vunpack.c.l.b16 %v1107
  %v1208 = vunpack.c.l.b16 %v1108
  %v1209 = vunpack.c.l.b16 %v1109
  %v1210 = vunpack.c.l.b16 %v1110
  %v1211 = vunpack.c.l.b16 %v1111
  %v1212 = vunpack.c.l.b16 %v1112
  %v1213 = vunpack.c.l.b16 %v1113
  %v1214 = vunpack.c.l.b16 %v1114
  %v1215 = vunpack.c.l.b16 %v1115
  %v1216 = vunpack.c.l.b16 %v1116
  %v1217 = vunpack.c.l.b16 %v1117
  %v1218 = vunpack.c.l.b16 %v1118
  %v1219 = vunpack.c.l.b16 %v1119
  %v1220 = vunpack.c.l.b16 %v1120
  %v1221 = vunpack.c.l.b16 %v1121
  %v1222 = vunpack.c.l.b16 %v1122
  %v1223 = vunpack.c.l.b16 %v1123
  %v1224 = vpack.c.b16 %v1175, %v1174
  %v1225 = vpack.c.b16 %v1177, %v1176
  %v1226 = vpack.c.b16 %v1179, %v1178
  %v1227 = vpack.c.b16 %v1181, %v1180
  %v1228 = vpack.c.b16 %v1183, %v1182
  %v1229 = vpack.c.b16 %v1185, %v1184
  %v1230 = vpack.c.b16 %v1187, %v1186
  %v1231 = vpack.c.b16 %v1189, %v1188
  %v1232 = vpack.c.b16 %v1191, %v1190
  %v1233 = vpack.c.b16 %v1193, %v1192
  %v1234 = vpack.c.b16 %v1195, %v1194
  %v1235 = vpack.c.b16 %v1197, %v1196
  %v1236 = vpack.c.b16 %v1199, %v1198
  %v1237 = vpack.c.b16 %v1201, %v1200
  %v1238 = vpack.c.b16 %v1203, %v1202
  %v1239 = vpack.c.b16 %v1205, %v1204
  %v1240 = vpack.c.b16 %v1207, %v1206
  %v1241 = vpack.c.b16 %v1209, %v1208
  %v1242 = vpack.c.b16 %v1211, %v1210
  %v1243 = vpack.c.b16 %v1213, %v1212
  %v1244 = vpack.c.b16 %v1215, %v1214
  %v1245 = vpack.c.b16 %v1217, %v1216
  %v1246 = vpack.c.b16 %v1219, %v1218
  %v1247 = vpack.c.b16 %v1221, %v1220
  %v1248 = vpack.c.b16 %v1223, %v1222
  %v1250 = vsel %vm230, %v1224, 0
  %v1253 = vsel %vm230, %v1225, 0
  %v1256 = vsel %vm230, %v1226, 0
  %v1259 = vsel %vm230, %v1227, 0
  %v1262 = vsel %vm230, %v1228, 0
  %v1265 = vsel %vm230, %v1229, 0
  %v1268 = vsel %vm230, %v1230, 0
  %v1271 = vsel %vm230, %v1231, 0
  %v1274 = vsel %vm230, %v1232, 0
  %v1277 = vsel %vm230, %v1233, 0
  %v1280 = vsel %vm230, %v1234, 0
  %v1283 = vsel %vm230, %v1235, 0
  %v1286 = vsel %vm230, %v1236, 0
  %v1289 = vsel %vm230, %v1237, 0
  %v1292 = vsel %vm230, %v1238, 0
  %v1295 = vsel %vm230, %v1239, 0
  %v1298 = vsel %vm230, %v1240, 0
  %v1301 = vsel %vm230, %v1241, 0
  %v1304 = vsel %vm230, %v1242, 0
  %v1307 = vsel %vm230, %v1243, 0
  %v1310 = vsel %vm230, %v1244, 0
  %v1313 = vsel %vm230, %v1245, 0
  %v1316 = vsel %vm230, %v1246, 0
  %v1319 = vsel %vm230, %v1247, 0
  %v1322 = vsel %vm230, %v1248, 0
  %1324 = vmatprep.subr.bf16.mxu0 0
  %1325 = vmatpush1.bf16.msra.mxu0 %v220
  %1326 = vmatprep.subr.bf16.mxu0 0
  %1327 = vmatpush1.bf16.msra.mxu0 %v221
  %1328 = vmatprep.subr.bf16.mxu0 0
  %1329 = vmatpush1.bf16.msra.mxu0 %v222
  %1330 = vmatprep.subr.bf16.mxu0 0
  %1331 = vmatpush1.bf16.msra.mxu0 %v223
  %1332 = vmatprep.subr.bf16.mxu0 0
  %1333 = vmatpush1.bf16.msra.mxu0 %v224
  %1334 = vmatprep.subr.bf16.mxu0 0
  %1335 = vmatpush1.bf16.msra.mxu0 0
  %1336 = vmatprep.subr.bf16.mxu0 0
  %1337 = vmatpush1.bf16.msra.mxu0 0
  %1338 = vmatprep.subr.bf16.mxu0 0
  %1339 = vmatpush1.bf16.msra.mxu0 0
  %1340 = vmatprep.subr.bf16.mxu0 0
  %1341 = vmatpush1.bf16.msra.mxu0 0
  %1342 = vmatprep.subr.bf16.mxu0 0
  %1343 = vmatpush1.bf16.msra.mxu0 0
  %1344 = vmatprep.subr.bf16.mxu0 0
  %1345 = vmatpush1.bf16.msra.mxu0 0
  %1346 = vmatprep.subr.bf16.mxu0 0
  %1347 = vmatpush1.bf16.msra.mxu0 0
  %1348 = vmatprep.subr.bf16.mxu0 0
  %1349 = vmatpush1.bf16.msra.mxu0 0
  %1350 = vmatprep.subr.bf16.mxu0 0
  %1351 = vmatpush1.bf16.msra.mxu0 0
  %1352 = vmatprep.subr.bf16.mxu0 0
  %1353 = vmatpush1.bf16.msra.mxu0 0
  %1354 = vmatprep.subr.bf16.mxu0 0
  %1355 = vmatpush1.bf16.msra.mxu0 0
  %1356 = vmatprep.mubr.bf16.mxu0 0
  %1357 = vmatmul.mubr.bf16.gmra.mrb[0].mxu0 %v1250
  %v1358 = vpop.f32.mrb[0].mxu0
  %v1359 = vadd.f32 0.0, %v1358
  %v1360 = vpop.f32.mrb[0].mxu0
  %v1361 = vpop.f32.mrb[0].mxu0
  %v1362 = vadd.f32 0.0, %v1361
  %v1363 = vpop.f32.mrb[0].mxu0
  %1364 = vmatprep.mubr.bf16.mxu0 0
  %1365 = vmatmul.mubr.bf16.gmra.mrb[0].mxu0 %v1253
  %v1366 = vpop.f32.mrb[0].mxu0
  %v1367 = vadd.f32 0.0, %v1366
  %v1368 = vpop.f32.mrb[0].mxu0
  %v1369 = vpop.f32.mrb[0].mxu0
  %v1370 = vadd.f32 0.0, %v1369
  %v1371 = vpop.f32.mrb[0].mxu0
  %1372 = vmatprep.mubr.bf16.mxu0 0
  %1373 = vmatmul.mubr.bf16.gmra.mrb[0].mxu0 %v1256
  %v1374 = vpop.f32.mrb[0].mxu0
  %v1375 = vadd.f32 0.0, %v1374
  %v1376 = vpop.f32.mrb[0].mxu0
  %v1377 = vpop.f32.mrb[0].mxu0
  %v1378 = vadd.f32 0.0, %v1377
  %v1379 = vpop.f32.mrb[0].mxu0
  %1380 = vmatprep.mubr.bf16.mxu0 0
  %1381 = vmatmul.mubr.bf16.gmra.mrb[0].mxu0 %v1259
  %v1382 = vpop.f32.mrb[0].mxu0
  %v1383 = vadd.f32 0.0, %v1382
  %v1384 = vpop.f32.mrb[0].mxu0
  %v1385 = vpop.f32.mrb[0].mxu0
  %v1386 = vadd.f32 0.0, %v1385
  %v1387 = vpop.f32.mrb[0].mxu0
  %1388 = vmatprep.mubr.bf16.mxu0 0
  %1389 = vmatmul.mubr.bf16.gmra.mrb[0].mxu0 %v1262
  %v1390 = vpop.f32.mrb[0].mxu0
  %v1391 = vadd.f32 0.0, %v1390
  %v1392 = vpop.f32.mrb[0].mxu0
  %v1393 = vpop.f32.mrb[0].mxu0
  %v1394 = vadd.f32 0.0, %v1393
  %v1395 = vpop.f32.mrb[0].mxu0
  %1396 = vmatprep.mubr.bf16.mxu0 0
  %1397 = vmatmul.mubr.bf16.gmra.mrb[0].mxu0 %v1265
  %v1398 = vpop.f32.mrb[0].mxu0
  %v1399 = vadd.f32 0.0, %v1398
  %v1400 = vpop.f32.mrb[0].mxu0
  %v1401 = vpop.f32.mrb[0].mxu0
  %v1402 = vadd.f32 0.0, %v1401
  %v1403 = vpop.f32.mrb[0].mxu0
  %1404 = vmatprep.mubr.bf16.mxu0 0
  %1405 = vmatmul.mubr.bf16.gmra.mrb[0].mxu0 %v1268
  %v1406 = vpop.f32.mrb[0].mxu0
  %v1407 = vadd.f32 0.0, %v1406
  %v1408 = vpop.f32.mrb[0].mxu0
  %v1409 = vpop.f32.mrb[0].mxu0
  %v1410 = vadd.f32 0.0, %v1409
  %v1411 = vpop.f32.mrb[0].mxu0
  %1412 = vmatprep.mubr.bf16.mxu0 0
  %1413 = vmatmul.mubr.bf16.gmra.mrb[0].mxu0 %v1271
  %v1414 = vpop.f32.mrb[0].mxu0
  %v1415 = vadd.f32 0.0, %v1414
  %v1416 = vpop.f32.mrb[0].mxu0
  %v1417 = vpop.f32.mrb[0].mxu0
  %v1418 = vadd.f32 0.0, %v1417
  %v1419 = vpop.f32.mrb[0].mxu0
  %1420 = vmatprep.mubr.bf16.mxu0 0
  %1421 = vmatmul.mubr.bf16.gmra.mrb[0].mxu0 %v1274
  %v1422 = vpop.f32.mrb[0].mxu0
  %v1423 = vadd.f32 0.0, %v1422
  %v1424 = vpop.f32.mrb[0].mxu0
  %v1425 = vpop.f32.mrb[0].mxu0
  %v1426 = vadd.f32 0.0, %v1425
  %v1427 = vpop.f32.mrb[0].mxu0
  %1428 = vmatprep.mubr.bf16.mxu0 0
  %1429 = vmatmul.mubr.bf16.gmra.mrb[0].mxu0 %v1277
  %v1430 = vpop.f32.mrb[0].mxu0
  %v1431 = vadd.f32 0.0, %v1430
  %v1432 = vpop.f32.mrb[0].mxu0
  %v1433 = vpop.f32.mrb[0].mxu0
  %v1434 = vadd.f32 0.0, %v1433
  %v1435 = vpop.f32.mrb[0].mxu0
  %1436 = vmatprep.mubr.bf16.mxu0 0
  %1437 = vmatmul.mubr.bf16.gmra.mrb[0].mxu0 %v1280
  %v1438 = vpop.f32.mrb[0].mxu0
  %v1439 = vadd.f32 0.0, %v1438
  %v1440 = vpop.f32.mrb[0].mxu0
  %v1441 = vpop.f32.mrb[0].mxu0
  %v1442 = vadd.f32 0.0, %v1441
  %v1443 = vpop.f32.mrb[0].mxu0
  %1444 = vmatprep.mubr.bf16.mxu0 0
  %1445 = vmatmul.mubr.bf16.gmra.mrb[0].mxu0 %v1283
  %v1446 = vpop.f32.mrb[0].mxu0
  %v1447 = vadd.f32 0.0, %v1446
  %v1448 = vpop.f32.mrb[0].mxu0
  %v1449 = vpop.f32.mrb[0].mxu0
  %v1450 = vadd.f32 0.0, %v1449
  %v1451 = vpop.f32.mrb[0].mxu0
  %1452 = vmatprep.mubr.bf16.mxu0 0
  %1453 = vmatmul.mubr.bf16.gmra.mrb[0].mxu0 %v1286
  %v1454 = vpop.f32.mrb[0].mxu0
  %v1455 = vadd.f32 0.0, %v1454
  %v1456 = vpop.f32.mrb[0].mxu0
  %v1457 = vpop.f32.mrb[0].mxu0
  %v1458 = vadd.f32 0.0, %v1457
  %v1459 = vpop.f32.mrb[0].mxu0
  %1460 = vmatprep.mubr.bf16.mxu0 0
  %1461 = vmatmul.mubr.bf16.gmra.mrb[0].mxu0 %v1289
  %v1462 = vpop.f32.mrb[0].mxu0
  %v1463 = vadd.f32 0.0, %v1462
  %v1464 = vpop.f32.mrb[0].mxu0
  %v1465 = vpop.f32.mrb[0].mxu0
  %v1466 = vadd.f32 0.0, %v1465
  %v1467 = vpop.f32.mrb[0].mxu0
  %1468 = vmatprep.mubr.bf16.mxu0 0
  %1469 = vmatmul.mubr.bf16.gmra.mrb[0].mxu0 %v1292
  %v1470 = vpop.f32.mrb[0].mxu0
  %v1471 = vadd.f32 0.0, %v1470
  %v1472 = vpop.f32.mrb[0].mxu0
  %v1473 = vpop.f32.mrb[0].mxu0
  %v1474 = vadd.f32 0.0, %v1473
  %v1475 = vpop.f32.mrb[0].mxu0
  %1476 = vmatprep.mubr.bf16.mxu0 0
  %1477 = vmatmul.mubr.bf16.gmra.mrb[0].mxu0 %v1295
  %v1478 = vpop.f32.mrb[0].mxu0
  %v1479 = vadd.f32 0.0, %v1478
  %v1480 = vpop.f32.mrb[0].mxu0
  %v1481 = vpop.f32.mrb[0].mxu0
  %v1482 = vadd.f32 0.0, %v1481
  %v1483 = vpop.f32.mrb[0].mxu0
  %1484 = vmatprep.mubr.bf16.mxu0 0
  %1485 = vmatmul.mubr.bf16.gmra.mrb[0].mxu0 %v1298
  %v1486 = vpop.f32.mrb[0].mxu0
  %v1487 = vadd.f32 0.0, %v1486
  %v1488 = vpop.f32.mrb[0].mxu0
  %v1489 = vpop.f32.mrb[0].mxu0
  %v1490 = vadd.f32 0.0, %v1489
  %v1491 = vpop.f32.mrb[0].mxu0
  %1492 = vmatprep.mubr.bf16.mxu0 0
  %1493 = vmatmul.mubr.bf16.gmra.mrb[0].mxu0 %v1301
  %v1494 = vpop.f32.mrb[0].mxu0
  %v1495 = vadd.f32 0.0, %v1494
  %v1496 = vpop.f32.mrb[0].mxu0
  %v1497 = vpop.f32.mrb[0].mxu0
  %v1498 = vadd.f32 0.0, %v1497
  %v1499 = vpop.f32.mrb[0].mxu0
  %1500 = vmatprep.mubr.bf16.mxu0 0
  %1501 = vmatmul.mubr.bf16.gmra.mrb[0].mxu0 %v1304
  %v1502 = vpop.f32.mrb[0].mxu0
  %v1503 = vadd.f32 0.0, %v1502
  %v1504 = vpop.f32.mrb[0].mxu0
  %v1505 = vpop.f32.mrb[0].mxu0
  %v1506 = vadd.f32 0.0, %v1505
  %v1507 = vpop.f32.mrb[0].mxu0
  %1508 = vmatprep.mubr.bf16.mxu0 0
  %1509 = vmatmul.mubr.bf16.gmra.mrb[0].mxu0 %v1307
  %v1510 = vpop.f32.mrb[0].mxu0
  %v1511 = vadd.f32 0.0, %v1510
  %v1512 = vpop.f32.mrb[0].mxu0
  %v1513 = vpop.f32.mrb[0].mxu0
  %v1514 = vadd.f32 0.0, %v1513
  %v1515 = vpop.f32.mrb[0].mxu0
  %1516 = vmatprep.mubr.bf16.mxu0 0
  %1517 = vmatmul.mubr.bf16.gmra.mrb[0].mxu0 %v1310
  %v1518 = vpop.f32.mrb[0].mxu0
  %v1519 = vadd.f32 0.0, %v1518
  %v1520 = vpop.f32.mrb[0].mxu0
  %v1521 = vpop.f32.mrb[0].mxu0
  %v1522 = vadd.f32 0.0, %v1521
  %v1523 = vpop.f32.mrb[0].mxu0
  %1524 = vmatprep.mubr.bf16.mxu0 0
  %1525 = vmatmul.mubr.bf16.gmra.mrb[0].mxu0 %v1313
  %v1526 = vpop.f32.mrb[0].mxu0
  %v1527 = vadd.f32 0.0, %v1526
  %v1528 = vpop.f32.mrb[0].mxu0
  %v1529 = vpop.f32.mrb[0].mxu0
  %v1530 = vadd.f32 0.0, %v1529
  %v1531 = vpop.f32.mrb[0].mxu0
  %1532 = vmatprep.mubr.bf16.mxu0 0
  %1533 = vmatmul.mubr.bf16.gmra.mrb[0].mxu0 %v1316
  %v1534 = vpop.f32.mrb[0].mxu0
  %v1535 = vadd.f32 0.0, %v1534
  %v1536 = vpop.f32.mrb[0].mxu0
  %v1537 = vpop.f32.mrb[0].mxu0
  %v1538 = vadd.f32 0.0, %v1537
  %v1539 = vpop.f32.mrb[0].mxu0
  %1540 = vmatprep.mubr.bf16.mxu0 0
  %1541 = vmatmul.mubr.bf16.gmra.mrb[0].mxu0 %v1319
  %v1542 = vpop.f32.mrb[0].mxu0
  %v1543 = vadd.f32 0.0, %v1542
  %v1544 = vpop.f32.mrb[0].mxu0
  %v1545 = vpop.f32.mrb[0].mxu0
  %v1546 = vadd.f32 0.0, %v1545
  %v1547 = vpop.f32.mrb[0].mxu0
  %1548 = vmatprep.mubr.bf16.mxu0 0
  %1549 = vmatmul.mubr.bf16.gmra.mrb[0].mxu0 %v1322
  %v1550 = vpop.f32.mrb[0].mxu0
  %v1551 = vadd.f32 0.0, %v1550
  %v1552 = vpop.f32.mrb[0].mxu0
  %v1553 = vpop.f32.mrb[0].mxu0
  %v1554 = vadd.f32 0.0, %v1553
  %v1555 = vpop.f32.mrb[0].mxu0
  %1556 = vdwg.mxu0
  %v1557 = vmax.f32 %v1023, %v1359
  %v1558 = vmax.f32 %v1024, %v1362
  %v1559 = vmax.f32 %v1025, %v1367
  %v1560 = vmax.f32 %v1026, %v1370
  %v1561 = vmax.f32 %v1027, %v1375
  %v1562 = vmax.f32 %v1028, %v1378
  %v1563 = vmax.f32 %v1029, %v1383
  %v1564 = vmax.f32 %v1030, %v1386
  %v1565 = vmax.f32 %v1031, %v1391
  %v1566 = vmax.f32 %v1032, %v1394
  %v1567 = vmax.f32 %v1033, %v1399
  %v1568 = vmax.f32 %v1034, %v1402
  %v1569 = vmax.f32 %v1035, %v1407
  %v1570 = vmax.f32 %v1036, %v1410
  %v1571 = vmax.f32 %v1037, %v1415
  %v1572 = vmax.f32 %v1038, %v1418
  %v1573 = vmax.f32 %v1039, %v1423
  %v1574 = vmax.f32 %v1040, %v1426
  %v1575 = vmax.f32 %v1041, %v1431
  %v1576 = vmax.f32 %v1042, %v1434
  %v1577 = vmax.f32 %v1043, %v1439
  %v1578 = vmax.f32 %v1044, %v1442
  %v1579 = vmax.f32 %v1045, %v1447
  %v1580 = vmax.f32 %v1046, %v1450
  %v1581 = vmax.f32 %v1047, %v1455
  %v1582 = vmax.f32 %v1048, %v1458
  %v1583 = vmax.f32 %v1049, %v1463
  %v1584 = vmax.f32 %v1050, %v1466
  %v1585 = vmax.f32 %v1051, %v1471
  %v1586 = vmax.f32 %v1052, %v1474
  %v1587 = vmax.f32 %v1053, %v1479
  %v1588 = vmax.f32 %v1054, %v1482
  %v1589 = vmax.f32 %v1055, %v1487
  %v1590 = vmax.f32 %v1056, %v1490
  %v1591 = vmax.f32 %v1057, %v1495
  %v1592 = vmax.f32 %v1058, %v1498
  %v1593 = vmax.f32 %v1059, %v1503
  %v1594 = vmax.f32 %v1060, %v1506
  %v1595 = vmax.f32 %v1061, %v1511
  %v1596 = vmax.f32 %v1062, %v1514
  %v1597 = vmax.f32 %v1063, %v1519
  %v1598 = vmax.f32 %v1064, %v1522
  %v1599 = vmax.f32 %v1065, %v1527
  %v1600 = vmax.f32 %v1066, %v1530
  %v1601 = vmax.f32 %v1067, %v1535
  %v1602 = vmax.f32 %v1068, %v1538
  %v1603 = vmax.f32 %v1069, %v1543
  %v1604 = vmax.f32 %v1070, %v1546
  %v1605 = vmax.f32 %v1071, %v1551
  %v1606 = vmax.f32 %v1072, %v1554
  %s1607 = scalar_lea.vmem %s0, 600
  %v1608 = vld [vmem:[%s1607] sm:$0xf]
  %v1609 = vld [vmem:[%s1607 + $0x4] sm:$0xf]
  %v1610 = vld [vmem:[%s1607 + $0x8] sm:$0xf]
  %v1611 = vld [vmem:[%s1607 + $0xc] sm:$0xf]
  %v1612 = vld [vmem:[%s1607 + $0x10] sm:$0xf]
  %v1613 = vld [vmem:[%s1607 + $0x14] sm:$0xf]
  %v1614 = vld [vmem:[%s1607 + $0x18] sm:$0xf]
  %v1615 = vld [vmem:[%s1607 + $0x1c] sm:$0xf]
  %v1616 = vld [vmem:[%s1607 + $0x20] sm:$0xf]
  %v1617 = vld [vmem:[%s1607 + $0x24] sm:$0xf]
  %v1618 = vld [vmem:[%s1607 + $0x28] sm:$0xf]
  %v1619 = vld [vmem:[%s1607 + $0x2c] sm:$0xf]
  %v1620 = vld [vmem:[%s1607 + $0x30] sm:$0xf]
  %v1621 = vld [vmem:[%s1607 + $0x34] sm:$0xf]
  %v1622 = vld [vmem:[%s1607 + $0x38] sm:$0xf]
  %v1623 = vld [vmem:[%s1607 + $0x3c] sm:$0xf]
  %v1624 = vld [vmem:[%s1607 + $0x40] sm:$0xf]
  %v1625 = vld [vmem:[%s1607 + $0x44] sm:$0xf]
  %v1626 = vld [vmem:[%s1607 + $0x48] sm:$0xf]
  %v1627 = vld [vmem:[%s1607 + $0x4c] sm:$0xf]
  %v1628 = vld [vmem:[%s1607 + $0x50] sm:$0xf]
  %v1629 = vld [vmem:[%s1607 + $0x54] sm:$0xf]
  %v1630 = vld [vmem:[%s1607 + $0x58] sm:$0xf]
  %v1631 = vld [vmem:[%s1607 + $0x5c] sm:$0xf]
  %v1632 = vld [vmem:[%s1607 + $0x60] sm:$0xf]
  %v1633 = vld [vmem:[%s1607 + $0x64] sm:$0xf]
  %v1634 = vld [vmem:[%s1607 + $0x68] sm:$0xf]
  %v1635 = vld [vmem:[%s1607 + $0x6c] sm:$0xf]
  %v1636 = vld [vmem:[%s1607 + $0x70] sm:$0xf]
  %v1637 = vld [vmem:[%s1607 + $0x74] sm:$0xf]
  %v1638 = vld [vmem:[%s1607 + $0x78] sm:$0xf]
  %v1639 = vld [vmem:[%s1607 + $0x7c] sm:$0xf]
  %v1640 = vld [vmem:[%s1607 + $0x80] sm:$0xf]
  %v1641 = vld [vmem:[%s1607 + $0x84] sm:$0xf]
  %v1642 = vld [vmem:[%s1607 + $0x88] sm:$0xf]
  %v1643 = vld [vmem:[%s1607 + $0x8c] sm:$0xf]
  %v1644 = vld [vmem:[%s1607 + $0x90] sm:$0xf]
  %v1645 = vld [vmem:[%s1607 + $0x94] sm:$0xf]
  %v1646 = vld [vmem:[%s1607 + $0x98] sm:$0xf]
  %v1647 = vld [vmem:[%s1607 + $0x9c] sm:$0xf]
  %v1648 = vld [vmem:[%s1607 + $0xa0] sm:$0xf]
  %v1649 = vld [vmem:[%s1607 + $0xa4] sm:$0xf]
  %v1650 = vld [vmem:[%s1607 + $0xa8] sm:$0xf]
  %v1651 = vld [vmem:[%s1607 + $0xac] sm:$0xf]
  %v1652 = vld [vmem:[%s1607 + $0xb0] sm:$0xf]
  %v1653 = vld [vmem:[%s1607 + $0xb4] sm:$0xf]
  %v1654 = vld [vmem:[%s1607 + $0xb8] sm:$0xf]
  %v1655 = vld [vmem:[%s1607 + $0xbc] sm:$0xf]
  %v1656 = vld [vmem:[%s1607 + $0xc0] sm:$0xf]
  %v1657 = vld [vmem:[%s1607 + $0xc4] sm:$0xf]
  %v1708 = vunpack.c.l.b16 %v1608
  %v1709 = vunpack.c.l.b16 %v1609
  %v1710 = vunpack.c.l.b16 %v1610
  %v1711 = vunpack.c.l.b16 %v1611
  %v1712 = vunpack.c.l.b16 %v1612
  %v1713 = vunpack.c.l.b16 %v1613
  %v1714 = vunpack.c.l.b16 %v1614
  %v1715 = vunpack.c.l.b16 %v1615
  %v1716 = vunpack.c.l.b16 %v1616
  %v1717 = vunpack.c.l.b16 %v1617
  %v1718 = vunpack.c.l.b16 %v1618
  %v1719 = vunpack.c.l.b16 %v1619
  %v1720 = vunpack.c.l.b16 %v1620
  %v1721 = vunpack.c.l.b16 %v1621
  %v1722 = vunpack.c.l.b16 %v1622
  %v1723 = vunpack.c.l.b16 %v1623
  %v1724 = vunpack.c.l.b16 %v1624
  %v1725 = vunpack.c.l.b16 %v1625
  %v1726 = vunpack.c.l.b16 %v1626
  %v1727 = vunpack.c.l.b16 %v1627
  %v1728 = vunpack.c.l.b16 %v1628
  %v1729 = vunpack.c.l.b16 %v1629
  %v1730 = vunpack.c.l.b16 %v1630
  %v1731 = vunpack.c.l.b16 %v1631
  %v1732 = vunpack.c.l.b16 %v1632
  %v1733 = vunpack.c.l.b16 %v1633
  %v1734 = vunpack.c.l.b16 %v1634
  %v1735 = vunpack.c.l.b16 %v1635
  %v1736 = vunpack.c.l.b16 %v1636
  %v1737 = vunpack.c.l.b16 %v1637
  %v1738 = vunpack.c.l.b16 %v1638
  %v1739 = vunpack.c.l.b16 %v1639
  %v1740 = vunpack.c.l.b16 %v1640
  %v1741 = vunpack.c.l.b16 %v1641
  %v1742 = vunpack.c.l.b16 %v1642
  %v1743 = vunpack.c.l.b16 %v1643
  %v1744 = vunpack.c.l.b16 %v1644
  %v1745 = vunpack.c.l.b16 %v1645
  %v1746 = vunpack.c.l.b16 %v1646
  %v1747 = vunpack.c.l.b16 %v1647
  %v1748 = vunpack.c.l.b16 %v1648
  %v1749 = vunpack.c.l.b16 %v1649
  %v1750 = vunpack.c.l.b16 %v1650
  %v1751 = vunpack.c.l.b16 %v1651
  %v1752 = vunpack.c.l.b16 %v1652
  %v1753 = vunpack.c.l.b16 %v1653
  %v1754 = vunpack.c.l.b16 %v1654
  %v1755 = vunpack.c.l.b16 %v1655
  %v1756 = vunpack.c.l.b16 %v1656
  %v1757 = vunpack.c.l.b16 %v1657
  %v1758 = vpack.c.b16 %v1709, %v1708
  %v1759 = vpack.c.b16 %v1711, %v1710
  %v1760 = vpack.c.b16 %v1713, %v1712
  %v1761 = vpack.c.b16 %v1715, %v1714
  %v1762 = vpack.c.b16 %v1717, %v1716
  %v1763 = vpack.c.b16 %v1719, %v1718
  %v1764 = vpack.c.b16 %v1721, %v1720
  %v1765 = vpack.c.b16 %v1723, %v1722
  %v1766 = vpack.c.b16 %v1725, %v1724
  %v1767 = vpack.c.b16 %v1727, %v1726
  %v1768 = vpack.c.b16 %v1729, %v1728
  %v1769 = vpack.c.b16 %v1731, %v1730
  %v1770 = vpack.c.b16 %v1733, %v1732
  %v1771 = vpack.c.b16 %v1735, %v1734
  %v1772 = vpack.c.b16 %v1737, %v1736
  %v1773 = vpack.c.b16 %v1739, %v1738
  %v1774 = vpack.c.b16 %v1741, %v1740
  %v1775 = vpack.c.b16 %v1743, %v1742
  %v1776 = vpack.c.b16 %v1745, %v1744
  %v1777 = vpack.c.b16 %v1747, %v1746
  %v1778 = vpack.c.b16 %v1749, %v1748
  %v1779 = vpack.c.b16 %v1751, %v1750
  %v1780 = vpack.c.b16 %v1753, %v1752
  %v1781 = vpack.c.b16 %v1755, %v1754
  %v1782 = vpack.c.b16 %v1757, %v1756
  %v1784 = vsel %vm230, %v1758, 0
  %v1787 = vsel %vm230, %v1759, 0
  %v1790 = vsel %vm230, %v1760, 0
  %v1793 = vsel %vm230, %v1761, 0
  %v1796 = vsel %vm230, %v1762, 0
  %v1799 = vsel %vm230, %v1763, 0
  %v1802 = vsel %vm230, %v1764, 0
  %v1805 = vsel %vm230, %v1765, 0
  %v1808 = vsel %vm230, %v1766, 0
  %v1811 = vsel %vm230, %v1767, 0
  %v1814 = vsel %vm230, %v1768, 0
  %v1817 = vsel %vm230, %v1769, 0
  %v1820 = vsel %vm230, %v1770, 0
  %v1823 = vsel %vm230, %v1771, 0
  %v1826 = vsel %vm230, %v1772, 0
  %v1829 = vsel %vm230, %v1773, 0
  %v1832 = vsel %vm230, %v1774, 0
  %v1835 = vsel %vm230, %v1775, 0
  %v1838 = vsel %vm230, %v1776, 0
  %v1841 = vsel %vm230, %v1777, 0
  %v1844 = vsel %vm230, %v1778, 0
  %v1847 = vsel %vm230, %v1779, 0
  %v1850 = vsel %vm230, %v1780, 0
  %v1853 = vsel %vm230, %v1781, 0
  %v1856 = vsel %vm230, %v1782, 0
  %1858 = vmatprep.subr.bf16.mxu0 0
  %1859 = vmatpush1.bf16.msra.mxu0 %v220
  %1860 = vmatprep.subr.bf16.mxu0 0
  %1861 = vmatpush1.bf16.msra.mxu0 %v221
  %1862 = vmatprep.subr.bf16.mxu0 0
  %1863 = vmatpush1.bf16.msra.mxu0 %v222
  %1864 = vmatprep.subr.bf16.mxu0 0
  %1865 = vmatpush1.bf16.msra.mxu0 %v223
  %1866 = vmatprep.subr.bf16.mxu0 0
  %1867 = vmatpush1.bf16.msra.mxu0 %v224
  %1868 = vmatprep.subr.bf16.mxu0 0
  %1869 = vmatpush1.bf16.msra.mxu0 0
  %1870 = vmatprep.subr.bf16.mxu0 0
  %1871 = vmatpush1.bf16.msra.mxu0 0
  %1872 = vmatprep.subr.bf16.mxu0 0
  %1873 = vmatpush1.bf16.msra.mxu0 0
  %1874 = vmatprep.subr.bf16.mxu0 0
  %1875 = vmatpush1.bf16.msra.mxu0 0
  %1876 = vmatprep.subr.bf16.mxu0 0
  %1877 = vmatpush1.bf16.msra.mxu0 0
  %1878 = vmatprep.subr.bf16.mxu0 0
  %1879 = vmatpush1.bf16.msra.mxu0 0
  %1880 = vmatprep.subr.bf16.mxu0 0
  %1881 = vmatpush1.bf16.msra.mxu0 0
  %1882 = vmatprep.subr.bf16.mxu0 0
  %1883 = vmatpush1.bf16.msra.mxu0 0
  %1884 = vmatprep.subr.bf16.mxu0 0
  %1885 = vmatpush1.bf16.msra.mxu0 0
  %1886 = vmatprep.subr.bf16.mxu0 0
  %1887 = vmatpush1.bf16.msra.mxu0 0
  %1888 = vmatprep.subr.bf16.mxu0 0
  %1889 = vmatpush1.bf16.msra.mxu0 0
  %1890 = vmatprep.mubr.bf16.mxu0 0
  %1891 = vmatmul.mubr.bf16.gmra.mrb[0].mxu0 %v1784
  %v1892 = vpop.f32.mrb[0].mxu0
  %v1893 = vadd.f32 0.0, %v1892
  %v1894 = vpop.f32.mrb[0].mxu0
  %v1895 = vpop.f32.mrb[0].mxu0
  %v1896 = vadd.f32 0.0, %v1895
  %v1897 = vpop.f32.mrb[0].mxu0
  %1898 = vmatprep.mubr.bf16.mxu0 0
  %1899 = vmatmul.mubr.bf16.gmra.mrb[0].mxu0 %v1787
  %v1900 = vpop.f32.mrb[0].mxu0
  %v1901 = vadd.f32 0.0, %v1900
  %v1902 = vpop.f32.mrb[0].mxu0
  %v1903 = vpop.f32.mrb[0].mxu0
  %v1904 = vadd.f32 0.0, %v1903
  %v1905 = vpop.f32.mrb[0].mxu0
  %1906 = vmatprep.mubr.bf16.mxu0 0
  %1907 = vmatmul.mubr.bf16.gmra.mrb[0].mxu0 %v1790
  %v1908 = vpop.f32.mrb[0].mxu0
  %v1909 = vadd.f32 0.0, %v1908
  %v1910 = vpop.f32.mrb[0].mxu0
  %v1911 = vpop.f32.mrb[0].mxu0
  %v1912 = vadd.f32 0.0, %v1911
  %v1913 = vpop.f32.mrb[0].mxu0
  %1914 = vmatprep.mubr.bf16.mxu0 0
  %1915 = vmatmul.mubr.bf16.gmra.mrb[0].mxu0 %v1793
  %v1916 = vpop.f32.mrb[0].mxu0
  %v1917 = vadd.f32 0.0, %v1916
  %v1918 = vpop.f32.mrb[0].mxu0
  %v1919 = vpop.f32.mrb[0].mxu0
  %v1920 = vadd.f32 0.0, %v1919
  %v1921 = vpop.f32.mrb[0].mxu0
  %1922 = vmatprep.mubr.bf16.mxu0 0
  %1923 = vmatmul.mubr.bf16.gmra.mrb[0].mxu0 %v1796
  %v1924 = vpop.f32.mrb[0].mxu0
  %v1925 = vadd.f32 0.0, %v1924
  %v1926 = vpop.f32.mrb[0].mxu0
  %v1927 = vpop.f32.mrb[0].mxu0
  %v1928 = vadd.f32 0.0, %v1927
  %v1929 = vpop.f32.mrb[0].mxu0
  %1930 = vmatprep.mubr.bf16.mxu0 0
  %1931 = vmatmul.mubr.bf16.gmra.mrb[0].mxu0 %v1799
  %v1932 = vpop.f32.mrb[0].mxu0
  %v1933 = vadd.f32 0.0, %v1932
  %v1934 = vpop.f32.mrb[0].mxu0
  %v1935 = vpop.f32.mrb[0].mxu0
  %v1936 = vadd.f32 0.0, %v1935
  %v1937 = vpop.f32.mrb[0].mxu0
  %1938 = vmatprep.mubr.bf16.mxu0 0
  %1939 = vmatmul.mubr.bf16.gmra.mrb[0].mxu0 %v1802
  %v1940 = vpop.f32.mrb[0].mxu0
  %v1941 = vadd.f32 0.0, %v1940
  %v1942 = vpop.f32.mrb[0].mxu0
  %v1943 = vpop.f32.mrb[0].mxu0
  %v1944 = vadd.f32 0.0, %v1943
  %v1945 = vpop.f32.mrb[0].mxu0
  %1946 = vmatprep.mubr.bf16.mxu0 0
  %1947 = vmatmul.mubr.bf16.gmra.mrb[0].mxu0 %v1805
  %v1948 = vpop.f32.mrb[0].mxu0
  %v1949 = vadd.f32 0.0, %v1948
  %v1950 = vpop.f32.mrb[0].mxu0
  %v1951 = vpop.f32.mrb[0].mxu0
  %v1952 = vadd.f32 0.0, %v1951
  %v1953 = vpop.f32.mrb[0].mxu0
  %1954 = vmatprep.mubr.bf16.mxu0 0
  %1955 = vmatmul.mubr.bf16.gmra.mrb[0].mxu0 %v1808
  %v1956 = vpop.f32.mrb[0].mxu0
  %v1957 = vadd.f32 0.0, %v1956
  %v1958 = vpop.f32.mrb[0].mxu0
  %v1959 = vpop.f32.mrb[0].mxu0
  %v1960 = vadd.f32 0.0, %v1959
  %v1961 = vpop.f32.mrb[0].mxu0
  %1962 = vmatprep.mubr.bf16.mxu0 0
  %1963 = vmatmul.mubr.bf16.gmra.mrb[0].mxu0 %v1811
  %v1964 = vpop.f32.mrb[0].mxu0
  %v1965 = vadd.f32 0.0, %v1964
  %v1966 = vpop.f32.mrb[0].mxu0
  %v1967 = vpop.f32.mrb[0].mxu0
  %v1968 = vadd.f32 0.0, %v1967
  %v1969 = vpop.f32.mrb[0].mxu0
  %1970 = vmatprep.mubr.bf16.mxu0 0
  %1971 = vmatmul.mubr.bf16.gmra.mrb[0].mxu0 %v1814
  %v1972 = vpop.f32.mrb[0].mxu0
  %v1973 = vadd.f32 0.0, %v1972
  %v1974 = vpop.f32.mrb[0].mxu0
  %v1975 = vpop.f32.mrb[0].mxu0
  %v1976 = vadd.f32 0.0, %v1975
  %v1977 = vpop.f32.mrb[0].mxu0
  %1978 = vmatprep.mubr.bf16.mxu0 0
  %1979 = vmatmul.mubr.bf16.gmra.mrb[0].mxu0 %v1817
  %v1980 = vpop.f32.mrb[0].mxu0
  %v1981 = vadd.f32 0.0, %v1980
  %v1982 = vpop.f32.mrb[0].mxu0
  %v1983 = vpop.f32.mrb[0].mxu0
  %v1984 = vadd.f32 0.0, %v1983
  %v1985 = vpop.f32.mrb[0].mxu0
  %1986 = vmatprep.mubr.bf16.mxu0 0
  %1987 = vmatmul.mubr.bf16.gmra.mrb[0].mxu0 %v1820
  %v1988 = vpop.f32.mrb[0].mxu0
  %v1989 = vadd.f32 0.0, %v1988
  %v1990 = vpop.f32.mrb[0].mxu0
  %v1991 = vpop.f32.mrb[0].mxu0
  %v1992 = vadd.f32 0.0, %v1991
  %v1993 = vpop.f32.mrb[0].mxu0
  %1994 = vmatprep.mubr.bf16.mxu0 0
  %1995 = vmatmul.mubr.bf16.gmra.mrb[0].mxu0 %v1823
  %v1996 = vpop.f32.mrb[0].mxu0
  %v1997 = vadd.f32 0.0, %v1996
  %v1998 = vpop.f32.mrb[0].mxu0
  %v1999 = vpop.f32.mrb[0].mxu0
  %v2000 = vadd.f32 0.0, %v1999
  %v2001 = vpop.f32.mrb[0].mxu0
  %2002 = vmatprep.mubr.bf16.mxu0 0
  %2003 = vmatmul.mubr.bf16.gmra.mrb[0].mxu0 %v1826
  %v2004 = vpop.f32.mrb[0].mxu0
  %v2005 = vadd.f32 0.0, %v2004
  %v2006 = vpop.f32.mrb[0].mxu0
  %v2007 = vpop.f32.mrb[0].mxu0
  %v2008 = vadd.f32 0.0, %v2007
  %v2009 = vpop.f32.mrb[0].mxu0
  %2010 = vmatprep.mubr.bf16.mxu0 0
  %2011 = vmatmul.mubr.bf16.gmra.mrb[0].mxu0 %v1829
  %v2012 = vpop.f32.mrb[0].mxu0
  %v2013 = vadd.f32 0.0, %v2012
  %v2014 = vpop.f32.mrb[0].mxu0
  %v2015 = vpop.f32.mrb[0].mxu0
  %v2016 = vadd.f32 0.0, %v2015
  %v2017 = vpop.f32.mrb[0].mxu0
  %2018 = vmatprep.mubr.bf16.mxu0 0
  %2019 = vmatmul.mubr.bf16.gmra.mrb[0].mxu0 %v1832
  %v2020 = vpop.f32.mrb[0].mxu0
  %v2021 = vadd.f32 0.0, %v2020
  %v2022 = vpop.f32.mrb[0].mxu0
  %v2023 = vpop.f32.mrb[0].mxu0
  %v2024 = vadd.f32 0.0, %v2023
  %v2025 = vpop.f32.mrb[0].mxu0
  %2026 = vmatprep.mubr.bf16.mxu0 0
  %2027 = vmatmul.mubr.bf16.gmra.mrb[0].mxu0 %v1835
  %v2028 = vpop.f32.mrb[0].mxu0
  %v2029 = vadd.f32 0.0, %v2028
  %v2030 = vpop.f32.mrb[0].mxu0
  %v2031 = vpop.f32.mrb[0].mxu0
  %v2032 = vadd.f32 0.0, %v2031
  %v2033 = vpop.f32.mrb[0].mxu0
  %2034 = vmatprep.mubr.bf16.mxu0 0
  %2035 = vmatmul.mubr.bf16.gmra.mrb[0].mxu0 %v1838
  %v2036 = vpop.f32.mrb[0].mxu0
  %v2037 = vadd.f32 0.0, %v2036
  %v2038 = vpop.f32.mrb[0].mxu0
  %v2039 = vpop.f32.mrb[0].mxu0
  %v2040 = vadd.f32 0.0, %v2039
  %v2041 = vpop.f32.mrb[0].mxu0
  %2042 = vmatprep.mubr.bf16.mxu0 0
  %2043 = vmatmul.mubr.bf16.gmra.mrb[0].mxu0 %v1841
  %v2044 = vpop.f32.mrb[0].mxu0
  %v2045 = vadd.f32 0.0, %v2044
  %v2046 = vpop.f32.mrb[0].mxu0
  %v2047 = vpop.f32.mrb[0].mxu0
  %v2048 = vadd.f32 0.0, %v2047
  %v2049 = vpop.f32.mrb[0].mxu0
  %2050 = vmatprep.mubr.bf16.mxu0 0
  %2051 = vmatmul.mubr.bf16.gmra.mrb[0].mxu0 %v1844
  %v2052 = vpop.f32.mrb[0].mxu0
  %v2053 = vadd.f32 0.0, %v2052
  %v2054 = vpop.f32.mrb[0].mxu0
  %v2055 = vpop.f32.mrb[0].mxu0
  %v2056 = vadd.f32 0.0, %v2055
  %v2057 = vpop.f32.mrb[0].mxu0
  %2058 = vmatprep.mubr.bf16.mxu0 0
  %2059 = vmatmul.mubr.bf16.gmra.mrb[0].mxu0 %v1847
  %v2060 = vpop.f32.mrb[0].mxu0
  %v2061 = vadd.f32 0.0, %v2060
  %v2062 = vpop.f32.mrb[0].mxu0
  %v2063 = vpop.f32.mrb[0].mxu0
  %v2064 = vadd.f32 0.0, %v2063
  %v2065 = vpop.f32.mrb[0].mxu0
  %2066 = vmatprep.mubr.bf16.mxu0 0
  %2067 = vmatmul.mubr.bf16.gmra.mrb[0].mxu0 %v1850
  %v2068 = vpop.f32.mrb[0].mxu0
  %v2069 = vadd.f32 0.0, %v2068
  %v2070 = vpop.f32.mrb[0].mxu0
  %v2071 = vpop.f32.mrb[0].mxu0
  %v2072 = vadd.f32 0.0, %v2071
  %v2073 = vpop.f32.mrb[0].mxu0
  %2074 = vmatprep.mubr.bf16.mxu0 0
  %2075 = vmatmul.mubr.bf16.gmra.mrb[0].mxu0 %v1853
  %v2076 = vpop.f32.mrb[0].mxu0
  %v2077 = vadd.f32 0.0, %v2076
  %v2078 = vpop.f32.mrb[0].mxu0
  %v2079 = vpop.f32.mrb[0].mxu0
  %v2080 = vadd.f32 0.0, %v2079
  %v2081 = vpop.f32.mrb[0].mxu0
  %2082 = vmatprep.mubr.bf16.mxu0 0
  %2083 = vmatmul.mubr.bf16.gmra.mrb[0].mxu0 %v1856
  %v2084 = vpop.f32.mrb[0].mxu0
  %v2085 = vadd.f32 0.0, %v2084
  %v2086 = vpop.f32.mrb[0].mxu0
  %v2087 = vpop.f32.mrb[0].mxu0
  %v2088 = vadd.f32 0.0, %v2087
  %v2089 = vpop.f32.mrb[0].mxu0
  %2090 = vdwg.mxu0
  %v2091 = vmax.f32 %v1557, %v1893
  %v2092 = vmax.f32 %v1558, %v1896
  %v2093 = vmax.f32 %v1559, %v1901
  %v2094 = vmax.f32 %v1560, %v1904
  %v2095 = vmax.f32 %v1561, %v1909
  %v2096 = vmax.f32 %v1562, %v1912
  %v2097 = vmax.f32 %v1563, %v1917
  %v2098 = vmax.f32 %v1564, %v1920
  %v2099 = vmax.f32 %v1565, %v1925
  %v2100 = vmax.f32 %v1566, %v1928
  %v2101 = vmax.f32 %v1567, %v1933
  %v2102 = vmax.f32 %v1568, %v1936
  %v2103 = vmax.f32 %v1569, %v1941
  %v2104 = vmax.f32 %v1570, %v1944
  %v2105 = vmax.f32 %v1571, %v1949
  %v2106 = vmax.f32 %v1572, %v1952
  %v2107 = vmax.f32 %v1573, %v1957
  %v2108 = vmax.f32 %v1574, %v1960
  %v2109 = vmax.f32 %v1575, %v1965
  %v2110 = vmax.f32 %v1576, %v1968
  %v2111 = vmax.f32 %v1577, %v1973
  %v2112 = vmax.f32 %v1578, %v1976
  %v2113 = vmax.f32 %v1579, %v1981
  %v2114 = vmax.f32 %v1580, %v1984
  %v2115 = vmax.f32 %v1581, %v1989
  %v2116 = vmax.f32 %v1582, %v1992
  %v2117 = vmax.f32 %v1583, %v1997
  %v2118 = vmax.f32 %v1584, %v2000
  %v2119 = vmax.f32 %v1585, %v2005
  %v2120 = vmax.f32 %v1586, %v2008
  %v2121 = vmax.f32 %v1587, %v2013
  %v2122 = vmax.f32 %v1588, %v2016
  %v2123 = vmax.f32 %v1589, %v2021
  %v2124 = vmax.f32 %v1590, %v2024
  %v2125 = vmax.f32 %v1591, %v2029
  %v2126 = vmax.f32 %v1592, %v2032
  %v2127 = vmax.f32 %v1593, %v2037
  %v2128 = vmax.f32 %v1594, %v2040
  %v2129 = vmax.f32 %v1595, %v2045
  %v2130 = vmax.f32 %v1596, %v2048
  %v2131 = vmax.f32 %v1597, %v2053
  %v2132 = vmax.f32 %v1598, %v2056
  %v2133 = vmax.f32 %v1599, %v2061
  %v2134 = vmax.f32 %v1600, %v2064
  %v2135 = vmax.f32 %v1601, %v2069
  %v2136 = vmax.f32 %v1602, %v2072
  %v2137 = vmax.f32 %v1603, %v2077
  %v2138 = vmax.f32 %v1604, %v2080
  %v2139 = vmax.f32 %v1605, %v2085
  %v2140 = vmax.f32 %v1606, %v2088
  %v2141 = vld [vmem:[%s2] sm:$0x1]
  %v2143 = vlaneseq
  %v2144 = vshrl.u32 %v2143, 7
  %v2145 = vsub.s32 0, %v2144
  %v2146 = vrot.slane %v2141, %v2145
  %v2148 = vadd.f32 %v2091, %v2146
  %v2149 = vadd.f32 %v2092, %v2146
  %v2150 = vadd.f32 %v2093, %v2146
  %v2151 = vadd.f32 %v2094, %v2146
  %v2152 = vadd.f32 %v2095, %v2146
  %v2153 = vadd.f32 %v2096, %v2146
  %v2154 = vadd.f32 %v2097, %v2146
  %v2155 = vadd.f32 %v2098, %v2146
  %v2156 = vadd.f32 %v2099, %v2146
  %v2157 = vadd.f32 %v2100, %v2146
  %v2158 = vadd.f32 %v2101, %v2146
  %v2159 = vadd.f32 %v2102, %v2146
  %v2160 = vadd.f32 %v2103, %v2146
  %v2161 = vadd.f32 %v2104, %v2146
  %v2162 = vadd.f32 %v2105, %v2146
  %v2163 = vadd.f32 %v2106, %v2146
  %v2164 = vadd.f32 %v2107, %v2146
  %v2165 = vadd.f32 %v2108, %v2146
  %v2166 = vadd.f32 %v2109, %v2146
  %v2167 = vadd.f32 %v2110, %v2146
  %v2168 = vadd.f32 %v2111, %v2146
  %v2169 = vadd.f32 %v2112, %v2146
  %v2170 = vadd.f32 %v2113, %v2146
  %v2171 = vadd.f32 %v2114, %v2146
  %v2172 = vadd.f32 %v2115, %v2146
  %v2173 = vadd.f32 %v2116, %v2146
  %v2174 = vadd.f32 %v2117, %v2146
  %v2175 = vadd.f32 %v2118, %v2146
  %v2176 = vadd.f32 %v2119, %v2146
  %v2177 = vadd.f32 %v2120, %v2146
  %v2178 = vadd.f32 %v2121, %v2146
  %v2179 = vadd.f32 %v2122, %v2146
  %v2180 = vadd.f32 %v2123, %v2146
  %v2181 = vadd.f32 %v2124, %v2146
  %v2182 = vadd.f32 %v2125, %v2146
  %v2183 = vadd.f32 %v2126, %v2146
  %v2184 = vadd.f32 %v2127, %v2146
  %v2185 = vadd.f32 %v2128, %v2146
  %v2186 = vadd.f32 %v2129, %v2146
  %v2187 = vadd.f32 %v2130, %v2146
  %v2188 = vadd.f32 %v2131, %v2146
  %v2189 = vadd.f32 %v2132, %v2146
  %v2190 = vadd.f32 %v2133, %v2146
  %v2191 = vadd.f32 %v2134, %v2146
  %v2192 = vadd.f32 %v2135, %v2146
  %v2193 = vadd.f32 %v2136, %v2146
  %v2194 = vadd.f32 %v2137, %v2146
  %v2195 = vadd.f32 %v2138, %v2146
  %v2196 = vadd.f32 %v2139, %v2146
  %v2197 = vadd.f32 %v2140, %v2146
  %v2198 = vmax.f32 %v2148, 0.0
  %v2199 = vmax.f32 %v2149, 0.0
  %v2200 = vmax.f32 %v2150, 0.0
  %v2201 = vmax.f32 %v2151, 0.0
  %v2202 = vmax.f32 %v2152, 0.0
  %v2203 = vmax.f32 %v2153, 0.0
  %v2204 = vmax.f32 %v2154, 0.0
  %v2205 = vmax.f32 %v2155, 0.0
  %v2206 = vmax.f32 %v2156, 0.0
  %v2207 = vmax.f32 %v2157, 0.0
  %v2208 = vmax.f32 %v2158, 0.0
  %v2209 = vmax.f32 %v2159, 0.0
  %v2210 = vmax.f32 %v2160, 0.0
  %v2211 = vmax.f32 %v2161, 0.0
  %v2212 = vmax.f32 %v2162, 0.0
  %v2213 = vmax.f32 %v2163, 0.0
  %v2214 = vmax.f32 %v2164, 0.0
  %v2215 = vmax.f32 %v2165, 0.0
  %v2216 = vmax.f32 %v2166, 0.0
  %v2217 = vmax.f32 %v2167, 0.0
  %v2218 = vmax.f32 %v2168, 0.0
  %v2219 = vmax.f32 %v2169, 0.0
  %v2220 = vmax.f32 %v2170, 0.0
  %v2221 = vmax.f32 %v2171, 0.0
  %v2222 = vmax.f32 %v2172, 0.0
  %v2223 = vmax.f32 %v2173, 0.0
  %v2224 = vmax.f32 %v2174, 0.0
  %v2225 = vmax.f32 %v2175, 0.0
  %v2226 = vmax.f32 %v2176, 0.0
  %v2227 = vmax.f32 %v2177, 0.0
  %v2228 = vmax.f32 %v2178, 0.0
  %v2229 = vmax.f32 %v2179, 0.0
  %v2230 = vmax.f32 %v2180, 0.0
  %v2231 = vmax.f32 %v2181, 0.0
  %v2232 = vmax.f32 %v2182, 0.0
  %v2233 = vmax.f32 %v2183, 0.0
  %v2234 = vmax.f32 %v2184, 0.0
  %v2235 = vmax.f32 %v2185, 0.0
  %v2236 = vmax.f32 %v2186, 0.0
  %v2237 = vmax.f32 %v2187, 0.0
  %v2238 = vmax.f32 %v2188, 0.0
  %v2239 = vmax.f32 %v2189, 0.0
  %v2240 = vmax.f32 %v2190, 0.0
  %v2241 = vmax.f32 %v2191, 0.0
  %v2242 = vmax.f32 %v2192, 0.0
  %v2243 = vmax.f32 %v2193, 0.0
  %v2244 = vmax.f32 %v2194, 0.0
  %v2245 = vmax.f32 %v2195, 0.0
  %v2246 = vmax.f32 %v2196, 0.0
  %v2247 = vmax.f32 %v2197, 0.0
  %v2248 = vpack.c.bf16 %v2199, %v2198
  %v2249 = vpack.c.bf16 %v2201, %v2200
  %v2250 = vpack.c.bf16 %v2203, %v2202
  %v2251 = vpack.c.bf16 %v2205, %v2204
  %v2252 = vpack.c.bf16 %v2207, %v2206
  %v2253 = vpack.c.bf16 %v2209, %v2208
  %v2254 = vpack.c.bf16 %v2211, %v2210
  %v2255 = vpack.c.bf16 %v2213, %v2212
  %v2256 = vpack.c.bf16 %v2215, %v2214
  %v2257 = vpack.c.bf16 %v2217, %v2216
  %v2258 = vpack.c.bf16 %v2219, %v2218
  %v2259 = vpack.c.bf16 %v2221, %v2220
  %v2260 = vpack.c.bf16 %v2223, %v2222
  %v2261 = vpack.c.bf16 %v2225, %v2224
  %v2262 = vpack.c.bf16 %v2227, %v2226
  %v2263 = vpack.c.bf16 %v2229, %v2228
  %v2264 = vpack.c.bf16 %v2231, %v2230
  %v2265 = vpack.c.bf16 %v2233, %v2232
  %v2266 = vpack.c.bf16 %v2235, %v2234
  %v2267 = vpack.c.bf16 %v2237, %v2236
  %v2268 = vpack.c.bf16 %v2239, %v2238
  %v2269 = vpack.c.bf16 %v2241, %v2240
  %v2270 = vpack.c.bf16 %v2243, %v2242
  %v2271 = vpack.c.bf16 %v2245, %v2244
  %v2272 = vpack.c.bf16 %v2247, %v2246
  %v2298 = vunpack.c.l.b16 %v2248
  %v2299 = vunpack.c.h.b16 %v2248
  %v2300 = vunpack.c.l.b16 %v2249
  %v2301 = vunpack.c.h.b16 %v2249
  %v2302 = vunpack.c.l.b16 %v2250
  %v2303 = vunpack.c.h.b16 %v2250
  %v2304 = vunpack.c.l.b16 %v2251
  %v2305 = vunpack.c.h.b16 %v2251
  %v2306 = vunpack.c.l.b16 %v2252
  %v2307 = vunpack.c.h.b16 %v2252
  %v2308 = vunpack.c.l.b16 %v2253
  %v2309 = vunpack.c.h.b16 %v2253
  %v2310 = vunpack.c.l.b16 %v2254
  %v2311 = vunpack.c.h.b16 %v2254
  %v2312 = vunpack.c.l.b16 %v2255
  %v2313 = vunpack.c.h.b16 %v2255
  %v2314 = vunpack.c.l.b16 %v2256
  %v2315 = vunpack.c.h.b16 %v2256
  %v2316 = vunpack.c.l.b16 %v2257
  %v2317 = vunpack.c.h.b16 %v2257
  %v2318 = vunpack.c.l.b16 %v2258
  %v2319 = vunpack.c.h.b16 %v2258
  %v2320 = vunpack.c.l.b16 %v2259
  %v2321 = vunpack.c.h.b16 %v2259
  %v2322 = vunpack.c.l.b16 %v2260
  %v2323 = vunpack.c.h.b16 %v2260
  %v2324 = vunpack.c.l.b16 %v2261
  %v2325 = vunpack.c.h.b16 %v2261
  %v2326 = vunpack.c.l.b16 %v2262
  %v2327 = vunpack.c.h.b16 %v2262
  %v2328 = vunpack.c.l.b16 %v2263
  %v2329 = vunpack.c.h.b16 %v2263
  %v2330 = vunpack.c.l.b16 %v2264
  %v2331 = vunpack.c.h.b16 %v2264
  %v2332 = vunpack.c.l.b16 %v2265
  %v2333 = vunpack.c.h.b16 %v2265
  %v2334 = vunpack.c.l.b16 %v2266
  %v2335 = vunpack.c.h.b16 %v2266
  %v2336 = vunpack.c.l.b16 %v2267
  %v2337 = vunpack.c.h.b16 %v2267
  %v2338 = vunpack.c.l.b16 %v2268
  %v2339 = vunpack.c.h.b16 %v2268
  %v2340 = vunpack.c.l.b16 %v2269
  %v2341 = vunpack.c.h.b16 %v2269
  %v2342 = vunpack.c.l.b16 %v2270
  %v2343 = vunpack.c.h.b16 %v2270
  %v2344 = vunpack.c.l.b16 %v2271
  %v2345 = vunpack.c.h.b16 %v2271
  %v2346 = vunpack.c.l.b16 %v2272
  %v2347 = vunpack.c.h.b16 %v2272
  %v2348 = vpack.c.b16 %v2298, %v2298
  %v2349 = vpack.c.b16 %v2299, %v2299
  %v2350 = vpack.c.b16 %v2300, %v2300
  %v2351 = vpack.c.b16 %v2301, %v2301
  %v2352 = vpack.c.b16 %v2302, %v2302
  %v2353 = vpack.c.b16 %v2303, %v2303
  %v2354 = vpack.c.b16 %v2304, %v2304
  %v2355 = vpack.c.b16 %v2305, %v2305
  %v2356 = vpack.c.b16 %v2306, %v2306
  %v2357 = vpack.c.b16 %v2307, %v2307
  %v2358 = vpack.c.b16 %v2308, %v2308
  %v2359 = vpack.c.b16 %v2309, %v2309
  %v2360 = vpack.c.b16 %v2310, %v2310
  %v2361 = vpack.c.b16 %v2311, %v2311
  %v2362 = vpack.c.b16 %v2312, %v2312
  %v2363 = vpack.c.b16 %v2313, %v2313
  %v2364 = vpack.c.b16 %v2314, %v2314
  %v2365 = vpack.c.b16 %v2315, %v2315
  %v2366 = vpack.c.b16 %v2316, %v2316
  %v2367 = vpack.c.b16 %v2317, %v2317
  %v2368 = vpack.c.b16 %v2318, %v2318
  %v2369 = vpack.c.b16 %v2319, %v2319
  %v2370 = vpack.c.b16 %v2320, %v2320
  %v2371 = vpack.c.b16 %v2321, %v2321
  %v2372 = vpack.c.b16 %v2322, %v2322
  %v2373 = vpack.c.b16 %v2323, %v2323
  %v2374 = vpack.c.b16 %v2324, %v2324
  %v2375 = vpack.c.b16 %v2325, %v2325
  %v2376 = vpack.c.b16 %v2326, %v2326
  %v2377 = vpack.c.b16 %v2327, %v2327
  %v2378 = vpack.c.b16 %v2328, %v2328
  %v2379 = vpack.c.b16 %v2329, %v2329
  %v2380 = vpack.c.b16 %v2330, %v2330
  %v2381 = vpack.c.b16 %v2331, %v2331
  %v2382 = vpack.c.b16 %v2332, %v2332
  %v2383 = vpack.c.b16 %v2333, %v2333
  %v2384 = vpack.c.b16 %v2334, %v2334
  %v2385 = vpack.c.b16 %v2335, %v2335
  %v2386 = vpack.c.b16 %v2336, %v2336
  %v2387 = vpack.c.b16 %v2337, %v2337
  %v2388 = vpack.c.b16 %v2338, %v2338
  %v2389 = vpack.c.b16 %v2339, %v2339
  %v2390 = vpack.c.b16 %v2340, %v2340
  %v2391 = vpack.c.b16 %v2341, %v2341
  %v2392 = vpack.c.b16 %v2342, %v2342
  %v2393 = vpack.c.b16 %v2343, %v2343
  %v2394 = vpack.c.b16 %v2344, %v2344
  %v2395 = vpack.c.b16 %v2345, %v2345
  %v2396 = vpack.c.b16 %v2346, %v2346
  %v2397 = vpack.c.b16 %v2347, %v2347
  %vm2448 = vcmask 44032
  %2449 = vst.msk [vmem:[%s3] sm:$0xf] %vm2448, %v2348
  %2450 = vst.msk [vmem:[%s3 + $0x4] sm:$0xf] %vm2448, %v2349
  %2451 = vst.msk [vmem:[%s3 + $0x8] sm:$0xf] %vm2448, %v2350
  %2452 = vst.msk [vmem:[%s3 + $0xc] sm:$0xf] %vm2448, %v2351
  %2453 = vst.msk [vmem:[%s3 + $0x10] sm:$0xf] %vm2448, %v2352
  %2454 = vst.msk [vmem:[%s3 + $0x14] sm:$0xf] %vm2448, %v2353
  %2455 = vst.msk [vmem:[%s3 + $0x18] sm:$0xf] %vm2448, %v2354
  %2456 = vst.msk [vmem:[%s3 + $0x1c] sm:$0xf] %vm2448, %v2355
  %2457 = vst.msk [vmem:[%s3 + $0x20] sm:$0xf] %vm2448, %v2356
  %2458 = vst.msk [vmem:[%s3 + $0x24] sm:$0xf] %vm2448, %v2357
  %2459 = vst.msk [vmem:[%s3 + $0x28] sm:$0xf] %vm2448, %v2358
  %2460 = vst.msk [vmem:[%s3 + $0x2c] sm:$0xf] %vm2448, %v2359
  %2461 = vst.msk [vmem:[%s3 + $0x30] sm:$0xf] %vm2448, %v2360
  %2462 = vst.msk [vmem:[%s3 + $0x34] sm:$0xf] %vm2448, %v2361
  %2463 = vst.msk [vmem:[%s3 + $0x38] sm:$0xf] %vm2448, %v2362
  %2464 = vst.msk [vmem:[%s3 + $0x3c] sm:$0xf] %vm2448, %v2363
  %2465 = vst.msk [vmem:[%s3 + $0x40] sm:$0xf] %vm2448, %v2364
  %2466 = vst.msk [vmem:[%s3 + $0x44] sm:$0xf] %vm2448, %v2365
  %2467 = vst.msk [vmem:[%s3 + $0x48] sm:$0xf] %vm2448, %v2366
  %2468 = vst.msk [vmem:[%s3 + $0x4c] sm:$0xf] %vm2448, %v2367
  %2469 = vst.msk [vmem:[%s3 + $0x50] sm:$0xf] %vm2448, %v2368
  %2470 = vst.msk [vmem:[%s3 + $0x54] sm:$0xf] %vm2448, %v2369
  %2471 = vst.msk [vmem:[%s3 + $0x58] sm:$0xf] %vm2448, %v2370
  %2472 = vst.msk [vmem:[%s3 + $0x5c] sm:$0xf] %vm2448, %v2371
  %2473 = vst.msk [vmem:[%s3 + $0x60] sm:$0xf] %vm2448, %v2372
  %2474 = vst.msk [vmem:[%s3 + $0x64] sm:$0xf] %vm2448, %v2373
  %2475 = vst.msk [vmem:[%s3 + $0x68] sm:$0xf] %vm2448, %v2374
  %2476 = vst.msk [vmem:[%s3 + $0x6c] sm:$0xf] %vm2448, %v2375
  %2477 = vst.msk [vmem:[%s3 + $0x70] sm:$0xf] %vm2448, %v2376
  %2478 = vst.msk [vmem:[%s3 + $0x74] sm:$0xf] %vm2448, %v2377
  %2479 = vst.msk [vmem:[%s3 + $0x78] sm:$0xf] %vm2448, %v2378
  %2480 = vst.msk [vmem:[%s3 + $0x7c] sm:$0xf] %vm2448, %v2379
  %2481 = vst.msk [vmem:[%s3 + $0x80] sm:$0xf] %vm2448, %v2380
  %2482 = vst.msk [vmem:[%s3 + $0x84] sm:$0xf] %vm2448, %v2381
  %2483 = vst.msk [vmem:[%s3 + $0x88] sm:$0xf] %vm2448, %v2382
  %2484 = vst.msk [vmem:[%s3 + $0x8c] sm:$0xf] %vm2448, %v2383
  %2485 = vst.msk [vmem:[%s3 + $0x90] sm:$0xf] %vm2448, %v2384
  %2486 = vst.msk [vmem:[%s3 + $0x94] sm:$0xf] %vm2448, %v2385
  %2487 = vst.msk [vmem:[%s3 + $0x98] sm:$0xf] %vm2448, %v2386
  %2488 = vst.msk [vmem:[%s3 + $0x9c] sm:$0xf] %vm2448, %v2387
  %2489 = vst.msk [vmem:[%s3 + $0xa0] sm:$0xf] %vm2448, %v2388
  %2490 = vst.msk [vmem:[%s3 + $0xa4] sm:$0xf] %vm2448, %v2389
  %2491 = vst.msk [vmem:[%s3 + $0xa8] sm:$0xf] %vm2448, %v2390
  %2492 = vst.msk [vmem:[%s3 + $0xac] sm:$0xf] %vm2448, %v2391
  %2493 = vst.msk [vmem:[%s3 + $0xb0] sm:$0xf] %vm2448, %v2392
  %2494 = vst.msk [vmem:[%s3 + $0xb4] sm:$0xf] %vm2448, %v2393
  %2495 = vst.msk [vmem:[%s3 + $0xb8] sm:$0xf] %vm2448, %v2394
  %2496 = vst.msk [vmem:[%s3 + $0xbc] sm:$0xf] %vm2448, %v2395
  %2497 = vst.msk [vmem:[%s3 + $0xc0] sm:$0xf] %vm2448, %v2396
  %2498 = vst.msk [vmem:[%s3 + $0xc4] sm:$0xf] %vm2448, %v2397
  // Predicated region
  $region14: #{lenet_forward.2} parent=0 // pred_check
    _
  $region15: #{lenet_forward.2} parent=0 // pred_check_branch
    %2500 = sbr.rel (0) target = $region17
  $region16: #{lenet_forward.2} parent=0 // pred_region
    _
  $region17: #{lenet_forward.2} parent=0 // pred_fallthru
    _
  // Predicated region
  $region18: #{lenet_forward.2} parent=0 // pred_check
    _
  $region19: #{lenet_forward.2} parent=0 // pred_check_branch
    %2502 = sbr.rel (0) target = $region21
  $region20: #{lenet_forward.2} parent=0 // pred_region
    _
  $region21: #{lenet_forward.2} parent=0 // pred_fallthru
    _

// kernel: lenet_forward.3
$region0: #{lenet_forward.3}
  #allocation0 [shape = 'u32[]', space=smem, size = 0x4, offset = 0x4, fixed_abs, tag = 'smem constant byte address 0x4 - core index']
  #allocation1 [shape = 'u32[144,128]{1,0:T(1,128)}', space=vmem, size = 0x12000, scoped, tag = 'internal scratch']
  %s0 = inlined_call_operand.vmem [shape: bf16[4,50,160], index: 0, kind: input, shape index: {}]
  %s1 = inlined_call_operand.vmem [shape: bf16[160,16], index: 1, kind: input, shape index: {}]
  %s2 = inlined_call_operand.vmem [shape: f32[1,16], index: 2, kind: input, shape index: {}]
  %s3 = inlined_call_operand.vmem [shape: bf16[400,128], index: 3, kind: input, shape index: {}]
  %s4 = inlined_call_operand.vmem [shape: f32[1,128], index: 4, kind: input, shape index: {}]
  %s5 = inlined_call_operand.vmem [shape: bf16[128,128], index: 5, kind: input, shape index: {}]
  %s6 = inlined_call_operand.vmem [shape: f32[1,128], index: 6, kind: input, shape index: {}]
  %s7 = inlined_call_operand.vmem [shape: bf16[128,10], index: 7, kind: input, shape index: {}]
  %s8 = inlined_call_operand.vmem [shape: f32[1,10], index: 8, kind: input, shape index: {}]
  %s9 = inlined_call_operand.hbm [shape: f32[2,10], index: 9, kind: output, shape index: {}]
  %s10 = sld [smem:[#allocation0]]
  $region46: #{lenet_forward.3} parent=0
    _
  %s12 = ssub.s32 1, %s10
  %s13 = scalar_select 0, %s12, %s10
  $region1: #{lenet_forward.3} parent=0
    #allocation2 [shape = 'u8[1024]{0}', space=vmem, size = 0x400, scoped, tag = 'output window, operand 0, single buffered']
    #allocation3 [shape = 's32[1]{0}', space=sflag, size = 0x4, scoped, tag = 'scoped memory for lenet_forward.3']
    %14 = vsyncpa [#allocation3], 0
    // Predicated region
    $region2: #{lenet_forward.3} parent=1 // pred_check
      _
    $region3: #{lenet_forward.3} parent=1 // pred_check_branch
      %16 = sbr.rel (0) target = $region5
    $region4: #{lenet_forward.3} parent=1 // pred_region
      _
    $region5: #{lenet_forward.3} parent=1 // pred_fallthru
      _
    // Predicated region
    $region6: #{lenet_forward.3} parent=1 // pred_check
      _
    $region7: #{lenet_forward.3} parent=1 // pred_check_branch
      %18 = sbr.rel (0) target = $region9
    $region8: #{lenet_forward.3} parent=1 // pred_region
      _
    $region9: #{lenet_forward.3} parent=1 // pred_fallthru
      _
    // Predicated region
    $region10: #{lenet_forward.3} parent=1 // pred_check
      _
    $region11: #{lenet_forward.3} parent=1 // pred_check_branch
      %20 = sbr.rel (0) target = $region13
    $region12: #{lenet_forward.3} parent=1 // pred_region
      _
    $region13: #{lenet_forward.3} parent=1 // pred_fallthru
      _
    // Predicated region
    $region14: #{lenet_forward.3} parent=1 // pred_check
      _
    $region15: #{lenet_forward.3} parent=1 // pred_check_branch
      %22 = sbr.rel (0) target = $region17
    $region16: #{lenet_forward.3} parent=1 // pred_region
      _
    $region17: #{lenet_forward.3} parent=1 // pred_fallthru
      _
    // Predicated region
    $region18: #{lenet_forward.3} parent=1 // pred_check
      _
    $region19: #{lenet_forward.3} parent=1 // pred_check_branch
      %24 = sbr.rel (0) target = $region21
    $region20: #{lenet_forward.3} parent=1 // pred_region
      _
    $region21: #{lenet_forward.3} parent=1 // pred_fallthru
      _
    // Predicated region
    $region22: #{lenet_forward.3} parent=1 // pred_check
      _
    $region23: #{lenet_forward.3} parent=1 // pred_check_branch
      %26 = sbr.rel (0) target = $region25
    $region24: #{lenet_forward.3} parent=1 // pred_region
      _
    $region25: #{lenet_forward.3} parent=1 // pred_fallthru
      _
    // Predicated region
    $region26: #{lenet_forward.3} parent=1 // pred_check
      _
    $region27: #{lenet_forward.3} parent=1 // pred_check_branch
      %28 = sbr.rel (0) target = $region29
    $region28: #{lenet_forward.3} parent=1 // pred_region
      _
    $region29: #{lenet_forward.3} parent=1 // pred_fallthru
      _
    // Predicated region
    $region30: #{lenet_forward.3} parent=1 // pred_check
      _
    $region31: #{lenet_forward.3} parent=1 // pred_check_branch
      %30 = sbr.rel (0) target = $region33
    $region32: #{lenet_forward.3} parent=1 // pred_region
      _
    $region33: #{lenet_forward.3} parent=1 // pred_fallthru
      _
    // Predicated region
    $region34: #{lenet_forward.3} parent=1 // pred_check
      _
    $region35: #{lenet_forward.3} parent=1 // pred_check_branch
      %32 = sbr.rel (0) target = $region37
    $region36: #{lenet_forward.3} parent=1 // pred_region
      _
    $region37: #{lenet_forward.3} parent=1 // pred_fallthru
      _
    %v34 = vld [vmem:[%s1] sm:$0xf]
    %v35 = vld [vmem:[%s1 + $0x4] sm:$0xf]
    %v36 = vld [vmem:[%s1 + $0x8] sm:$0xf]
    %v37 = vld [vmem:[%s1 + $0xc] sm:$0xf]
    %v38 = vld [vmem:[%s1 + $0x10] sm:$0xf]
    %v39 = vld [vmem:[%s1 + $0x14] sm:$0xf]
    %v40 = vld [vmem:[%s1 + $0x18] sm:$0xf]
    %v41 = vld [vmem:[%s1 + $0x1c] sm:$0xf]
    %v42 = vld [vmem:[%s1 + $0x20] sm:$0xf]
    %v43 = vld [vmem:[%s1 + $0x24] sm:$0xf]
    %v44 = vld [vmem:[%s1 + $0x28] sm:$0xf]
    %v45 = vld [vmem:[%s1 + $0x2c] sm:$0xf]
    %v46 = vld [vmem:[%s1 + $0x30] sm:$0xf]
    %v47 = vld [vmem:[%s1 + $0x34] sm:$0xf]
    %v48 = vld [vmem:[%s1 + $0x38] sm:$0xf]
    %v49 = vld [vmem:[%s1 + $0x3c] sm:$0xf]
    %v50 = vld [vmem:[%s1 + $0x40] sm:$0xf]
    %v51 = vld [vmem:[%s1 + $0x44] sm:$0xf]
    %v52 = vld [vmem:[%s1 + $0x48] sm:$0xf]
    %v53 = vld [vmem:[%s1 + $0x4c] sm:$0xf]
    %v54 = vld [vmem:[%s0] sm:$0xff]
    %v55 = vld [vmem:[%s0 + $0x8] sm:$0xff]
    %v56 = vld [vmem:[%s0 + $0x10] sm:$0xff]
    %v57 = vld [vmem:[%s0 + $0x18] sm:$0xff]
    %v58 = vld [vmem:[%s0 + $0x20] sm:$0xff]
    %v59 = vld [vmem:[%s0 + $0x28] sm:$0xff]
    %v60 = vld [vmem:[%s0 + $0x30] sm:$0x11]
    %v68 = vunpack.c.l.b16 %v54
    %v69 = vunpack.c.h.b16 %v54
    %v70 = vunpack.c.l.b16 %v55
    %v71 = vunpack.c.h.b16 %v55
    %v72 = vunpack.c.l.b16 %v56
    %v73 = vunpack.c.h.b16 %v56
    %v74 = vunpack.c.l.b16 %v57
    %v75 = vunpack.c.h.b16 %v57
    %v76 = vunpack.c.l.b16 %v58
    %v77 = vunpack.c.h.b16 %v58
    %v78 = vunpack.c.l.b16 %v59
    %v79 = vunpack.c.h.b16 %v59
    %v80 = vunpack.c.l.b16 %v60
    %v81 = vunpack.c.h.b16 %v60
    %v82 = vpack.c.b16 %v70, %v68
    %v83 = vpack.c.b16 %v71, %v69
    %v84 = vpack.c.b16 %v74, %v72
    %v85 = vpack.c.b16 %v75, %v73
    %v86 = vpack.c.b16 %v78, %v76
    %v87 = vpack.c.b16 %v79, %v77
    %v88 = vpack.c.b16 %v80, %v80
    %v89 = vpack.c.b16 %v81, %v81
    %v114 = vunpack.c.l.b16 %v34
    %v115 = vunpack.c.l.b16 %v35
    %v116 = vunpack.c.l.b16 %v36
    %v117 = vunpack.c.l.b16 %v37
    %v118 = vunpack.c.l.b16 %v38
    %v119 = vunpack.c.l.b16 %v39
    %v120 = vunpack.c.l.b16 %v40
    %v121 = vunpack.c.l.b16 %v41
    %v122 = vunpack.c.l.b16 %v42
    %v123 = vunpack.c.l.b16 %v43
    %v124 = vunpack.c.l.b16 %v44
    %v125 = vunpack.c.l.b16 %v45
    %v126 = vunpack.c.l.b16 %v46
    %v127 = vunpack.c.l.b16 %v47
    %v128 = vunpack.c.l.b16 %v48
    %v129 = vunpack.c.l.b16 %v49
    %v130 = vunpack.c.l.b16 %v50
    %v131 = vunpack.c.l.b16 %v51
    %v132 = vunpack.c.l.b16 %v52
    %v133 = vunpack.c.l.b16 %v53
    %v134 = vpack.c.b16 %v115, %v114
    %v135 = vpack.c.b16 %v117, %v116
    %v136 = vpack.c.b16 %v119, %v118
    %v137 = vpack.c.b16 %v121, %v120
    %v138 = vpack.c.b16 %v123, %v122
    %v139 = vpack.c.b16 %v125, %v124
    %v140 = vpack.c.b16 %v127, %v126
    %v141 = vpack.c.b16 %v129, %v128
    %v142 = vpack.c.b16 %v131, %v130
    %v143 = vpack.c.b16 %v133, %v132
    %vm154 = vcmask 261120
    %v156 = vsel %vm154, %v83, 0
    %v159 = vsel %vm154, %v85, 0
    %v162 = vsel %vm154, %v87, 0
    %v165 = vsel %vm154, %v89, 0
    %167 = vmatprep.subr.bf16.mxu0 0
    %168 = vmatpush1.bf16.msra.mxu0 %v134
    %169 = vmatprep.subr.bf16.mxu0 0
    %170 = vmatpush1.bf16.msra.mxu0 %v135
    %171 = vmatprep.subr.bf16.mxu0 0
    %172 = vmatpush1.bf16.msra.mxu0 %v136
    %173 = vmatprep.subr.bf16.mxu0 0
    %174 = vmatpush1.bf16.msra.mxu0 %v137
    %175 = vmatprep.subr.bf16.mxu0 0
    %176 = vmatpush1.bf16.msra.mxu0 %v138
    %177 = vmatprep.subr.bf16.mxu0 0
    %178 = vmatpush1.bf16.msra.mxu0 %v139
    %179 = vmatprep.subr.bf16.mxu0 0
    %180 = vmatpush1.bf16.msra.mxu0 %v140
    %181 = vmatprep.subr.bf16.mxu0 0
    %182 = vmatpush1.bf16.msra.mxu0 %v141
    %183 = vmatprep.subr.bf16.mxu0 0
    %184 = vmatpush1.bf16.msra.mxu0 %v142
    %185 = vmatprep.subr.bf16.mxu0 0
    %186 = vmatpush1.bf16.msra.mxu0 %v143
    %187 = vmatprep.subr.bf16.mxu0 0
    %188 = vmatpush1.bf16.msra.mxu0 0
    %189 = vmatprep.subr.bf16.mxu0 0
    %190 = vmatpush1.bf16.msra.mxu0 0
    %191 = vmatprep.subr.bf16.mxu0 0
    %192 = vmatpush1.bf16.msra.mxu0 0
    %193 = vmatprep.subr.bf16.mxu0 0
    %194 = vmatpush1.bf16.msra.mxu0 0
    %195 = vmatprep.subr.bf16.mxu0 0
    %196 = vmatpush1.bf16.msra.mxu0 0
    %197 = vmatprep.subr.bf16.mxu0 0
    %198 = vmatpush1.bf16.msra.mxu0 0
    %199 = vmatprep.mubr.bf16.mxu0 %v156
    %200 = vmatmul.mubr.bf16.gmra.mrb[0].mxu0 %v82
    %v201 = vpop.f32.mrb[0].mxu0
    %v202 = vadd.f32 0.0, %v201
    %v203 = vpop.f32.mrb[0].mxu0
    %v204 = vpop.f32.mrb[0].mxu0
    %v205 = vadd.f32 0.0, %v204
    %v206 = vpop.f32.mrb[0].mxu0
    %207 = vmatprep.mubr.bf16.mxu0 %v159
    %208 = vmatmul.mubr.bf16.gmra.mrb[0].mxu0 %v84
    %v209 = vpop.f32.mrb[0].mxu0
    %v210 = vadd.f32 0.0, %v209
    %v211 = vpop.f32.mrb[0].mxu0
    %v212 = vpop.f32.mrb[0].mxu0
    %v213 = vadd.f32 0.0, %v212
    %v214 = vpop.f32.mrb[0].mxu0
    %215 = vmatprep.mubr.bf16.mxu0 %v162
    %216 = vmatmul.mubr.bf16.gmra.mrb[0].mxu0 %v86
    %v217 = vpop.f32.mrb[0].mxu0
    %v218 = vadd.f32 0.0, %v217
    %v219 = vpop.f32.mrb[0].mxu0
    %v220 = vpop.f32.mrb[0].mxu0
    %v221 = vadd.f32 0.0, %v220
    %v222 = vpop.f32.mrb[0].mxu0
    %223 = vmatprep.mubr.bf16.mxu0 %v165
    %224 = vmatmul.mubr.bf16.gmra.mrb[0].mxu0 %v88
    %v225 = vpop.f32.mrb[0].mxu0
    %v226 = vadd.f32 0.0, %v225
    %v227 = vpop.f32.mrb[0].mxu0
    %v228 = vpop.f32.mrb[0].mxu0
    %v229 = vpop.f32.mrb[0].mxu0
    %230 = vdwg.mxu0
    %s231 = scalar_lea.vmem %s0, 56
    %v232 = vld [vmem:[%s231] sm:$0xff]
    %v233 = vld [vmem:[%s231 + $0x8] sm:$0xff]
    %v234 = vld [vmem:[%s231 + $0x10] sm:$0xff]
    %v235 = vld [vmem:[%s231 + $0x18] sm:$0xff]
    %v236 = vld [vmem:[%s231 + $0x20] sm:$0xff]
    %v237 = vld [vmem:[%s231 + $0x28] sm:$0xff]
    %v238 = vld [vmem:[%s231 + $0x30] sm:$0x11]
    %v246 = vunpack.c.l.b16 %v232
    %v247 = vunpack.c.h.b16 %v232
    %v248 = vunpack.c.l.b16 %v233
    %v249 = vunpack.c.h.b16 %v233
    %v250 = vunpack.c.l.b16 %v234
    %v251 = vunpack.c.h.b16 %v234
    %v252 = vunpack.c.l.b16 %v235
    %v253 = vunpack.c.h.b16 %v235
    %v254 = vunpack.c.l.b16 %v236
    %v255 = vunpack.c.h.b16 %v236
    %v256 = vunpack.c.l.b16 %v237
    %v257 = vunpack.c.h.b16 %v237
    %v258 = vunpack.c.l.b16 %v238
    %v259 = vunpack.c.h.b16 %v238
    %v260 = vpack.c.b16 %v248, %v246
    %v261 = vpack.c.b16 %v249, %v247
    %v262 = vpack.c.b16 %v252, %v250
    %v263 = vpack.c.b16 %v253, %v251
    %v264 = vpack.c.b16 %v256, %v254
    %v265 = vpack.c.b16 %v257, %v255
    %v266 = vpack.c.b16 %v258, %v258
    %v267 = vpack.c.b16 %v259, %v259
    %v273 = vsel %vm154, %v261, 0
    %v276 = vsel %vm154, %v263, 0
    %v279 = vsel %vm154, %v265, 0
    %v282 = vsel %vm154, %v267, 0
    %284 = vmatprep.subr.bf16.mxu0 0
    %285 = vmatpush1.bf16.msra.mxu0 %v134
    %286 = vmatprep.subr.bf16.mxu0 0
    %287 = vmatpush1.bf16.msra.mxu0 %v135
    %288 = vmatprep.subr.bf16.mxu0 0
    %289 = vmatpush1.bf16.msra.mxu0 %v136
    %290 = vmatprep.subr.bf16.mxu0 0
    %291 = vmatpush1.bf16.msra.mxu0 %v137
    %292 = vmatprep.subr.bf16.mxu0 0
    %293 = vmatpush1.bf16.msra.mxu0 %v138
    %294 = vmatprep.subr.bf16.mxu0 0
    %295 = vmatpush1.bf16.msra.mxu0 %v139
    %296 = vmatprep.subr.bf16.mxu0 0
    %297 = vmatpush1.bf16.msra.mxu0 %v140
    %298 = vmatprep.subr.bf16.mxu0 0
    %299 = vmatpush1.bf16.msra.mxu0 %v141
    %300 = vmatprep.subr.bf16.mxu0 0
    %301 = vmatpush1.bf16.msra.mxu0 %v142
    %302 = vmatprep.subr.bf16.mxu0 0
    %303 = vmatpush1.bf16.msra.mxu0 %v143
    %304 = vmatprep.subr.bf16.mxu0 0
    %305 = vmatpush1.bf16.msra.mxu0 0
    %306 = vmatprep.subr.bf16.mxu0 0
    %307 = vmatpush1.bf16.msra.mxu0 0
    %308 = vmatprep.subr.bf16.mxu0 0
    %309 = vmatpush1.bf16.msra.mxu0 0
    %310 = vmatprep.subr.bf16.mxu0 0
    %311 = vmatpush1.bf16.msra.mxu0 0
    %312 = vmatprep.subr.bf16.mxu0 0
    %313 = vmatpush1.bf16.msra.mxu0 0
    %314 = vmatprep.subr.bf16.mxu0 0
    %315 = vmatpush1.bf16.msra.mxu0 0
    %316 = vmatprep.mubr.bf16.mxu0 %v273
    %317 = vmatmul.mubr.bf16.gmra.mrb[0].mxu0 %v260
    %v318 = vpop.f32.mrb[0].mxu0
    %v319 = vadd.f32 0.0, %v318
    %v320 = vpop.f32.mrb[0].mxu0
    %v321 = vpop.f32.mrb[0].mxu0
    %v322 = vadd.f32 0.0, %v321
    %v323 = vpop.f32.mrb[0].mxu0
    %324 = vmatprep.mubr.bf16.mxu0 %v276
    %325 = vmatmul.mubr.bf16.gmra.mrb[0].mxu0 %v262
    %v326 = vpop.f32.mrb[0].mxu0
    %v327 = vadd.f32 0.0, %v326
    %v328 = vpop.f32.mrb[0].mxu0
    %v329 = vpop.f32.mrb[0].mxu0
    %v330 = vadd.f32 0.0, %v329
    %v331 = vpop.f32.mrb[0].mxu0
    %332 = vmatprep.mubr.bf16.mxu0 %v279
    %333 = vmatmul.mubr.bf16.gmra.mrb[0].mxu0 %v264
    %v334 = vpop.f32.mrb[0].mxu0
    %v335 = vadd.f32 0.0, %v334
    %v336 = vpop.f32.mrb[0].mxu0
    %v337 = vpop.f32.mrb[0].mxu0
    %v338 = vadd.f32 0.0, %v337
    %v339 = vpop.f32.mrb[0].mxu0
    %340 = vmatprep.mubr.bf16.mxu0 %v282
    %341 = vmatmul.mubr.bf16.gmra.mrb[0].mxu0 %v266
    %v342 = vpop.f32.mrb[0].mxu0
    %v343 = vadd.f32 0.0, %v342
    %v344 = vpop.f32.mrb[0].mxu0
    %v345 = vpop.f32.mrb[0].mxu0
    %v346 = vpop.f32.mrb[0].mxu0
    %347 = vdwg.mxu0
    %v348 = vmax.f32 %v202, %v319
    %v349 = vmax.f32 %v205, %v322
    %v350 = vmax.f32 %v210, %v327
    %v351 = vmax.f32 %v213, %v330
    %v352 = vmax.f32 %v218, %v335
    %v353 = vmax.f32 %v221, %v338
    %v354 = vmax.f32 %v226, %v343
    %s355 = scalar_lea.vmem %s0, 112
    %v356 = vld [vmem:[%s355] sm:$0xff]
    %v357 = vld [vmem:[%s355 + $0x8] sm:$0xff]
    %v358 = vld [vmem:[%s355 + $0x10] sm:$0xff]
    %v359 = vld [vmem:[%s355 + $0x18] sm:$0xff]
    %v360 = vld [vmem:[%s355 + $0x20] sm:$0xff]
    %v361 = vld [vmem:[%s355 + $0x28] sm:$0xff]
    %v362 = vld [vmem:[%s355 + $0x30] sm:$0x11]
    %v370 = vunpack.c.l.b16 %v356
    %v371 = vunpack.c.h.b16 %v356
    %v372 = vunpack.c.l.b16 %v357
    %v373 = vunpack.c.h.b16 %v357
    %v374 = vunpack.c.l.b16 %v358
    %v375 = vunpack.c.h.b16 %v358
    %v376 = vunpack.c.l.b16 %v359
    %v377 = vunpack.c.h.b16 %v359
    %v378 = vunpack.c.l.b16 %v360
    %v379 = vunpack.c.h.b16 %v360
    %v380 = vunpack.c.l.b16 %v361
    %v381 = vunpack.c.h.b16 %v361
    %v382 = vunpack.c.l.b16 %v362
    %v383 = vunpack.c.h.b16 %v362
    %v384 = vpack.c.b16 %v372, %v370
    %v385 = vpack.c.b16 %v373, %v371
    %v386 = vpack.c.b16 %v376, %v374
    %v387 = vpack.c.b16 %v377, %v375
    %v388 = vpack.c.b16 %v380, %v378
    %v389 = vpack.c.b16 %v381, %v379
    %v390 = vpack.c.b16 %v382, %v382
    %v391 = vpack.c.b16 %v383, %v383
    %v397 = vsel %vm154, %v385, 0
    %v400 = vsel %vm154, %v387, 0
    %v403 = vsel %vm154, %v389, 0
    %v406 = vsel %vm154, %v391, 0
    %408 = vmatprep.subr.bf16.mxu0 0
    %409 = vmatpush1.bf16.msra.mxu0 %v134
    %410 = vmatprep.subr.bf16.mxu0 0
    %411 = vmatpush1.bf16.msra.mxu0 %v135
    %412 = vmatprep.subr.bf16.mxu0 0
    %413 = vmatpush1.bf16.msra.mxu0 %v136
    %414 = vmatprep.subr.bf16.mxu0 0
    %415 = vmatpush1.bf16.msra.mxu0 %v137
    %416 = vmatprep.subr.bf16.mxu0 0
    %417 = vmatpush1.bf16.msra.mxu0 %v138
    %418 = vmatprep.subr.bf16.mxu0 0
    %419 = vmatpush1.bf16.msra.mxu0 %v139
    %420 = vmatprep.subr.bf16.mxu0 0
    %421 = vmatpush1.bf16.msra.mxu0 %v140
    %422 = vmatprep.subr.bf16.mxu0 0
    %423 = vmatpush1.bf16.msra.mxu0 %v141
    %424 = vmatprep.subr.bf16.mxu0 0
    %425 = vmatpush1.bf16.msra.mxu0 %v142
    %426 = vmatprep.subr.bf16.mxu0 0
    %427 = vmatpush1.bf16.msra.mxu0 %v143
    %428 = vmatprep.subr.bf16.mxu0 0
    %429 = vmatpush1.bf16.msra.mxu0 0
    %430 = vmatprep.subr.bf16.mxu0 0
    %431 = vmatpush1.bf16.msra.mxu0 0
    %432 = vmatprep.subr.bf16.mxu0 0
    %433 = vmatpush1.bf16.msra.mxu0 0
    %434 = vmatprep.subr.bf16.mxu0 0
    %435 = vmatpush1.bf16.msra.mxu0 0
    %436 = vmatprep.subr.bf16.mxu0 0
    %437 = vmatpush1.bf16.msra.mxu0 0
    %438 = vmatprep.subr.bf16.mxu0 0
    %439 = vmatpush1.bf16.msra.mxu0 0
    %440 = vmatprep.mubr.bf16.mxu0 %v397
    %441 = vmatmul.mubr.bf16.gmra.mrb[0].mxu0 %v384
    %v442 = vpop.f32.mrb[0].mxu0
    %v443 = vadd.f32 0.0, %v442
    %v444 = vpop.f32.mrb[0].mxu0
    %v445 = vpop.f32.mrb[0].mxu0
    %v446 = vadd.f32 0.0, %v445
    %v447 = vpop.f32.mrb[0].mxu0
    %448 = vmatprep.mubr.bf16.mxu0 %v400
    %449 = vmatmul.mubr.bf16.gmra.mrb[0].mxu0 %v386
    %v450 = vpop.f32.mrb[0].mxu0
    %v451 = vadd.f32 0.0, %v450
    %v452 = vpop.f32.mrb[0].mxu0
    %v453 = vpop.f32.mrb[0].mxu0
    %v454 = vadd.f32 0.0, %v453
    %v455 = vpop.f32.mrb[0].mxu0
    %456 = vmatprep.mubr.bf16.mxu0 %v403
    %457 = vmatmul.mubr.bf16.gmra.mrb[0].mxu0 %v388
    %v458 = vpop.f32.mrb[0].mxu0
    %v459 = vadd.f32 0.0, %v458
    %v460 = vpop.f32.mrb[0].mxu0
    %v461 = vpop.f32.mrb[0].mxu0
    %v462 = vadd.f32 0.0, %v461
    %v463 = vpop.f32.mrb[0].mxu0
    %464 = vmatprep.mubr.bf16.mxu0 %v406
    %465 = vmatmul.mubr.bf16.gmra.mrb[0].mxu0 %v390
    %v466 = vpop.f32.mrb[0].mxu0
    %v467 = vadd.f32 0.0, %v466
    %v468 = vpop.f32.mrb[0].mxu0
    %v469 = vpop.f32.mrb[0].mxu0
    %v470 = vpop.f32.mrb[0].mxu0
    %471 = vdwg.mxu0
    %v472 = vmax.f32 %v348, %v443
    %v473 = vmax.f32 %v349, %v446
    %v474 = vmax.f32 %v350, %v451
    %v475 = vmax.f32 %v351, %v454
    %v476 = vmax.f32 %v352, %v459
    %v477 = vmax.f32 %v353, %v462
    %v478 = vmax.f32 %v354, %v467
    %s479 = scalar_lea.vmem %s0, 168
    %v480 = vld [vmem:[%s479] sm:$0xff]
    %v481 = vld [vmem:[%s479 + $0x8] sm:$0xff]
    %v482 = vld [vmem:[%s479 + $0x10] sm:$0xff]
    %v483 = vld [vmem:[%s479 + $0x18] sm:$0xff]
    %v484 = vld [vmem:[%s479 + $0x20] sm:$0xff]
    %v485 = vld [vmem:[%s479 + $0x28] sm:$0xff]
    %v486 = vld [vmem:[%s479 + $0x30] sm:$0x11]
    %v494 = vunpack.c.l.b16 %v480
    %v495 = vunpack.c.h.b16 %v480
    %v496 = vunpack.c.l.b16 %v481
    %v497 = vunpack.c.h.b16 %v481
    %v498 = vunpack.c.l.b16 %v482
    %v499 = vunpack.c.h.b16 %v482
    %v500 = vunpack.c.l.b16 %v483
    %v501 = vunpack.c.h.b16 %v483
    %v502 = vunpack.c.l.b16 %v484
    %v503 = vunpack.c.h.b16 %v484
    %v504 = vunpack.c.l.b16 %v485
    %v505 = vunpack.c.h.b16 %v485
    %v506 = vunpack.c.l.b16 %v486
    %v507 = vunpack.c.h.b16 %v486
    %v508 = vpack.c.b16 %v496, %v494
    %v509 = vpack.c.b16 %v497, %v495
    %v510 = vpack.c.b16 %v500, %v498
    %v511 = vpack.c.b16 %v501, %v499
    %v512 = vpack.c.b16 %v504, %v502
    %v513 = vpack.c.b16 %v505, %v503
    %v514 = vpack.c.b16 %v506, %v506
    %v515 = vpack.c.b16 %v507, %v507
    %v521 = vsel %vm154, %v509, 0
    %v524 = vsel %vm154, %v511, 0
    %v527 = vsel %vm154, %v513, 0
    %v530 = vsel %vm154, %v515, 0
    %532 = vmatprep.subr.bf16.mxu0 0
    %533 = vmatpush1.bf16.msra.mxu0 %v134
    %534 = vmatprep.subr.bf16.mxu0 0
    %535 = vmatpush1.bf16.msra.mxu0 %v135
    %536 = vmatprep.subr.bf16.mxu0 0
    %537 = vmatpush1.bf16.msra.mxu0 %v136
    %538 = vmatprep.subr.bf16.mxu0 0
    %539 = vmatpush1.bf16.msra.mxu0 %v137
    %540 = vmatprep.subr.bf16.mxu0 0
    %541 = vmatpush1.bf16.msra.mxu0 %v138
    %542 = vmatprep.subr.bf16.mxu0 0
    %543 = vmatpush1.bf16.msra.mxu0 %v139
    %544 = vmatprep.subr.bf16.mxu0 0
    %545 = vmatpush1.bf16.msra.mxu0 %v140
    %546 = vmatprep.subr.bf16.mxu0 0
    %547 = vmatpush1.bf16.msra.mxu0 %v141
    %548 = vmatprep.subr.bf16.mxu0 0
    %549 = vmatpush1.bf16.msra.mxu0 %v142
    %550 = vmatprep.subr.bf16.mxu0 0
    %551 = vmatpush1.bf16.msra.mxu0 %v143
    %552 = vmatprep.subr.bf16.mxu0 0
    %553 = vmatpush1.bf16.msra.mxu0 0
    %554 = vmatprep.subr.bf16.mxu0 0
    %555 = vmatpush1.bf16.msra.mxu0 0
    %556 = vmatprep.subr.bf16.mxu0 0
    %557 = vmatpush1.bf16.msra.mxu0 0
    %558 = vmatprep.subr.bf16.mxu0 0
    %559 = vmatpush1.bf16.msra.mxu0 0
    %560 = vmatprep.subr.bf16.mxu0 0
    %561 = vmatpush1.bf16.msra.mxu0 0
    %562 = vmatprep.subr.bf16.mxu0 0
    %563 = vmatpush1.bf16.msra.mxu0 0
    %564 = vmatprep.mubr.bf16.mxu0 %v521
    %565 = vmatmul.mubr.bf16.gmra.mrb[0].mxu0 %v508
    %v566 = vpop.f32.mrb[0].mxu0
    %v567 = vadd.f32 0.0, %v566
    %v568 = vpop.f32.mrb[0].mxu0
    %v569 = vpop.f32.mrb[0].mxu0
    %v570 = vadd.f32 0.0, %v569
    %v571 = vpop.f32.mrb[0].mxu0
    %572 = vmatprep.mubr.bf16.mxu0 %v524
    %573 = vmatmul.mubr.bf16.gmra.mrb[0].mxu0 %v510
    %v574 = vpop.f32.mrb[0].mxu0
    %v575 = vadd.f32 0.0, %v574
    %v576 = vpop.f32.mrb[0].mxu0
    %v577 = vpop.f32.mrb[0].mxu0
    %v578 = vadd.f32 0.0, %v577
    %v579 = vpop.f32.mrb[0].mxu0
    %580 = vmatprep.mubr.bf16.mxu0 %v527
    %581 = vmatmul.mubr.bf16.gmra.mrb[0].mxu0 %v512
    %v582 = vpop.f32.mrb[0].mxu0
    %v583 = vadd.f32 0.0, %v582
    %v584 = vpop.f32.mrb[0].mxu0
    %v585 = vpop.f32.mrb[0].mxu0
    %v586 = vadd.f32 0.0, %v585
    %v587 = vpop.f32.mrb[0].mxu0
    %588 = vmatprep.mubr.bf16.mxu0 %v530
    %589 = vmatmul.mubr.bf16.gmra.mrb[0].mxu0 %v514
    %v590 = vpop.f32.mrb[0].mxu0
    %v591 = vadd.f32 0.0, %v590
    %v592 = vpop.f32.mrb[0].mxu0
    %v593 = vpop.f32.mrb[0].mxu0
    %v594 = vpop.f32.mrb[0].mxu0
    %595 = vdwg.mxu0
    %v596 = vmax.f32 %v472, %v567
    %v597 = vmax.f32 %v473, %v570
    %v598 = vmax.f32 %v474, %v575
    %v599 = vmax.f32 %v475, %v578
    %v600 = vmax.f32 %v476, %v583
    %v601 = vmax.f32 %v477, %v586
    %v602 = vmax.f32 %v478, %v591
    %v603 = vld [vmem:[%s2] sm:$0x1]
    %v605 = vlaneseq
    %v606 = vshrl.u32 %v605, 7
    %v607 = vsub.s32 0, %v606
    %v608 = vrot.slane %v603, %v607
    %v610 = vadd.f32 %v596, %v608
    %v611 = vadd.f32 %v597, %v608
    %v612 = vadd.f32 %v598, %v608
    %v613 = vadd.f32 %v599, %v608
    %v614 = vadd.f32 %v600, %v608
    %v615 = vadd.f32 %v601, %v608
    %v616 = vadd.f32 %v602, %v608
    %v617 = vmax.f32 %v610, 0.0
    %v618 = vmax.f32 %v611, 0.0
    %v619 = vmax.f32 %v612, 0.0
    %v620 = vmax.f32 %v613, 0.0
    %v621 = vmax.f32 %v614, 0.0
    %v622 = vmax.f32 %v615, 0.0
    %v623 = vmax.f32 %v616, 0.0
    %v625 = vrot.slane %v617, 2
    %626 = vrot.lane.b32.xlu0 %v625, 16
    %v627 = vpop.permute.xlu0 %626
    %v629 = vrot.slane %v617, 4
    %630 = vrot.lane.b32.xlu0 %v629, 32
    %v631 = vpop.permute.xlu0 %630
    %v633 = vrot.slane %v617, 6
    %634 = vrot.lane.b32.xlu0 %v633, 48
    %v635 = vpop.permute.xlu0 %634
    %638 = vrot.lane.b32.xlu0 %v618, 64
    %v639 = vpop.permute.xlu0 %638
    %v641 = vrot.slane %v618, 2
    %642 = vrot.lane.b32.xlu0 %v641, 80
    %v643 = vpop.permute.xlu0 %642
    %v645 = vrot.slane %v618, 4
    %646 = vrot.lane.b32.xlu0 %v645, 96
    %v647 = vpop.permute.xlu0 %646
    %v649 = vrot.slane %v618, 6
    %650 = vrot.lane.b32.xlu0 %v649, 112
    %v651 = vpop.permute.xlu0 %650
    %v654 = vrot.slane %v619, 2
    %655 = vrot.lane.b32.xlu0 %v654, 16
    %v656 = vpop.permute.xlu0 %655
    %v658 = vrot.slane %v619, 4
    %659 = vrot.lane.b32.xlu0 %v658, 32
    %v660 = vpop.permute.xlu0 %659
    %v662 = vrot.slane %v619, 6
    %663 = vrot.lane.b32.xlu0 %v662, 48
    %v664 = vpop.permute.xlu0 %663
    %667 = vrot.lane.b32.xlu0 %v620, 64
    %v668 = vpop.permute.xlu0 %667
    %v670 = vrot.slane %v620, 2
    %671 = vrot.lane.b32.xlu0 %v670, 80
    %v672 = vpop.permute.xlu0 %671
    %v674 = vrot.slane %v620, 4
    %675 = vrot.lane.b32.xlu0 %v674, 96
    %v676 = vpop.permute.xlu0 %675
    %v678 = vrot.slane %v620, 6
    %679 = vrot.lane.b32.xlu0 %v678, 112
    %v680 = vpop.permute.xlu0 %679
    %vm682 = vcmask 130048
    %v683 = vsel %vm682, %v617, %v627
    %v684 = vsel %vm154, %v683, %v631
    %vm685 = vcmask 392192
    %v686 = vsel %vm685, %v684, %v635
    %vm687 = vcmask 523264
    %v688 = vsel %vm687, %v686, %v639
    %vm689 = vcmask 654336
    %v690 = vsel %vm689, %v688, %v643
    %vm691 = vcmask 785408
    %v692 = vsel %vm691, %v690, %v647
    %vm693 = vcmask 916480
    %v694 = vsel %vm693, %v692, %v651
    %v695 = vsel %vm682, %v619, %v656
    %v696 = vsel %vm154, %v695, %v660
    %v697 = vsel %vm685, %v696, %v664
    %v698 = vsel %vm687, %v697, %v668
    %v699 = vsel %vm689, %v698, %v672
    %v700 = vsel %vm691, %v699, %v676
    %v701 = vsel %vm693, %v700, %v680
    %v703 = vrot.slane %v621, 2
    %704 = vrot.lane.b32.xlu0 %v703, 16
    %v705 = vpop.permute.xlu0 %704
    %v707 = vrot.slane %v621, 4
    %708 = vrot.lane.b32.xlu0 %v707, 32
    %v709 = vpop.permute.xlu0 %708
    %v711 = vrot.slane %v621, 6
    %712 = vrot.lane.b32.xlu0 %v711, 48
    %v713 = vpop.permute.xlu0 %712
    %716 = vrot.lane.b32.xlu0 %v622, 64
    %v717 = vpop.permute.xlu0 %716
    %v719 = vrot.slane %v622, 2
    %720 = vrot.lane.b32.xlu0 %v719, 80
    %v721 = vpop.permute.xlu0 %720
    %v723 = vrot.slane %v622, 4
    %724 = vrot.lane.b32.xlu0 %v723, 96
    %v725 = vpop.permute.xlu0 %724
    %v727 = vrot.slane %v622, 6
    %728 = vrot.lane.b32.xlu0 %v727, 112
    %v729 = vpop.permute.xlu0 %728
    %v731 = vsel %vm682, %v621, %v705
    %v732 = vsel %vm154, %v731, %v709
    %v733 = vsel %vm685, %v732, %v713
    %v734 = vsel %vm687, %v733, %v717
    %v735 = vsel %vm689, %v734, %v721
    %v736 = vsel %vm691, %v735, %v725
    %v737 = vsel %vm693, %v736, %v729
    %v738 = vpack.c.bf16 %v694, %v694
    %v739 = vpack.c.bf16 %v701, %v701
    %v740 = vpack.c.bf16 %v737, %v737
    %v741 = vpack.c.bf16 %v623, %v623
    %v742 = vld [vmem:[%s3] sm:$0xf]
    %v743 = vld [vmem:[%s3 + $0x4] sm:$0xf]
    %v744 = vld [vmem:[%s3 + $0x8] sm:$0xf]
    %v745 = vld [vmem:[%s3 + $0xc] sm:$0xf]
    %v746 = vld [vmem:[%s3 + $0x10] sm:$0xf]
    %v747 = vld [vmem:[%s3 + $0x14] sm:$0xf]
    %v748 = vld [vmem:[%s3 + $0x18] sm:$0xf]
    %v749 = vld [vmem:[%s3 + $0x1c] sm:$0xf]
    %v750 = vld [vmem:[%s3 + $0x20] sm:$0xf]
    %v751 = vld [vmem:[%s3 + $0x24] sm:$0xf]
    %v752 = vld [vmem:[%s3 + $0x28] sm:$0xf]
    %v753 = vld [vmem:[%s3 + $0x2c] sm:$0xf]
    %v754 = vld [vmem:[%s3 + $0x30] sm:$0xf]
    %v755 = vld [vmem:[%s3 + $0x34] sm:$0xf]
    %v756 = vld [vmem:[%s3 + $0x38] sm:$0xf]
    %v757 = vld [vmem:[%s3 + $0x3c] sm:$0xf]
    %v758 = vld [vmem:[%s3 + $0x40] sm:$0xf]
    %v759 = vld [vmem:[%s3 + $0x44] sm:$0xf]
    %v760 = vld [vmem:[%s3 + $0x48] sm:$0xf]
    %v761 = vld [vmem:[%s3 + $0x4c] sm:$0xf]
    %v762 = vld [vmem:[%s3 + $0x50] sm:$0xf]
    %v763 = vld [vmem:[%s3 + $0x54] sm:$0xf]
    %v764 = vld [vmem:[%s3 + $0x58] sm:$0xf]
    %v765 = vld [vmem:[%s3 + $0x5c] sm:$0xf]
    %v766 = vld [vmem:[%s3 + $0x60] sm:$0xf]
    %v767 = vld [vmem:[%s3 + $0x64] sm:$0xf]
    %v768 = vld [vmem:[%s3 + $0x68] sm:$0xf]
    %v769 = vld [vmem:[%s3 + $0x6c] sm:$0xf]
    %v770 = vld [vmem:[%s3 + $0x70] sm:$0xf]
    %v771 = vld [vmem:[%s3 + $0x74] sm:$0xf]
    %v772 = vld [vmem:[%s3 + $0x78] sm:$0xf]
    %v773 = vld [vmem:[%s3 + $0x7c] sm:$0xf]
    %v774 = vld [vmem:[%s3 + $0x80] sm:$0xf]
    %v775 = vld [vmem:[%s3 + $0x84] sm:$0xf]
    %v776 = vld [vmem:[%s3 + $0x88] sm:$0xf]
    %v777 = vld [vmem:[%s3 + $0x8c] sm:$0xf]
    %v778 = vld [vmem:[%s3 + $0x90] sm:$0xf]
    %v779 = vld [vmem:[%s3 + $0x94] sm:$0xf]
    %v780 = vld [vmem:[%s3 + $0x98] sm:$0xf]
    %v781 = vld [vmem:[%s3 + $0x9c] sm:$0xf]
    %v782 = vld [vmem:[%s3 + $0xa0] sm:$0xf]
    %v783 = vld [vmem:[%s3 + $0xa4] sm:$0xf]
    %v784 = vld [vmem:[%s3 + $0xa8] sm:$0xf]
    %v785 = vld [vmem:[%s3 + $0xac] sm:$0xf]
    %v786 = vld [vmem:[%s3 + $0xb0] sm:$0xf]
    %v787 = vld [vmem:[%s3 + $0xb4] sm:$0xf]
    %v788 = vld [vmem:[%s3 + $0xb8] sm:$0xf]
    %v789 = vld [vmem:[%s3 + $0xbc] sm:$0xf]
    %v790 = vld [vmem:[%s3 + $0xc0] sm:$0xf]
    %v791 = vld [vmem:[%s3 + $0xc4] sm:$0xf]
    %v792 = vld [vmem:[%s4] sm:$0x1]
    %v794 = vlaneseq
    %v795 = vshrl.u32 %v794, 7
    %v796 = vsub.s32 0, %v795
    %v797 = vrot.slane %v792, %v796
    %v849 = vunpack.c.l.b16 %v742
    %v850 = vunpack.c.l.b16 %v743
    %v851 = vunpack.c.l.b16 %v744
    %v852 = vunpack.c.l.b16 %v745
    %v853 = vunpack.c.l.b16 %v746
    %v854 = vunpack.c.l.b16 %v747
    %v855 = vunpack.c.l.b16 %v748
    %v856 = vunpack.c.l.b16 %v749
    %v857 = vunpack.c.l.b16 %v750
    %v858 = vunpack.c.l.b16 %v751
    %v859 = vunpack.c.l.b16 %v752
    %v860 = vunpack.c.l.b16 %v753
    %v861 = vunpack.c.l.b16 %v754
    %v862 = vunpack.c.l.b16 %v755
    %v863 = vunpack.c.l.b16 %v756
    %v864 = vunpack.c.l.b16 %v757
    %v865 = vunpack.c.l.b16 %v758
    %v866 = vunpack.c.l.b16 %v759
    %v867 = vunpack.c.l.b16 %v760
    %v868 = vunpack.c.l.b16 %v761
    %v869 = vunpack.c.l.b16 %v762
    %v870 = vunpack.c.l.b16 %v763
    %v871 = vunpack.c.l.b16 %v764
    %v872 = vunpack.c.l.b16 %v765
    %v873 = vunpack.c.l.b16 %v766
    %v874 = vunpack.c.l.b16 %v767
    %v875 = vunpack.c.l.b16 %v768
    %v876 = vunpack.c.l.b16 %v769
    %v877 = vunpack.c.l.b16 %v770
    %v878 = vunpack.c.l.b16 %v771
    %v879 = vunpack.c.l.b16 %v772
    %v880 = vunpack.c.l.b16 %v773
    %v881 = vunpack.c.l.b16 %v774
    %v882 = vunpack.c.l.b16 %v775
    %v883 = vunpack.c.l.b16 %v776
    %v884 = vunpack.c.l.b16 %v777
    %v885 = vunpack.c.l.b16 %v778
    %v886 = vunpack.c.l.b16 %v779
    %v887 = vunpack.c.l.b16 %v780
    %v888 = vunpack.c.l.b16 %v781
    %v889 = vunpack.c.l.b16 %v782
    %v890 = vunpack.c.l.b16 %v783
    %v891 = vunpack.c.l.b16 %v784
    %v892 = vunpack.c.l.b16 %v785
    %v893 = vunpack.c.l.b16 %v786
    %v894 = vunpack.c.l.b16 %v787
    %v895 = vunpack.c.l.b16 %v788
    %v896 = vunpack.c.l.b16 %v789
    %v897 = vunpack.c.l.b16 %v790
    %v898 = vunpack.c.l.b16 %v791
    %v899 = vpack.c.b16 %v850, %v849
    %v900 = vpack.c.b16 %v852, %v851
    %v901 = vpack.c.b16 %v854, %v853
    %v902 = vpack.c.b16 %v856, %v855
    %v903 = vpack.c.b16 %v858, %v857
    %v904 = vpack.c.b16 %v860, %v859
    %v905 = vpack.c.b16 %v862, %v861
    %v906 = vpack.c.b16 %v864, %v863
    %v907 = vpack.c.b16 %v866, %v865
    %v908 = vpack.c.b16 %v868, %v867
    %v909 = vpack.c.b16 %v870, %v869
    %v910 = vpack.c.b16 %v872, %v871
    %v911 = vpack.c.b16 %v874, %v873
    %v912 = vpack.c.b16 %v876, %v875
    %v913 = vpack.c.b16 %v878, %v877
    %v914 = vpack.c.b16 %v880, %v879
    %v915 = vpack.c.b16 %v882, %v881
    %v916 = vpack.c.b16 %v884, %v883
    %v917 = vpack.c.b16 %v886, %v885
    %v918 = vpack.c.b16 %v888, %v887
    %v919 = vpack.c.b16 %v890, %v889
    %v920 = vpack.c.b16 %v892, %v891
    %v921 = vpack.c.b16 %v894, %v893
    %v922 = vpack.c.b16 %v896, %v895
    %v923 = vpack.c.b16 %v898, %v897
    %v950 = vsel %vm682, %v741, 0
    %952 = vmatprep.subr.bf16.mxu0 0
    %953 = vmatpush1.bf16.msra.mxu0 %v899
    %954 = vmatprep.subr.bf16.mxu0 0
    %955 = vmatpush1.bf16.msra.mxu0 %v900
    %956 = vmatprep.subr.bf16.mxu0 0
    %957 = vmatpush1.bf16.msra.mxu0 %v901
    %958 = vmatprep.subr.bf16.mxu0 0
    %959 = vmatpush1.bf16.msra.mxu0 %v902
    %960 = vmatprep.subr.bf16.mxu0 0
    %961 = vmatpush1.bf16.msra.mxu0 %v903
    %962 = vmatprep.subr.bf16.mxu0 0
    %963 = vmatpush1.bf16.msra.mxu0 %v904
    %964 = vmatprep.subr.bf16.mxu0 0
    %965 = vmatpush1.bf16.msra.mxu0 %v905
    %966 = vmatprep.subr.bf16.mxu0 0
    %967 = vmatpush1.bf16.msra.mxu0 %v906
    %968 = vmatprep.subr.bf16.mxu0 0
    %969 = vmatpush1.bf16.msra.mxu0 %v907
    %970 = vmatprep.subr.bf16.mxu0 0
    %971 = vmatpush1.bf16.msra.mxu0 %v908
    %972 = vmatprep.subr.bf16.mxu0 0
    %973 = vmatpush1.bf16.msra.mxu0 %v909
    %974 = vmatprep.subr.bf16.mxu0 0
    %975 = vmatpush1.bf16.msra.mxu0 %v910
    %976 = vmatprep.subr.bf16.mxu0 0
    %977 = vmatpush1.bf16.msra.mxu0 %v911
    %978 = vmatprep.subr.bf16.mxu0 0
    %979 = vmatpush1.bf16.msra.mxu0 %v912
    %980 = vmatprep.subr.bf16.mxu0 0
    %981 = vmatpush1.bf16.msra.mxu0 %v913
    %982 = vmatprep.subr.bf16.mxu0 0
    %983 = vmatpush1.bf16.msra.mxu0 %v914
    %984 = vmatprep.mubr.bf16.mxu0 %v739
    %985 = vmatmul.mubr.bf16.gmra.mrb[0].mxu0 %v738
    %v986 = vpop.f32.mrb[0].mxu0
    %v987 = vadd.f32 %v797, %v986
    %v988 = vpop.f32.mrb[0].mxu0
    %v989 = vpop.f32.mrb[0].mxu0
    %v990 = vpop.f32.mrb[0].mxu0
    %991 = vdwg.mxu0
    %992 = vmatprep.subr.bf16.mxu0 0
    %993 = vmatpush1.bf16.msra.mxu0 %v915
    %994 = vmatprep.subr.bf16.mxu0 0
    %995 = vmatpush1.bf16.msra.mxu0 %v916
    %996 = vmatprep.subr.bf16.mxu0 0
    %997 = vmatpush1.bf16.msra.mxu0 %v917
    %998 = vmatprep.subr.bf16.mxu0 0
    %999 = vmatpush1.bf16.msra.mxu0 %v918
    %1000 = vmatprep.subr.bf16.mxu0 0
    %1001 = vmatpush1.bf16.msra.mxu0 %v919
    %1002 = vmatprep.subr.bf16.mxu0 0
    %1003 = vmatpush1.bf16.msra.mxu0 %v920
    %1004 = vmatprep.subr.bf16.mxu0 0
    %1005 = vmatpush1.bf16.msra.mxu0 %v921
    %1006 = vmatprep.subr.bf16.mxu0 0
    %1007 = vmatpush1.bf16.msra.mxu0 %v922
    %1008 = vmatprep.subr.bf16.mxu0 0
    %1009 = vmatpush1.bf16.msra.mxu0 %v923
    %1010 = vmatprep.subr.bf16.mxu0 0
    %1011 = vmatpush1.bf16.msra.mxu0 0
    %1012 = vmatprep.subr.bf16.mxu0 0
    %1013 = vmatpush1.bf16.msra.mxu0 0
    %1014 = vmatprep.subr.bf16.mxu0 0
    %1015 = vmatpush1.bf16.msra.mxu0 0
    %1016 = vmatprep.subr.bf16.mxu0 0
    %1017 = vmatpush1.bf16.msra.mxu0 0
    %1018 = vmatprep.subr.bf16.mxu0 0
    %1019 = vmatpush1.bf16.msra.mxu0 0
    %1020 = vmatprep.subr.bf16.mxu0 0
    %1021 = vmatpush1.bf16.msra.mxu0 0
    %1022 = vmatprep.subr.bf16.mxu0 0
    %1023 = vmatpush1.bf16.msra.mxu0 0
    %1024 = vmatprep.mubr.bf16.mxu0 %v950
    %1025 = vmatmul.mubr.bf16.gmra.mrb[0].mxu0 %v740
    %v1026 = vpop.f32.mrb[0].mxu0
    %v1027 = vadd.f32 %v987, %v1026
    %v1028 = vpop.f32.mrb[0].mxu0
    %v1029 = vpop.f32.mrb[0].mxu0
    %v1030 = vpop.f32.mrb[0].mxu0
    %1031 = vdwg.mxu0
    %v1032 = vmax.f32 %v1027, 0.0
    %v1033 = vpack.c.bf16 %v1032, %v1032
    %v1034 = vld [vmem:[%s5] sm:$0xf]
    %v1035 = vld [vmem:[%s5 + $0x4] sm:$0xf]
    %v1036 = vld [vmem:[%s5 + $0x8] sm:$0xf]
    %v1037 = vld [vmem:[%s5 + $0xc] sm:$0xf]
    %v1038 = vld [vmem:[%s5 + $0x10] sm:$0xf]
    %v1039 = vld [vmem:[%s5 + $0x14] sm:$0xf]
    %v1040 = vld [vmem:[%s5 + $0x18] sm:$0xf]
    %v1041 = vld [vmem:[%s5 + $0x1c] sm:$0xf]
    %v1042 = vld [vmem:[%s5 + $0x20] sm:$0xf]
    %v1043 = vld [vmem:[%s5 + $0x24] sm:$0xf]
    %v1044 = vld [vmem:[%s5 + $0x28] sm:$0xf]
    %v1045 = vld [vmem:[%s5 + $0x2c] sm:$0xf]
    %v1046 = vld [vmem:[%s5 + $0x30] sm:$0xf]
    %v1047 = vld [vmem:[%s5 + $0x34] sm:$0xf]
    %v1048 = vld [vmem:[%s5 + $0x38] sm:$0xf]
    %v1049 = vld [vmem:[%s5 + $0x3c] sm:$0xf]
    %v1050 = vld [vmem:[%s6] sm:$0x1]
    %v1052 = vlaneseq
    %v1053 = vshrl.u32 %v1052, 7
    %v1054 = vsub.s32 0, %v1053
    %v1055 = vrot.slane %v1050, %v1054
    %v1073 = vunpack.c.l.b16 %v1034
    %v1074 = vunpack.c.l.b16 %v1035
    %v1075 = vunpack.c.l.b16 %v1036
    %v1076 = vunpack.c.l.b16 %v1037
    %v1077 = vunpack.c.l.b16 %v1038
    %v1078 = vunpack.c.l.b16 %v1039
    %v1079 = vunpack.c.l.b16 %v1040
    %v1080 = vunpack.c.l.b16 %v1041
    %v1081 = vunpack.c.l.b16 %v1042
    %v1082 = vunpack.c.l.b16 %v1043
    %v1083 = vunpack.c.l.b16 %v1044
    %v1084 = vunpack.c.l.b16 %v1045
    %v1085 = vunpack.c.l.b16 %v1046
    %v1086 = vunpack.c.l.b16 %v1047
    %v1087 = vunpack.c.l.b16 %v1048
    %v1088 = vunpack.c.l.b16 %v1049
    %v1089 = vpack.c.b16 %v1074, %v1073
    %v1090 = vpack.c.b16 %v1076, %v1075
    %v1091 = vpack.c.b16 %v1078, %v1077
    %v1092 = vpack.c.b16 %v1080, %v1079
    %v1093 = vpack.c.b16 %v1082, %v1081
    %v1094 = vpack.c.b16 %v1084, %v1083
    %v1095 = vpack.c.b16 %v1086, %v1085
    %v1096 = vpack.c.b16 %v1088, %v1087
    %1105 = vmatprep.subr.bf16.mxu0 0
    %1106 = vmatpush1.bf16.msra.mxu0 %v1089
    %1107 = vmatprep.subr.bf16.mxu0 0
    %1108 = vmatpush1.bf16.msra.mxu0 %v1090
    %1109 = vmatprep.subr.bf16.mxu0 0
    %1110 = vmatpush1.bf16.msra.mxu0 %v1091
    %1111 = vmatprep.subr.bf16.mxu0 0
    %1112 = vmatpush1.bf16.msra.mxu0 %v1092
    %1113 = vmatprep.subr.bf16.mxu0 0
    %1114 = vmatpush1.bf16.msra.mxu0 %v1093
    %1115 = vmatprep.subr.bf16.mxu0 0
    %1116 = vmatpush1.bf16.msra.mxu0 %v1094
    %1117 = vmatprep.subr.bf16.mxu0 0
    %1118 = vmatpush1.bf16.msra.mxu0 %v1095
    %1119 = vmatprep.subr.bf16.mxu0 0
    %1120 = vmatpush1.bf16.msra.mxu0 %v1096
    %1121 = vmatprep.subr.bf16.mxu0 0
    %1122 = vmatpush1.bf16.msra.mxu0 0
    %1123 = vmatprep.subr.bf16.mxu0 0
    %1124 = vmatpush1.bf16.msra.mxu0 0
    %1125 = vmatprep.subr.bf16.mxu0 0
    %1126 = vmatpush1.bf16.msra.mxu0 0
    %1127 = vmatprep.subr.bf16.mxu0 0
    %1128 = vmatpush1.bf16.msra.mxu0 0
    %1129 = vmatprep.subr.bf16.mxu0 0
    %1130 = vmatpush1.bf16.msra.mxu0 0
    %1131 = vmatprep.subr.bf16.mxu0 0
    %1132 = vmatpush1.bf16.msra.mxu0 0
    %1133 = vmatprep.subr.bf16.mxu0 0
    %1134 = vmatpush1.bf16.msra.mxu0 0
    %1135 = vmatprep.subr.bf16.mxu0 0
    %1136 = vmatpush1.bf16.msra.mxu0 0
    %1137 = vmatprep.mubr.bf16.mxu0 0
    %1138 = vmatmul.mubr.bf16.gmra.mrb[0].mxu0 %v1033
    %v1139 = vpop.f32.mrb[0].mxu0
    %v1140 = vadd.f32 %v1055, %v1139
    %v1141 = vpop.f32.mrb[0].mxu0
    %v1142 = vpop.f32.mrb[0].mxu0
    %v1143 = vpop.f32.mrb[0].mxu0
    %1144 = vdwg.mxu0
    %v1145 = vmax.f32 %v1140, 0.0
    %v1146 = vpack.c.bf16 %v1145, %v1145
    %v1147 = vld [vmem:[%s7] sm:$0xf]
    %v1148 = vld [vmem:[%s7 + $0x4] sm:$0xf]
    %v1149 = vld [vmem:[%s7 + $0x8] sm:$0xf]
    %v1150 = vld [vmem:[%s7 + $0xc] sm:$0xf]
    %v1151 = vld [vmem:[%s7 + $0x10] sm:$0xf]
    %v1152 = vld [vmem:[%s7 + $0x14] sm:$0xf]
    %v1153 = vld [vmem:[%s7 + $0x18] sm:$0xf]
    %v1154 = vld [vmem:[%s7 + $0x1c] sm:$0xf]
    %v1155 = vld [vmem:[%s7 + $0x20] sm:$0xf]
    %v1156 = vld [vmem:[%s7 + $0x24] sm:$0xf]
    %v1157 = vld [vmem:[%s7 + $0x28] sm:$0xf]
    %v1158 = vld [vmem:[%s7 + $0x2c] sm:$0xf]
    %v1159 = vld [vmem:[%s7 + $0x30] sm:$0xf]
    %v1160 = vld [vmem:[%s7 + $0x34] sm:$0xf]
    %v1161 = vld [vmem:[%s7 + $0x38] sm:$0xf]
    %v1162 = vld [vmem:[%s7 + $0x3c] sm:$0xf]
    %v1163 = vld [vmem:[%s8] sm:$0x1]
    %v1165 = vlaneseq
    %v1166 = vshrl.u32 %v1165, 7
    %v1167 = vsub.s32 0, %v1166
    %v1168 = vrot.slane %v1163, %v1167
    %v1186 = vunpack.c.l.b16 %v1147
    %v1187 = vunpack.c.l.b16 %v1148
    %v1188 = vunpack.c.l.b16 %v1149
    %v1189 = vunpack.c.l.b16 %v1150
    %v1190 = vunpack.c.l.b16 %v1151
    %v1191 = vunpack.c.l.b16 %v1152
    %v1192 = vunpack.c.l.b16 %v1153
    %v1193 = vunpack.c.l.b16 %v1154
    %v1194 = vunpack.c.l.b16 %v1155
    %v1195 = vunpack.c.l.b16 %v1156
    %v1196 = vunpack.c.l.b16 %v1157
    %v1197 = vunpack.c.l.b16 %v1158
    %v1198 = vunpack.c.l.b16 %v1159
    %v1199 = vunpack.c.l.b16 %v1160
    %v1200 = vunpack.c.l.b16 %v1161
    %v1201 = vunpack.c.l.b16 %v1162
    %v1202 = vpack.c.b16 %v1187, %v1186
    %v1203 = vpack.c.b16 %v1189, %v1188
    %v1204 = vpack.c.b16 %v1191, %v1190
    %v1205 = vpack.c.b16 %v1193, %v1192
    %v1206 = vpack.c.b16 %v1195, %v1194
    %v1207 = vpack.c.b16 %v1197, %v1196
    %v1208 = vpack.c.b16 %v1199, %v1198
    %v1209 = vpack.c.b16 %v1201, %v1200
    %1218 = vmatprep.subr.bf16.mxu0 0
    %1219 = vmatpush1.bf16.msra.mxu0 %v1202
    %1220 = vmatprep.subr.bf16.mxu0 0
    %1221 = vmatpush1.bf16.msra.mxu0 %v1203
    %1222 = vmatprep.subr.bf16.mxu0 0
    %1223 = vmatpush1.bf16.msra.mxu0 %v1204
    %1224 = vmatprep.subr.bf16.mxu0 0
    %1225 = vmatpush1.bf16.msra.mxu0 %v1205
    %1226 = vmatprep.subr.bf16.mxu0 0
    %1227 = vmatpush1.bf16.msra.mxu0 %v1206
    %1228 = vmatprep.subr.bf16.mxu0 0
    %1229 = vmatpush1.bf16.msra.mxu0 %v1207
    %1230 = vmatprep.subr.bf16.mxu0 0
    %1231 = vmatpush1.bf16.msra.mxu0 %v1208
    %1232 = vmatprep.subr.bf16.mxu0 0
    %1233 = vmatpush1.bf16.msra.mxu0 %v1209
    %1234 = vmatprep.subr.bf16.mxu0 0
    %1235 = vmatpush1.bf16.msra.mxu0 0
    %1236 = vmatprep.subr.bf16.mxu0 0
    %1237 = vmatpush1.bf16.msra.mxu0 0
    %1238 = vmatprep.subr.bf16.mxu0 0
    %1239 = vmatpush1.bf16.msra.mxu0 0
    %1240 = vmatprep.subr.bf16.mxu0 0
    %1241 = vmatpush1.bf16.msra.mxu0 0
    %1242 = vmatprep.subr.bf16.mxu0 0
    %1243 = vmatpush1.bf16.msra.mxu0 0
    %1244 = vmatprep.subr.bf16.mxu0 0
    %1245 = vmatpush1.bf16.msra.mxu0 0
    %1246 = vmatprep.subr.bf16.mxu0 0
    %1247 = vmatpush1.bf16.msra.mxu0 0
    %1248 = vmatprep.subr.bf16.mxu0 0
    %1249 = vmatpush1.bf16.msra.mxu0 0
    %1250 = vmatprep.mubr.bf16.mxu0 0
    %1251 = vmatmul.mubr.bf16.gmra.mrb[0].mxu0 %v1146
    %v1252 = vpop.f32.mrb[0].mxu0
    %v1253 = vadd.f32 %v1168, %v1252
    %v1254 = vpop.f32.mrb[0].mxu0
    %v1255 = vpop.f32.mrb[0].mxu0
    %v1256 = vpop.f32.mrb[0].mxu0
    %1257 = vdwg.mxu0
    %vm1258 = vcmask 74752
    %1259 = vst.msk [vmem:[#allocation2] sm:$0x3] %vm1258, %v1253
    // Predicated region
    $region38: #{lenet_forward.3} parent=1 // pred_check
      _
    $region39: #{lenet_forward.3} parent=1 // pred_check_branch
      %1261 = sbr.rel (0) target = $region41
    $region40: #{lenet_forward.3} parent=1 // pred_region
      %s1263 = ssub.s32 32, 32
      %1264 = vsyncadd [#allocation3], %s1263
      %s1266 = sshll.u32 [#allocation2], 4
      %s1267 = int_to_ptr.vmem [resolvable:$true] %s1266
      %1269 = dma.vmem_to_hbm [thread:$0]  %s1267, 32, %s9, [#allocation3]
    $region41: #{lenet_forward.3} parent=1 // pred_fallthru
      _
    // Predicated region
    $region42: #{lenet_forward.3} parent=1 // pred_check
      _
    $region43: #{lenet_forward.3} parent=1 // pred_check_branch
      %1271 = sbr.rel (0) target = $region45
    $region44: #{lenet_forward.3} parent=1 // pred_region
      %1272 = dma.done [#allocation3], 32
    $region45: #{lenet_forward.3} parent=1 // pred_fallthru
      _
    %1273 = vsyncpa [#allocation3], 1

</llo_original>
